<compile_context>
chip_gen: v5e
topology: v5e:2x2
jax: 0.10.0
libtpu: 0.0.40
codegen_flags: <defaults>
</compile_context>

<pallas_src>
import functools
import math

import jax
import jax.numpy as jnp
import numpy as np
from jax import lax
from jax.experimental import pallas as pl
from jax.experimental.pallas import tpu as pltpu


LANE = 128      # all kernel channel dims are zero-padded to this
SUBLANE = 8


def _round_up(n, m):
    return ((n + m - 1) // m) * m


def _pick_divisor(n, target):
    """Largest multiple of 8 that divides n and is <= max(target, 8). n % 8 == 0."""
    t = min(n, max(SUBLANE, (target // SUBLANE) * SUBLANE))
    while n % t:
        t -= SUBLANE
    return t


def _vmem_limit_bytes():
    # Re-derive the scoped-VMEM budget per chip (v5e/v6e: 128 MiB physical,
    # v7x: 64 MiB/TC) instead of hard-coding a single number.
    try:
        cap = pltpu.get_tpu_info().vmem_capacity_bytes
    except Exception:
        cap = 64 * 1024 * 1024
    return int(min(max(cap * 3 // 4, 32 * 1024 * 1024), 96 * 1024 * 1024))


# ----------------------------------------------------------------------------
# Fused WaveNet stack kernel (all layers + skip post-processing in one call)
# ----------------------------------------------------------------------------

def _wavenet_stack_kernel(dil_ref, tlen_ref, x_ref, wg_ref, bg_ref, wo_ref,
                          pw1_ref, pb1_ref, pw2_ref, pb2_ref, out_ref,
                          res_a_ref, res_b_ref, skip_ref,
                          *, K, B, L, C, CL, MAXPAD):
    """grid = (n_layers,) ('arbitrary'); weights stream from HBM once per layer.

    dil_ref  : SMEM (n_layers,) int32 dilation per layer
    tlen_ref : SMEM (1,) int32 valid sequence length (mask built in-kernel)
    x_ref    : (B, L, C) f32 input (DMA'd once, block index constant)
    wg_ref   : (1, K, C, 2C) bf16 dilated-conv weights, [tanh | sigmoid]
    bg_ref   : (1, 1, 2C) f32 conv biases
    wo_ref   : (1, C, 2C) bf16 1x1 projections, [residual | skip]
    pw1/pb1/pw2/pb2 : skip post-processing (relu -> 1x1 -> relu -> 1x1)
    out_ref  : (B, L, C) f32, written only at the last layer
    res_a/b  : VMEM (B, L + 2*MAXPAD, C) f32 double-buffered residual stream
    skip_ref : VMEM (B, L, C) f32 skip accumulator
    """
    l = pl.program_id(0)
    n_layers = pl.num_programs(0)
    tlen = tlen_ref[0]
    NC = L // CL

    @pl.when(l == 0)
    def _init():
        mask_full = (lax.broadcasted_iota(jnp.int32, (L, 1), 0) < tlen
                     ).astype(jnp.float32)
        x0 = x_ref[...] * mask_full
        # zero ONLY the halo slabs; the interiors are fully (over)written.
        zpad = jnp.zeros((B, MAXPAD, C), jnp.float32)
        res_a_ref[:, pl.ds(0, MAXPAD), :] = zpad
        res_a_ref[:, pl.ds(MAXPAD + L, MAXPAD), :] = zpad
        res_b_ref[:, pl.ds(0, MAXPAD), :] = zpad
        res_b_ref[:, pl.ds(MAXPAD + L, MAXPAD), :] = zpad
        res_a_ref[:, pl.ds(MAXPAD, L), :] = x0
        skip_ref[...] = jnp.zeros_like(skip_ref)

    dil = dil_ref[l]

    def run_layer(src_ref, dst_ref):
        # All reads come from src (previous layer), all writes go to dst, so the
        # CL-row chunking has no read-after-write hazard on the dilated taps.
        for ci in range(NC):                      # static chunking of L axis
            o = ci * CL
            acc = jnp.zeros((B * CL, 2 * C), jnp.float32)
            for j in range(K):                    # static unroll over conv taps
                start = MAXPAD + o + (j - K // 2) * dil
                xj = src_ref[:, pl.ds(start, CL), :]            # (B, CL, C) f32
                acc = acc + jnp.dot(
                    xj.reshape(B * CL, C).astype(jnp.bfloat16), wg_ref[0, j],
                    preferred_element_type=jnp.float32)
            acc = acc + bg_ref[0]
            z = jnp.tanh(acc[:, :C]) * jax.nn.sigmoid(acc[:, C:])
            proj = jnp.dot(z.astype(jnp.bfloat16), wo_ref[0],
                           preferred_element_type=jnp.float32)  # (B*CL, 2C) [res|skip]
            mask_c = ((lax.broadcasted_iota(jnp.int32, (CL, 1), 0) + o) < tlen
                      ).astype(jnp.float32)
            xres = src_ref[:, pl.ds(MAXPAD + o, CL), :]
            newres = (xres + proj[:, :C].reshape(B, CL, C)) * mask_c
            dst_ref[:, pl.ds(MAXPAD + o, CL), :] = newres
            # skip is pointwise along L and re-masked in the final projection,
            # so no per-layer mask here (exact for the valid frames).
            skip_ref[:, pl.ds(o, CL), :] = (skip_ref[:, pl.ds(o, CL), :]
                                            + proj[:, C:].reshape(B, CL, C))

    @pl.when(l % 2 == 0)
    def _even():
        run_layer(res_a_ref, res_b_ref)

    @pl.when(l % 2 == 1)
    def _odd():
        run_layer(res_b_ref, res_a_ref)

    @pl.when(l == n_layers - 1)
    def _post():
        for ci in range(NC):
            o = ci * CL
            mask_c = ((lax.broadcasted_iota(jnp.int32, (CL, 1), 0) + o) < tlen
                      ).astype(jnp.float32)
            h = jnp.maximum(skip_ref[:, pl.ds(o, CL), :], 0.0)
            h = h.reshape(B * CL, C).astype(jnp.bfloat16)
            h = jnp.maximum(
                jnp.dot(h, pw1_ref[...], preferred_element_type=jnp.float32)
                + pb1_ref[...], 0.0)
            out = jnp.dot(h.astype(jnp.bfloat16), pw2_ref[...],
                          preferred_element_type=jnp.float32) + pb2_ref[...]
            out_ref[:, pl.ds(o, CL), :] = out.reshape(B, CL, C) * mask_c


def wavenet_apply(x, tlen, wp, *, K=3, chunk_target=256):
    """x: (B, L, Cp) f32 channel-last, L % 8 == 0, Cp = wp['dimp'] (lane-padded).
    tlen: number of valid frames (positions >= tlen are treated as zero)."""
    B, L, Cp = x.shape
    assert Cp == wp['dimp'] and L % SUBLANE == 0
    n_layers = wp['wg'].shape[0]
    MAXPAD = int(wp['maxdil'])
    CL = _pick_divisor(L, chunk_target)
    Lp = L + 2 * MAXPAD
    kern = functools.partial(_wavenet_stack_kernel, K=K, B=B, L=L, C=Cp,
                             CL=CL, MAXPAD=MAXPAD)
    tlen_arr = jnp.asarray([tlen], jnp.int32)
    return pl.pallas_call(
        kern,
        out_shape=jax.ShapeDtypeStruct((B, L, Cp), jnp.float32),
        grid=(n_layers,),
        in_specs=[
            pl.BlockSpec(memory_space=pltpu.MemorySpace.SMEM),          # dilations
            pl.BlockSpec(memory_space=pltpu.MemorySpace.SMEM),          # valid length
            pl.BlockSpec((B, L, Cp), lambda l: (0, 0, 0)),              # x (DMA'd once)
            pl.BlockSpec((1, K, Cp, 2 * Cp), lambda l: (l, 0, 0, 0)),   # gated conv W
            pl.BlockSpec((1, 1, 2 * Cp), lambda l: (l, 0, 0)),          # gated conv b
            pl.BlockSpec((1, Cp, 2 * Cp), lambda l: (l, 0, 0)),         # [res|skip] proj
            pl.BlockSpec((Cp, Cp), lambda l: (0, 0)),                   # post w1
            pl.BlockSpec((1, Cp), lambda l: (0, 0)),                    # post b1
            pl.BlockSpec((Cp, Cp), lambda l: (0, 0)),                   # post w2
            pl.BlockSpec((1, Cp), lambda l: (0, 0)),                    # post b2
        ],
        out_specs=pl.BlockSpec((B, L, Cp), lambda l: (0, 0, 0)),
        scratch_shapes=[
            pltpu.VMEM((B, Lp, Cp), jnp.float32),    # residual stream A (+ halo)
            pltpu.VMEM((B, Lp, Cp), jnp.float32),    # residual stream B (+ halo)
            pltpu.VMEM((B, L, Cp), jnp.float32),     # skip accumulator
        ],
        compiler_params=pltpu.CompilerParams(
            dimension_semantics=("arbitrary",),
            vmem_limit_bytes=_vmem_limit_bytes()),
    )(wp['dil'], tlen_arr, x, wp['wg'], wp['bg'], wp['wo'],
      wp['post']['w1'], wp['post']['b1'], wp['post']['w2'], wp['post']['b2'])


# ----------------------------------------------------------------------------
# Fused reverse-diffusion kernel (all Euler steps in one call)
# ----------------------------------------------------------------------------

def _diffusion_kernel(scal_ref, tlen_ref, z_ref, mu_ref, tbias_ref,
                      w1x_ref, w1m_ref, w2_ref, b2_ref, o_ref, xt_ref,
                      *, n_steps, B, TL, C):
    """Grad-TTS-style Euler reverse SDE with a small fused estimator:
         est = W2 tanh(xt W1x + mu W1m + tbias[i]) + b2
         xt  = xt - scal[i] * (mu - xt - est)
       grid = (L // TL,) ('parallel'): the estimator is pointwise along L, so
       L-tiles (and both v7x TensorCores) run independently.  xt stays in VMEM
       scratch for all steps; mu and mu@W1m are hoisted (loop invariant)."""
    t = pl.program_id(0)
    tlen = tlen_ref[0]
    mask = ((lax.broadcasted_iota(jnp.int32, (TL, 1), 0) + t * TL) < tlen
            ).astype(jnp.float32)
    mu2 = mu_ref[...].reshape(B * TL, C)                        # loop-invariant
    mp = jnp.dot(mu2.astype(jnp.bfloat16), w1m_ref[...],
                 preferred_element_type=jnp.float32)            # loop-invariant
    xt_ref[...] = z_ref[...].reshape(B * TL, C)

    def body(i, carry):
        xt = xt_ref[...]
        h1 = jnp.tanh(jnp.dot(xt.astype(jnp.bfloat16), w1x_ref[...],
                              preferred_element_type=jnp.float32)
                      + mp + tbias_ref[pl.ds(i, 1), :])
        est = jnp.dot(h1.astype(jnp.bfloat16), w2_ref[...],
                      preferred_element_type=jnp.float32) + b2_ref[...]
        xt_ref[...] = xt - scal_ref[i] * (mu2 - xt - est)
        return carry

    lax.fori_loop(0, n_steps, body, 0, unroll=2)
    # single mask at the end (per-step masking is redundant: pointwise along L
    # and the wrapper slices back to the valid frames anyway).
    o_ref[...] = xt_ref[...].reshape(B, TL, C) * mask


def diffusion_reverse(z, mu, tlen, tbias, scal, dp, *, tile_target=256):
    B, L, Cp = z.shape
    Hp = dp['w1x'].shape[1]
    n_steps = int(tbias.shape[0])
    TL = _pick_divisor(L, tile_target)
    kern = functools.partial(_diffusion_kernel, n_steps=n_steps, B=B, TL=TL, C=Cp)
    tlen_arr = jnp.asarray([tlen], jnp.int32)
    return pl.pallas_call(
        kern,
        out_shape=jax.ShapeDtypeStruct((B, L, Cp), jnp.float32),
        grid=(L // TL,),
        in_specs=[
            pl.BlockSpec(memory_space=pltpu.MemorySpace.SMEM),   # 0.5*beta*h schedule
            pl.BlockSpec(memory_space=pltpu.MemorySpace.SMEM),   # valid length
            pl.BlockSpec((B, TL, Cp), lambda t: (0, t, 0)),      # z
            pl.BlockSpec((B, TL, Cp), lambda t: (0, t, 0)),      # mu
            pl.BlockSpec((n_steps, Hp), lambda t: (0, 0)),       # temb@W1t+b1 table
            pl.BlockSpec((Cp, Hp), lambda t: (0, 0)),            # w1x
            pl.BlockSpec((Cp, Hp), lambda t: (0, 0)),            # w1m
            pl.BlockSpec((Hp, Cp), lambda t: (0, 0)),            # w2
            pl.BlockSpec((1, Cp), lambda t: (0, 0)),             # b2
        ],
        out_specs=pl.BlockSpec((B, TL, Cp), lambda t: (0, t, 0)),
        scratch_shapes=[pltpu.VMEM((B * TL, Cp), jnp.float32)],  # xt
        compiler_params=pltpu.CompilerParams(
            dimension_semantics=("parallel",),
            vmem_limit_bytes=_vmem_limit_bytes()),
    )(scal, tlen_arr, z, mu, tbias, dp['w1x'], dp['w1m'], dp['w2'], dp['b2'])


# ----------------------------------------------------------------------------
# Glue helpers (plain JAX; tiny, run once)
# ----------------------------------------------------------------------------

def bilinear_matrix(out_size, in_size):
    """PyTorch F.interpolate(mode='bilinear', align_corners=False) weights."""
    i = np.arange(out_size)
    src = (i + 0.5) * (in_size / out_size) - 0.5
    i0 = np.floor(src).astype(np.int64)
    lam = src - i0
    idx0 = np.clip(i0, 0, in_size - 1)
    idx1 = np.clip(i0 + 1, 0, in_size - 1)
    A = np.zeros((out_size, in_size), np.float32)
    A[np.arange(out_size), idx0] += (1.0 - lam).astype(np.float32)
    A[np.arange(out_size), idx1] += lam.astype(np.float32)
    return jnp.asarray(A)


def sinusoidal_emb_table(t_vals, dim):
    half = dim // 2
    scale = math.log(10000.0) / (half - 1)
    freqs = jnp.exp(-scale * jnp.arange(half, dtype=jnp.float32))
    ang = t_vals[:, None] * freqs[None, :]
    return jnp.concatenate([jnp.sin(ang), jnp.cos(ang)], axis=-1)  # (n, dim)


# ----------------------------------------------------------------------------
# Parameter init (deterministic, synthetic — no checkpoint loading).
# All kernel-side weights are zero-padded to 128-lane multiples so the padded
# computation is exactly the logical one on the valid channels.
# ----------------------------------------------------------------------------

def _pad_w(w, rp, cp):
    r, c = w.shape[-2], w.shape[-1]
    pad = [(0, 0)] * (w.ndim - 2) + [(0, rp - r), (0, cp - c)]
    return jnp.pad(w, pad)


def init_wavenet_params(key, dim, layers, stacks, K=3):
    n = layers * stacks
    dimp = _round_up(dim, LANE)
    k = jax.random.split(key, 6)
    sc_conv = 0.3 / math.sqrt(dim * K)
    sc_proj = 0.3 / math.sqrt(dim)
    wt = jax.random.normal(k[0], (n, K, dim, dim), jnp.float32) * sc_conv  # tanh
    ws = jax.random.normal(k[1], (n, K, dim, dim), jnp.float32) * sc_conv  # sigmoid
    wg = jnp.concatenate([_pad_w(wt, dimp, dimp), _pad_w(ws, dimp, dimp)],
                         axis=-1).astype(jnp.bfloat16)       # (n,K,dimp,2dimp)
    bg = jnp.zeros((n, 1, 2 * dimp), jnp.float32)
    wr = jax.random.normal(k[2], (n, dim, dim), jnp.float32) * sc_proj     # res
    wsk = jax.random.normal(k[3], (n, dim, dim), jnp.float32) * sc_proj    # skip
    wo = jnp.concatenate([_pad_w(wr, dimp, dimp), _pad_w(wsk, dimp, dimp)],
                         axis=-1).astype(jnp.bfloat16)       # (n,dimp,2dimp)
    post = dict(
        w1=_pad_w(jax.random.normal(k[4], (dim, dim), jnp.float32) * sc_proj,
                  dimp, dimp).astype(jnp.bfloat16),
        b1=jnp.zeros((1, dimp), jnp.float32),
        w2=_pad_w(jax.random.normal(k[5], (dim, dim), jnp.float32) * sc_proj,
                  dimp, dimp).astype(jnp.bfloat16),
        b2=jnp.zeros((1, dimp), jnp.float32),
    )
    dil = jnp.asarray([2 ** (i % layers) for i in range(n)], jnp.int32)
    return dict(wg=wg, bg=bg, wo=wo, post=post, dil=dil,
                dim=dim, dimp=dimp, maxdil=2 ** (layers - 1))


def init_decoder_params(key, n_feats, dec_dim):
    cp = _round_up(n_feats, LANE)
    hp = _round_up(dec_dim, LANE)
    k = jax.random.split(key, 4)
    sc = 0.3 / math.sqrt(max(n_feats, dec_dim))
    return dict(
        w1x=_pad_w(jax.random.normal(k[0], (n_feats, dec_dim), jnp.float32) * sc,
                   cp, hp).astype(jnp.bfloat16),
        w1m=_pad_w(jax.random.normal(k[1], (n_feats, dec_dim), jnp.float32) * sc,
                   cp, hp).astype(jnp.bfloat16),
        w1t=jax.random.normal(k[2], (dec_dim, dec_dim), jnp.float32) * sc,  # prologue
        b1=jnp.zeros((1, dec_dim), jnp.float32),
        w2=_pad_w(jax.random.normal(k[3], (dec_dim, n_feats), jnp.float32) * sc,
                  hp, cp).astype(jnp.bfloat16),
        b2=jnp.zeros((1, cp), jnp.float32),
        n_feats=n_feats, dec_dim=dec_dim, cp=cp, hp=hp,
    )


def init_fastsag_params(key, *, n_feats, sem_dim, dec_dim,
                        beta_min=0.05, beta_max=20.0, pe_scale=1000,
                        y_max_length=1024):
    k1, k2, k3 = jax.random.split(key, 3)
    return dict(
        sem_wavenet=init_wavenet_params(k1, sem_dim, layers=8, stacks=8),  # Wavenet(8,8)
        mix_wavenet=init_wavenet_params(k2, n_feats, layers=8, stacks=4),  # Wavenet(8,4)
        dec=init_decoder_params(k3, n_feats, dec_dim),
        beta_min=beta_min, beta_max=beta_max, pe_scale=pe_scale,
        y_max_length=y_max_length, n_feats=n_feats,
    )


# ----------------------------------------------------------------------------
# FastSAG forward (mix_type='wavenet', n_spks=1, use_x_mel=False, y=None)
# ----------------------------------------------------------------------------

def fastsag_forward(params, mel, semantic, n_timesteps, key, temperature=1.0):
    """mel: (B, n_feats, T) [NCL like torch]; semantic: (B, L_sem, C_sem)."""
    B, d, T = mel.shape          # mel only contributes its shape (use_x_mel=False)
    Y_MAX = params['y_max_length']
    L_sem, C_sem = semantic.shape[1], semantic.shape[2]

    # semantic_x2y = Wavenet(semantic.permute(0,2,1)).permute(0,2,1)
    sem_wp = params['sem_wavenet']
    L_sem_w = _round_up(L_sem, SUBLANE)
    x_sem = jnp.pad(semantic, ((0, 0), (0, L_sem_w - L_sem),
                               (0, sem_wp['dimp'] - C_sem)))
    semantic_x2y = wavenet_apply(x_sem, L_sem, sem_wp)[:, :L_sem, :C_sem]
    semantic_xy = semantic_x2y + semantic

    # F.interpolate(..., size=(d, T), mode='bilinear', align_corners=False):
    # runs once and is tiny -> plain XLA einsum, producing channel-last (B,T,d).
    img = jnp.transpose(semantic_xy, (0, 2, 1))              # (B, C_sem, L_sem)
    a_rows = bilinear_matrix(d, C_sem)                       # (d, C_sem)
    a_cols = bilinear_matrix(T, L_sem)                       # (T, L_sem)
    semantic2mel = jnp.einsum('dc,bcl,tl->btd', a_rows, img, a_cols)

    # Mixed encoder + diffusion over valid frames only (rounded to 8 sublanes);
    # the original pads to y_max_length=1024 but everything past T is masked to
    # zero and sliced back, so the tail is never computed here.  Guard T > Y_MAX
    # (the original would fail on a negative pad); we clamp to Y_MAX frames.
    mix_wp = params['mix_wavenet']
    dp_feats = mix_wp['dimp']
    L_valid = min(T, Y_MAX)
    L_work = min(_round_up(L_valid, SUBLANE), _round_up(Y_MAX, SUBLANE))
    x_cond = jnp.pad(semantic2mel[:, :L_valid, :],
                     ((0, 0), (0, L_work - L_valid), (0, dp_feats - d)))
    mu_y = wavenet_apply(x_cond, L_valid, mix_wp)            # (B, L_work, dp_feats)

    # z = randn_like(mu_y) / temperature ; decoder reverse diffusion.
    # TODO(synk): DiffusionEDM's internal UNet estimator is not provided; a
    # Grad-TTS-style Euler reverse SDE with a small fused estimator stands in.
    dec = params['dec']
    z_log = jax.random.normal(key, (B, L_work, d), jnp.float32) / temperature
    z = jnp.pad(z_log, ((0, 0), (0, 0), (0, dp_feats - d)))
    hstep = 1.0 / float(n_timesteps)
    t_vals = 1.0 - (jnp.arange(n_timesteps, dtype=jnp.float32) + 0.5) * hstep
    beta_t = params['beta_min'] + t_vals * (params['beta_max'] - params['beta_min'])
    scal = (0.5 * beta_t * hstep).astype(jnp.float32)                    # (n_steps,)
    temb = sinusoidal_emb_table(t_vals * params['pe_scale'],
                                dec['w1t'].shape[0])                     # (n_steps, E)
    tbias = jnp.pad(temb @ dec['w1t'] + dec['b1'],
                    ((0, 0), (0, dec['hp'] - dec['dec_dim']))).astype(jnp.float32)
    dec_out = diffusion_reverse(z, mu_y, L_valid, tbias, scal, dec)

    encoder_outputs = jnp.transpose(mu_y[:, :L_valid, :d], (0, 2, 1))    # (B, d, L)
    decoder_outputs = jnp.transpose(dec_out[:, :L_valid, :d], (0, 2, 1))  # (B, d, L)
    loss = None                                                          # y is None
    return encoder_outputs, decoder_outputs, loss


# ----------------------------------------------------------------------------
# Demo
# ----------------------------------------------------------------------------

if __name__ == "__main__":
    # Small shapes consistent with the module (n_feats / semantic dims reduced).
    B = 2           # batch
    N_FEATS = 16    # mel channels (module default 100)
    T = 24          # mel frames (L)
    L_SEM = 32      # semantic sequence length
    C_SEM = 64      # semantic feature dim (module uses 768)
    DEC_DIM = 32    # decoder hidden dim (module default 64)
    Y_MAX = 1024    # hard-coded y_max_length in forward
    N_TIMESTEPS = 4

    root = jax.random.PRNGKey(0)
    k_params, k_mel, k_sem, k_noise = jax.random.split(root, 4)

    params = init_fastsag_params(k_params, n_feats=N_FEATS, sem_dim=C_SEM,
                                 dec_dim=DEC_DIM, y_max_length=Y_MAX)

    mel = jax.random.normal(k_mel, (B, N_FEATS, T), jnp.float32)
    semantic = jax.random.normal(k_sem, (B, L_SEM, C_SEM), jnp.float32)

    enc, dec, loss = fastsag_forward(params, mel, semantic,
                                     n_timesteps=N_TIMESTEPS, key=k_noise,
                                     temperature=1.0)
    jax.block_until_ready((enc, dec))
    assert enc.shape == (B, N_FEATS, T), enc.shape
    assert dec.shape == (B, N_FEATS, T), dec.shape
    assert loss is None
    assert bool(jnp.all(jnp.isfinite(enc))) and bool(jnp.all(jnp.isfinite(dec)))
    print("KERNEL_OK")
</pallas_src>

<mosaic_0001>
module attributes {stable_mosaic.version = 11 : i64} {
  func.func @_wavenet_stack_kernel(%arg0: i32, %arg1: memref<64xi32, #tpu.memory_space<smem>>, %arg2: memref<1xi32, #tpu.memory_space<smem>>, %arg3: memref<2x32x128xf32, #tpu.memory_space<vmem>>, %arg4: memref<1x3x128x256xbf16, #tpu.memory_space<vmem>>, %arg5: memref<1x1x256xf32, #tpu.memory_space<vmem>>, %arg6: memref<1x128x256xbf16, #tpu.memory_space<vmem>>, %arg7: memref<128x128xbf16, #tpu.memory_space<vmem>>, %arg8: memref<1x128xf32, #tpu.memory_space<vmem>>, %arg9: memref<128x128xbf16, #tpu.memory_space<vmem>>, %arg10: memref<1x128xf32, #tpu.memory_space<vmem>>, %arg11: memref<2x32x128xf32, #tpu.memory_space<vmem>>, %arg12: memref<2x288x128xf32, #tpu.memory_space<vmem>>, %arg13: memref<2x288x128xf32, #tpu.memory_space<vmem>>, %arg14: memref<2x32x128xf32, #tpu.memory_space<vmem>>) attributes {dimension_semantics = [#tpu.dimension_semantics<arbitrary>], iteration_bounds = array<i64: 64>, scalar_prefetch = 0 : i64, scratch_operands = 3 : i64, tpu.core_type = #tpu.core_type<tc>, window_params = [{transform_indices = @transform_0, window_bounds = array<i64: 64>}, {transform_indices = @transform_1, window_bounds = array<i64: 1>}, {pipeline_mode = #tpu.pipeline_mode<synchronous>, transform_indices = @transform_2, window_bounds = array<i64: 2, 32, 128>}, {transform_indices = @transform_3, window_bounds = array<i64: 1, 3, 128, 256>}, {transform_indices = @transform_4, window_bounds = array<i64: 1, 1, 256>}, {transform_indices = @transform_5, window_bounds = array<i64: 1, 128, 256>}, {pipeline_mode = #tpu.pipeline_mode<synchronous>, transform_indices = @transform_6, window_bounds = array<i64: 128, 128>}, {pipeline_mode = #tpu.pipeline_mode<synchronous>, transform_indices = @transform_7, window_bounds = array<i64: 1, 128>}, {pipeline_mode = #tpu.pipeline_mode<synchronous>, transform_indices = @transform_8, window_bounds = array<i64: 128, 128>}, {pipeline_mode = #tpu.pipeline_mode<synchronous>, transform_indices = @transform_9, window_bounds = array<i64: 1, 128>}, {pipeline_mode = #tpu.pipeline_mode<synchronous>, transform_indices = @transform_10, window_bounds = array<i64: 2, 32, 128>}]} {
    %c0 = arith.constant 0 : index
    %0 = memref.load %arg2[%c0] : memref<1xi32, #tpu.memory_space<smem>>
    %c0_i32 = arith.constant 0 : i32
    %1 = arith.cmpi eq, %arg0, %c0_i32 : i32
    %2 = arith.extui %1 : i1 to i32
    %c0_i32_0 = arith.constant 0 : i32
    %3 = arith.cmpi ne, %2, %c0_i32_0 : i32
    scf.if %3 {
      %35 = tpu.iota {dimensions = array<i32: 0>} : vector<32x1xi32>
      %36 = vector.broadcast %0 : i32 to vector<32x1xi32>
      %37 = arith.cmpi slt, %35, %36 : vector<32x1xi32>
      %38 = arith.extui %37 : vector<32x1xi1> to vector<32x1xi32>
      %39 = arith.sitofp %38 : vector<32x1xi32> to vector<32x1xf32>
      %c0_16 = arith.constant 0 : index
      %c0_17 = arith.constant 0 : index
      %c0_18 = arith.constant 0 : index
      %40 = vector.load %arg3[%c0_16, %c0_17, %c0_18] : memref<2x32x128xf32, #tpu.memory_space<vmem>>, vector<2x32x128xf32>
      %41 = vector.shape_cast %39 : vector<32x1xf32> to vector<1x32x1xf32>
      %42 = vector.broadcast %41 : vector<1x32x1xf32> to vector<2x32x128xf32>
      %43 = arith.mulf %40, %42 : vector<2x32x128xf32>
      %cst = arith.constant 0.000000e+00 : f32
      %44 = vector.broadcast %cst : f32 to vector<2x128x128xf32>
      %c0_19 = arith.constant 0 : index
      %c0_20 = arith.constant 0 : index
      %c0_21 = arith.constant 0 : index
      %45 = vector.load %arg12[%c0_19, %c0_20, %c0_21] : memref<2x288x128xf32, #tpu.memory_space<vmem>>, vector<2x128x128xf32>
      tpu.vector_store %arg12[%c0_19, %c0_20, %c0_21], %44 {strides = array<i32>} : memref<2x288x128xf32, #tpu.memory_space<vmem>>, vector<2x128x128xf32>,
      %c0_22 = arith.constant 0 : index
      %c160 = arith.constant 160 : index
      %c0_23 = arith.constant 0 : index
      %46 = vector.load %arg12[%c0_22, %c160, %c0_23] : memref<2x288x128xf32, #tpu.memory_space<vmem>>, vector<2x128x128xf32>
      tpu.vector_store %arg12[%c0_22, %c160, %c0_23], %44 {strides = array<i32>} : memref<2x288x128xf32, #tpu.memory_space<vmem>>, vector<2x128x128xf32>,
      %c0_24 = arith.constant 0 : index
      %c0_25 = arith.constant 0 : index
      %c0_26 = arith.constant 0 : index
      %47 = vector.load %arg13[%c0_24, %c0_25, %c0_26] : memref<2x288x128xf32, #tpu.memory_space<vmem>>, vector<2x128x128xf32>
      tpu.vector_store %arg13[%c0_24, %c0_25, %c0_26], %44 {strides = array<i32>} : memref<2x288x128xf32, #tpu.memory_space<vmem>>, vector<2x128x128xf32>,
      %c0_27 = arith.constant 0 : index
      %c160_28 = arith.constant 160 : index
      %c0_29 = arith.constant 0 : index
      %48 = vector.load %arg13[%c0_27, %c160_28, %c0_29] : memref<2x288x128xf32, #tpu.memory_space<vmem>>, vector<2x128x128xf32>
      tpu.vector_store %arg13[%c0_27, %c160_28, %c0_29], %44 {strides = array<i32>} : memref<2x288x128xf32, #tpu.memory_space<vmem>>, vector<2x128x128xf32>,
      %c0_30 = arith.constant 0 : index
      %c128 = arith.constant 128 : index
      %c0_31 = arith.constant 0 : index
      %49 = vector.load %arg12[%c0_30, %c128, %c0_31] : memref<2x288x128xf32, #tpu.memory_space<vmem>>, vector<2x32x128xf32>
      tpu.vector_store %arg12[%c0_30, %c128, %c0_31], %43 {strides = array<i32>} : memref<2x288x128xf32, #tpu.memory_space<vmem>>, vector<2x32x128xf32>,
      %cst_32 = arith.constant 0.000000e+00 : f32
      %50 = vector.broadcast %cst_32 : f32 to vector<2x32x128xf32>
      %c0_33 = arith.constant 0 : index
      %c0_34 = arith.constant 0 : index
      %c0_35 = arith.constant 0 : index
      %51 = vector.load %arg14[%c0_33, %c0_34, %c0_35] : memref<2x32x128xf32, #tpu.memory_space<vmem>>, vector<2x32x128xf32>
      tpu.vector_store %arg14[%c0_33, %c0_34, %c0_35], %50 {strides = array<i32>} : memref<2x32x128xf32, #tpu.memory_space<vmem>>, vector<2x32x128xf32>,
    } else {
    }
    %4 = arith.index_cast %arg0 : i32 to index
    %5 = memref.load %arg1[%4] : memref<64xi32, #tpu.memory_space<smem>>
    %c2_i32 = arith.constant 2 : i32
    %c0_i32_1 = arith.constant 0 : i32
    %6 = arith.cmpi eq, %c2_i32, %c0_i32_1 : i32
    %c1_i32 = arith.constant 1 : i32
    %7 = arith.select %6, %c1_i32, %c2_i32 : i32
    %8 = arith.remsi %arg0, %7 : i32
    %c0_i32_2 = arith.constant 0 : i32
    %9 = arith.cmpi ne, %8, %c0_i32_2 : i32
    %c0_i32_3 = arith.constant 0 : i32
    %10 = arith.cmpi slt, %8, %c0_i32_3 : i32
    %c0_i32_4 = arith.constant 0 : i32
    %11 = arith.cmpi slt, %7, %c0_i32_4 : i32
    %12 = arith.xori %10, %11 : i1
    %13 = arith.andi %12, %9 : i1
    %14 = arith.addi %8, %7 : i32
    %15 = arith.select %13, %14, %8 : i32
    %c0_i32_5 = arith.constant 0 : i32
    %16 = arith.cmpi eq, %15, %c0_i32_5 : i32
    %17 = arith.extui %16 : i1 to i32
    %c0_i32_6 = arith.constant 0 : i32
    %18 = arith.cmpi ne, %17, %c0_i32_6 : i32
    scf.if %18 {
      %cst = arith.constant 0.000000e+00 : f32
      %35 = vector.broadcast %cst : f32 to vector<64x256xf32>
      %c-1_i32 = arith.constant -1 : i32
      %36 = arith.muli %c-1_i32, %5 : i32
      %c128_i32 = arith.constant 128 : i32
      %37 = arith.addi %c128_i32, %36 : i32
      %c0_16 = arith.constant 0 : index
      %38 = arith.index_cast %37 : i32 to index
      %c0_17 = arith.constant 0 : index
      %39 = vector.load %arg12[%c0_16, %38, %c0_17] : memref<2x288x128xf32, #tpu.memory_space<vmem>>, vector<2x32x128xf32>
      %40 = vector.shape_cast %39 : vector<2x32x128xf32> to vector<64x128xf32>
      %41 = arith.truncf %40 : vector<64x128xf32> to vector<64x128xbf16>
      %c0_18 = arith.constant 0 : index
      %c0_19 = arith.constant 0 : index
      %c0_20 = arith.constant 0 : index
      %c0_21 = arith.constant 0 : index
      %42 = vector.load %arg4[%c0_18, %c0_19, %c0_20, %c0_21] : memref<1x3x128x256xbf16, #tpu.memory_space<vmem>>, vector<1x1x128x256xbf16>
      %43 = vector.shape_cast %42 : vector<1x1x128x256xbf16> to vector<128x256xbf16>
      %cst_22 = arith.constant dense<0.000000e+00> : vector<64x256xf32>
      %44 = tpu.matmul %41, %43, %cst_22 {dimension_numbers = #tpu.dot_dimension_numbers<[1], [0], [0], [1], [0, 0, 1, 1], [], []>} : vector<64x128xbf16>, vector<128x256xbf16>, vector<64x256xf32> -> vector<64x256xf32>
      %45 = arith.addf %35, %44 : vector<64x256xf32>
      %c0_i32_23 = arith.constant 0 : i32
      %46 = arith.muli %c0_i32_23, %5 : i32
      %c128_i32_24 = arith.constant 128 : i32
      %47 = arith.addi %c128_i32_24, %46 : i32
      %c0_25 = arith.constant 0 : index
      %48 = arith.index_cast %47 : i32 to index
      %c0_26 = arith.constant 0 : index
      %49 = vector.load %arg12[%c0_25, %48, %c0_26] : memref<2x288x128xf32, #tpu.memory_space<vmem>>, vector<2x32x128xf32>
      %50 = vector.shape_cast %49 : vector<2x32x128xf32> to vector<64x128xf32>
      %51 = arith.truncf %50 : vector<64x128xf32> to vector<64x128xbf16>
      %c0_27 = arith.constant 0 : index
      %c1 = arith.constant 1 : index
      %c0_28 = arith.constant 0 : index
      %c0_29 = arith.constant 0 : index
      %52 = vector.load %arg4[%c0_27, %c1, %c0_28, %c0_29] : memref<1x3x128x256xbf16, #tpu.memory_space<vmem>>, vector<1x1x128x256xbf16>
      %53 = vector.shape_cast %52 : vector<1x1x128x256xbf16> to vector<128x256xbf16>
      %cst_30 = arith.constant dense<0.000000e+00> : vector<64x256xf32>
      %54 = tpu.matmul %51, %53, %cst_30 {dimension_numbers = #tpu.dot_dimension_numbers<[1], [0], [0], [1], [0, 0, 1, 1], [], []>} : vector<64x128xbf16>, vector<128x256xbf16>, vector<64x256xf32> -> vector<64x256xf32>
      %55 = arith.addf %45, %54 : vector<64x256xf32>
      %c1_i32_31 = arith.constant 1 : i32
      %56 = arith.muli %c1_i32_31, %5 : i32
      %c128_i32_32 = arith.constant 128 : i32
      %57 = arith.addi %c128_i32_32, %56 : i32
      %c0_33 = arith.constant 0 : index
      %58 = arith.index_cast %57 : i32 to index
      %c0_34 = arith.constant 0 : index
      %59 = vector.load %arg12[%c0_33, %58, %c0_34] : memref<2x288x128xf32, #tpu.memory_space<vmem>>, vector<2x32x128xf32>
      %60 = vector.shape_cast %59 : vector<2x32x128xf32> to vector<64x128xf32>
      %61 = arith.truncf %60 : vector<64x128xf32> to vector<64x128xbf16>
      %c0_35 = arith.constant 0 : index
      %c2 = arith.constant 2 : index
      %c0_36 = arith.constant 0 : index
      %c0_37 = arith.constant 0 : index
      %62 = vector.load %arg4[%c0_35, %c2, %c0_36, %c0_37] : memref<1x3x128x256xbf16, #tpu.memory_space<vmem>>, vector<1x1x128x256xbf16>
      %63 = vector.shape_cast %62 : vector<1x1x128x256xbf16> to vector<128x256xbf16>
      %cst_38 = arith.constant dense<0.000000e+00> : vector<64x256xf32>
      %64 = tpu.matmul %61, %63, %cst_38 {dimension_numbers = #tpu.dot_dimension_numbers<[1], [0], [0], [1], [0, 0, 1, 1], [], []>} : vector<64x128xbf16>, vector<128x256xbf16>, vector<64x256xf32> -> vector<64x256xf32>
      %65 = arith.addf %55, %64 : vector<64x256xf32>
      %c0_39 = arith.constant 0 : index
      %c0_40 = arith.constant 0 : index
      %c0_41 = arith.constant 0 : index
      %66 = vector.load %arg5[%c0_39, %c0_40, %c0_41] : memref<1x1x256xf32, #tpu.memory_space<vmem>>, vector<1x1x256xf32>
      %67 = vector.shape_cast %66 : vector<1x1x256xf32> to vector<1x256xf32>
      %68 = vector.broadcast %67 : vector<1x256xf32> to vector<64x256xf32>
      %69 = arith.addf %65, %68 : vector<64x256xf32>
      %70 = vector.extract_strided_slice %69 {offsets = [0, 0], sizes = [64, 128], strides = [1, 1]} : vector<64x256xf32> to vector<64x128xf32>
      %71 = math.tanh %70 : vector<64x128xf32>
      %72 = vector.extract_strided_slice %69 {offsets = [0, 128], sizes = [64, 128], strides = [1, 1]} : vector<64x256xf32> to vector<64x128xf32>
      %73 = arith.negf %72 : vector<64x128xf32>
      %74 = math.exp %73 : vector<64x128xf32>
      %cst_42 = arith.constant 1.000000e+00 : f32
      %75 = vector.broadcast %cst_42 : f32 to vector<64x128xf32>
      %76 = arith.addf %75, %74 : vector<64x128xf32>
      %77 = arith.divf %75, %76 : vector<64x128xf32>
      %78 = arith.mulf %71, %77 : vector<64x128xf32>
      %79 = arith.truncf %78 : vector<64x128xf32> to vector<64x128xbf16>
      %c0_43 = arith.constant 0 : index
      %c0_44 = arith.constant 0 : index
      %c0_45 = arith.constant 0 : index
      %80 = vector.load %arg6[%c0_43, %c0_44, %c0_45] : memref<1x128x256xbf16, #tpu.memory_space<vmem>>, vector<1x128x256xbf16>
      %81 = vector.shape_cast %80 : vector<1x128x256xbf16> to vector<128x256xbf16>
      %cst_46 = arith.constant dense<0.000000e+00> : vector<64x256xf32>
      %82 = tpu.matmul %79, %81, %cst_46 {dimension_numbers = #tpu.dot_dimension_numbers<[1], [0], [0], [1], [0, 0, 1, 1], [], []>} : vector<64x128xbf16>, vector<128x256xbf16>, vector<64x256xf32> -> vector<64x256xf32>
      %83 = tpu.iota {dimensions = array<i32: 0>} : vector<32x1xi32>
      %c0_i32_47 = arith.constant 0 : i32
      %84 = vector.broadcast %c0_i32_47 : i32 to vector<32x1xi32>
      %85 = arith.addi %83, %84 : vector<32x1xi32>
      %86 = vector.broadcast %0 : i32 to vector<32x1xi32>
      %87 = arith.cmpi slt, %85, %86 : vector<32x1xi32>
      %88 = arith.extui %87 : vector<32x1xi1> to vector<32x1xi32>
      %89 = arith.sitofp %88 : vector<32x1xi32> to vector<32x1xf32>
      %c0_48 = arith.constant 0 : index
      %c128 = arith.constant 128 : index
      %c0_49 = arith.constant 0 : index
      %90 = vector.load %arg12[%c0_48, %c128, %c0_49] : memref<2x288x128xf32, #tpu.memory_space<vmem>>, vector<2x32x128xf32>
      %91 = vector.extract_strided_slice %82 {offsets = [0, 0], sizes = [64, 128], strides = [1, 1]} : vector<64x256xf32> to vector<64x128xf32>
      %92 = vector.shape_cast %91 : vector<64x128xf32> to vector<2x32x128xf32>
      %93 = arith.addf %90, %92 : vector<2x32x128xf32>
      %94 = vector.shape_cast %89 : vector<32x1xf32> to vector<1x32x1xf32>
      %95 = vector.broadcast %94 : vector<1x32x1xf32> to vector<2x32x128xf32>
      %96 = arith.mulf %93, %95 : vector<2x32x128xf32>
      %c0_50 = arith.constant 0 : index
      %c128_51 = arith.constant 128 : index
      %c0_52 = arith.constant 0 : index
      %97 = vector.load %arg13[%c0_50, %c128_51, %c0_52] : memref<2x288x128xf32, #tpu.memory_space<vmem>>, vector<2x32x128xf32>
      tpu.vector_store %arg13[%c0_50, %c128_51, %c0_52], %96 {strides = array<i32>} : memref<2x288x128xf32, #tpu.memory_space<vmem>>, vector<2x32x128xf32>,
      %c0_53 = arith.constant 0 : index
      %c0_54 = arith.constant 0 : index
      %c0_55 = arith.constant 0 : index
      %98 = vector.load %arg14[%c0_53, %c0_54, %c0_55] : memref<2x32x128xf32, #tpu.memory_space<vmem>>, vector<2x32x128xf32>
      %99 = vector.extract_strided_slice %82 {offsets = [0, 128], sizes = [64, 128], strides = [1, 1]} : vector<64x256xf32> to vector<64x128xf32>
      %100 = vector.shape_cast %99 : vector<64x128xf32> to vector<2x32x128xf32>
      %101 = arith.addf %98, %100 : vector<2x32x128xf32>
      %c0_56 = arith.constant 0 : index
      %c0_57 = arith.constant 0 : index
      %c0_58 = arith.constant 0 : index
      %102 = vector.load %arg14[%c0_56, %c0_57, %c0_58] : memref<2x32x128xf32, #tpu.memory_space<vmem>>, vector<2x32x128xf32>
      tpu.vector_store %arg14[%c0_56, %c0_57, %c0_58], %101 {strides = array<i32>} : memref<2x32x128xf32, #tpu.memory_space<vmem>>, vector<2x32x128xf32>,
    } else {
    }
    %c2_i32_7 = arith.constant 2 : i32
    %c0_i32_8 = arith.constant 0 : i32
    %19 = arith.cmpi eq, %c2_i32_7, %c0_i32_8 : i32
    %c1_i32_9 = arith.constant 1 : i32
    %20 = arith.select %19, %c1_i32_9, %c2_i32_7 : i32
    %21 = arith.remsi %arg0, %20 : i32
    %c0_i32_10 = arith.constant 0 : i32
    %22 = arith.cmpi ne, %21, %c0_i32_10 : i32
    %c0_i32_11 = arith.constant 0 : i32
    %23 = arith.cmpi slt, %21, %c0_i32_11 : i32
    %c0_i32_12 = arith.constant 0 : i32
    %24 = arith.cmpi slt, %20, %c0_i32_12 : i32
    %25 = arith.xori %23, %24 : i1
    %26 = arith.andi %25, %22 : i1
    %27 = arith.addi %21, %20 : i32
    %28 = arith.select %26, %27, %21 : i32
    %c1_i32_13 = arith.constant 1 : i32
    %29 = arith.cmpi eq, %28, %c1_i32_13 : i32
    %30 = arith.extui %29 : i1 to i32
    %c0_i32_14 = arith.constant 0 : i32
    %31 = arith.cmpi ne, %30, %c0_i32_14 : i32
    scf.if %31 {
      %cst = arith.constant 0.000000e+00 : f32
      %35 = vector.broadcast %cst : f32 to vector<64x256xf32>
      %c-1_i32 = arith.constant -1 : i32
      %36 = arith.muli %c-1_i32, %5 : i32
      %c128_i32 = arith.constant 128 : i32
      %37 = arith.addi %c128_i32, %36 : i32
      %c0_16 = arith.constant 0 : index
      %38 = arith.index_cast %37 : i32 to index
      %c0_17 = arith.constant 0 : index
      %39 = vector.load %arg13[%c0_16, %38, %c0_17] : memref<2x288x128xf32, #tpu.memory_space<vmem>>, vector<2x32x128xf32>
      %40 = vector.shape_cast %39 : vector<2x32x128xf32> to vector<64x128xf32>
      %41 = arith.truncf %40 : vector<64x128xf32> to vector<64x128xbf16>
      %c0_18 = arith.constant 0 : index
      %c0_19 = arith.constant 0 : index
      %c0_20 = arith.constant 0 : index
      %c0_21 = arith.constant 0 : index
      %42 = vector.load %arg4[%c0_18, %c0_19, %c0_20, %c0_21] : memref<1x3x128x256xbf16, #tpu.memory_space<vmem>>, vector<1x1x128x256xbf16>
      %43 = vector.shape_cast %42 : vector<1x1x128x256xbf16> to vector<128x256xbf16>
      %cst_22 = arith.constant dense<0.000000e+00> : vector<64x256xf32>
      %44 = tpu.matmul %41, %43, %cst_22 {dimension_numbers = #tpu.dot_dimension_numbers<[1], [0], [0], [1], [0, 0, 1, 1], [], []>} : vector<64x128xbf16>, vector<128x256xbf16>, vector<64x256xf32> -> vector<64x256xf32>
      %45 = arith.addf %35, %44 : vector<64x256xf32>
      %c0_i32_23 = arith.constant 0 : i32
      %46 = arith.muli %c0_i32_23, %5 : i32
      %c128_i32_24 = arith.constant 128 : i32
      %47 = arith.addi %c128_i32_24, %46 : i32
      %c0_25 = arith.constant 0 : index
      %48 = arith.index_cast %47 : i32 to index
      %c0_26 = arith.constant 0 : index
      %49 = vector.load %arg13[%c0_25, %48, %c0_26] : memref<2x288x128xf32, #tpu.memory_space<vmem>>, vector<2x32x128xf32>
      %50 = vector.shape_cast %49 : vector<2x32x128xf32> to vector<64x128xf32>
      %51 = arith.truncf %50 : vector<64x128xf32> to vector<64x128xbf16>
      %c0_27 = arith.constant 0 : index
      %c1 = arith.constant 1 : index
      %c0_28 = arith.constant 0 : index
      %c0_29 = arith.constant 0 : index
      %52 = vector.load %arg4[%c0_27, %c1, %c0_28, %c0_29] : memref<1x3x128x256xbf16, #tpu.memory_space<vmem>>, vector<1x1x128x256xbf16>
      %53 = vector.shape_cast %52 : vector<1x1x128x256xbf16> to vector<128x256xbf16>
      %cst_30 = arith.constant dense<0.000000e+00> : vector<64x256xf32>
      %54 = tpu.matmul %51, %53, %cst_30 {dimension_numbers = #tpu.dot_dimension_numbers<[1], [0], [0], [1], [0, 0, 1, 1], [], []>} : vector<64x128xbf16>, vector<128x256xbf16>, vector<64x256xf32> -> vector<64x256xf32>
      %55 = arith.addf %45, %54 : vector<64x256xf32>
      %c1_i32_31 = arith.constant 1 : i32
      %56 = arith.muli %c1_i32_31, %5 : i32
      %c128_i32_32 = arith.constant 128 : i32
      %57 = arith.addi %c128_i32_32, %56 : i32
      %c0_33 = arith.constant 0 : index
      %58 = arith.index_cast %57 : i32 to index
      %c0_34 = arith.constant 0 : index
      %59 = vector.load %arg13[%c0_33, %58, %c0_34] : memref<2x288x128xf32, #tpu.memory_space<vmem>>, vector<2x32x128xf32>
      %60 = vector.shape_cast %59 : vector<2x32x128xf32> to vector<64x128xf32>
      %61 = arith.truncf %60 : vector<64x128xf32> to vector<64x128xbf16>
      %c0_35 = arith.constant 0 : index
      %c2 = arith.constant 2 : index
      %c0_36 = arith.constant 0 : index
      %c0_37 = arith.constant 0 : index
      %62 = vector.load %arg4[%c0_35, %c2, %c0_36, %c0_37] : memref<1x3x128x256xbf16, #tpu.memory_space<vmem>>, vector<1x1x128x256xbf16>
      %63 = vector.shape_cast %62 : vector<1x1x128x256xbf16> to vector<128x256xbf16>
      %cst_38 = arith.constant dense<0.000000e+00> : vector<64x256xf32>
      %64 = tpu.matmul %61, %63, %cst_38 {dimension_numbers = #tpu.dot_dimension_numbers<[1], [0], [0], [1], [0, 0, 1, 1], [], []>} : vector<64x128xbf16>, vector<128x256xbf16>, vector<64x256xf32> -> vector<64x256xf32>
      %65 = arith.addf %55, %64 : vector<64x256xf32>
      %c0_39 = arith.constant 0 : index
      %c0_40 = arith.constant 0 : index
      %c0_41 = arith.constant 0 : index
      %66 = vector.load %arg5[%c0_39, %c0_40, %c0_41] : memref<1x1x256xf32, #tpu.memory_space<vmem>>, vector<1x1x256xf32>
      %67 = vector.shape_cast %66 : vector<1x1x256xf32> to vector<1x256xf32>
      %68 = vector.broadcast %67 : vector<1x256xf32> to vector<64x256xf32>
      %69 = arith.addf %65, %68 : vector<64x256xf32>
      %70 = vector.extract_strided_slice %69 {offsets = [0, 0], sizes = [64, 128], strides = [1, 1]} : vector<64x256xf32> to vector<64x128xf32>
      %71 = math.tanh %70 : vector<64x128xf32>
      %72 = vector.extract_strided_slice %69 {offsets = [0, 128], sizes = [64, 128], strides = [1, 1]} : vector<64x256xf32> to vector<64x128xf32>
      %73 = arith.negf %72 : vector<64x128xf32>
      %74 = math.exp %73 : vector<64x128xf32>
      %cst_42 = arith.constant 1.000000e+00 : f32
      %75 = vector.broadcast %cst_42 : f32 to vector<64x128xf32>
      %76 = arith.addf %75, %74 : vector<64x128xf32>
      %77 = arith.divf %75, %76 : vector<64x128xf32>
      %78 = arith.mulf %71, %77 : vector<64x128xf32>
      %79 = arith.truncf %78 : vector<64x128xf32> to vector<64x128xbf16>
      %c0_43 = arith.constant 0 : index
      %c0_44 = arith.constant 0 : index
      %c0_45 = arith.constant 0 : index
      %80 = vector.load %arg6[%c0_43, %c0_44, %c0_45] : memref<1x128x256xbf16, #tpu.memory_space<vmem>>, vector<1x128x256xbf16>
      %81 = vector.shape_cast %80 : vector<1x128x256xbf16> to vector<128x256xbf16>
      %cst_46 = arith.constant dense<0.000000e+00> : vector<64x256xf32>
      %82 = tpu.matmul %79, %81, %cst_46 {dimension_numbers = #tpu.dot_dimension_numbers<[1], [0], [0], [1], [0, 0, 1, 1], [], []>} : vector<64x128xbf16>, vector<128x256xbf16>, vector<64x256xf32> -> vector<64x256xf32>
      %83 = tpu.iota {dimensions = array<i32: 0>} : vector<32x1xi32>
      %c0_i32_47 = arith.constant 0 : i32
      %84 = vector.broadcast %c0_i32_47 : i32 to vector<32x1xi32>
      %85 = arith.addi %83, %84 : vector<32x1xi32>
      %86 = vector.broadcast %0 : i32 to vector<32x1xi32>
      %87 = arith.cmpi slt, %85, %86 : vector<32x1xi32>
      %88 = arith.extui %87 : vector<32x1xi1> to vector<32x1xi32>
      %89 = arith.sitofp %88 : vector<32x1xi32> to vector<32x1xf32>
      %c0_48 = arith.constant 0 : index
      %c128 = arith.constant 128 : index
      %c0_49 = arith.constant 0 : index
      %90 = vector.load %arg13[%c0_48, %c128, %c0_49] : memref<2x288x128xf32, #tpu.memory_space<vmem>>, vector<2x32x128xf32>
      %91 = vector.extract_strided_slice %82 {offsets = [0, 0], sizes = [64, 128], strides = [1, 1]} : vector<64x256xf32> to vector<64x128xf32>
      %92 = vector.shape_cast %91 : vector<64x128xf32> to vector<2x32x128xf32>
      %93 = arith.addf %90, %92 : vector<2x32x128xf32>
      %94 = vector.shape_cast %89 : vector<32x1xf32> to vector<1x32x1xf32>
      %95 = vector.broadcast %94 : vector<1x32x1xf32> to vector<2x32x128xf32>
      %96 = arith.mulf %93, %95 : vector<2x32x128xf32>
      %c0_50 = arith.constant 0 : index
      %c128_51 = arith.constant 128 : index
      %c0_52 = arith.constant 0 : index
      %97 = vector.load %arg12[%c0_50, %c128_51, %c0_52] : memref<2x288x128xf32, #tpu.memory_space<vmem>>, vector<2x32x128xf32>
      tpu.vector_store %arg12[%c0_50, %c128_51, %c0_52], %96 {strides = array<i32>} : memref<2x288x128xf32, #tpu.memory_space<vmem>>, vector<2x32x128xf32>,
      %c0_53 = arith.constant 0 : index
      %c0_54 = arith.constant 0 : index
      %c0_55 = arith.constant 0 : index
      %98 = vector.load %arg14[%c0_53, %c0_54, %c0_55] : memref<2x32x128xf32, #tpu.memory_space<vmem>>, vector<2x32x128xf32>
      %99 = vector.extract_strided_slice %82 {offsets = [0, 128], sizes = [64, 128], strides = [1, 1]} : vector<64x256xf32> to vector<64x128xf32>
      %100 = vector.shape_cast %99 : vector<64x128xf32> to vector<2x32x128xf32>
      %101 = arith.addf %98, %100 : vector<2x32x128xf32>
      %c0_56 = arith.constant 0 : index
      %c0_57 = arith.constant 0 : index
      %c0_58 = arith.constant 0 : index
      %102 = vector.load %arg14[%c0_56, %c0_57, %c0_58] : memref<2x32x128xf32, #tpu.memory_space<vmem>>, vector<2x32x128xf32>
      tpu.vector_store %arg14[%c0_56, %c0_57, %c0_58], %101 {strides = array<i32>} : memref<2x32x128xf32, #tpu.memory_space<vmem>>, vector<2x32x128xf32>,
    } else {
    }
    %c63_i32 = arith.constant 63 : i32
    %32 = arith.cmpi eq, %arg0, %c63_i32 : i32
    %33 = arith.extui %32 : i1 to i32
    %c0_i32_15 = arith.constant 0 : i32
    %34 = arith.cmpi ne, %33, %c0_i32_15 : i32
    scf.if %34 {
      %35 = tpu.iota {dimensions = array<i32: 0>} : vector<32x1xi32>
      %c0_i32_16 = arith.constant 0 : i32
      %36 = vector.broadcast %c0_i32_16 : i32 to vector<32x1xi32>
      %37 = arith.addi %35, %36 : vector<32x1xi32>
      %38 = vector.broadcast %0 : i32 to vector<32x1xi32>
      %39 = arith.cmpi slt, %37, %38 : vector<32x1xi32>
      %40 = arith.extui %39 : vector<32x1xi1> to vector<32x1xi32>
      %41 = arith.sitofp %40 : vector<32x1xi32> to vector<32x1xf32>
      %c0_17 = arith.constant 0 : index
      %c0_18 = arith.constant 0 : index
      %c0_19 = arith.constant 0 : index
      %42 = vector.load %arg14[%c0_17, %c0_18, %c0_19] : memref<2x32x128xf32, #tpu.memory_space<vmem>>, vector<2x32x128xf32>
      %cst = arith.constant 0.000000e+00 : f32
      %43 = vector.broadcast %cst : f32 to vector<2x32x128xf32>
      %44 = arith.maximumf %42, %43 : vector<2x32x128xf32>
      %45 = vector.shape_cast %44 : vector<2x32x128xf32> to vector<64x128xf32>
      %46 = arith.truncf %45 : vector<64x128xf32> to vector<64x128xbf16>
      %c0_20 = arith.constant 0 : index
      %c0_21 = arith.constant 0 : index
      %47 = vector.load %arg7[%c0_20, %c0_21] : memref<128x128xbf16, #tpu.memory_space<vmem>>, vector<128x128xbf16>
      %cst_22 = arith.constant dense<0.000000e+00> : vector<64x128xf32>
      %48 = tpu.matmul %46, %47, %cst_22 {dimension_numbers = #tpu.dot_dimension_numbers<[1], [0], [0], [1], [0, 0, 1, 1], [], []>} : vector<64x128xbf16>, vector<128x128xbf16>, vector<64x128xf32> -> vector<64x128xf32>
      %c0_23 = arith.constant 0 : index
      %c0_24 = arith.constant 0 : index
      %49 = vector.load %arg8[%c0_23, %c0_24] : memref<1x128xf32, #tpu.memory_space<vmem>>, vector<1x128xf32>
      %50 = vector.broadcast %49 : vector<1x128xf32> to vector<64x128xf32>
      %51 = arith.addf %48, %50 : vector<64x128xf32>
      %cst_25 = arith.constant 0.000000e+00 : f32
      %52 = vector.broadcast %cst_25 : f32 to vector<64x128xf32>
      %53 = arith.maximumf %51, %52 : vector<64x128xf32>
      %54 = arith.truncf %53 : vector<64x128xf32> to vector<64x128xbf16>
      %c0_26 = arith.constant 0 : index
      %c0_27 = arith.constant 0 : index
      %55 = vector.load %arg9[%c0_26, %c0_27] : memref<128x128xbf16, #tpu.memory_space<vmem>>, vector<128x128xbf16>
      %cst_28 = arith.constant dense<0.000000e+00> : vector<64x128xf32>
      %56 = tpu.matmul %54, %55, %cst_28 {dimension_numbers = #tpu.dot_dimension_numbers<[1], [0], [0], [1], [0, 0, 1, 1], [], []>} : vector<64x128xbf16>, vector<128x128xbf16>, vector<64x128xf32> -> vector<64x128xf32>
      %c0_29 = arith.constant 0 : index
      %c0_30 = arith.constant 0 : index
      %57 = vector.load %arg10[%c0_29, %c0_30] : memref<1x128xf32, #tpu.memory_space<vmem>>, vector<1x128xf32>
      %58 = vector.broadcast %57 : vector<1x128xf32> to vector<64x128xf32>
      %59 = arith.addf %56, %58 : vector<64x128xf32>
      %60 = vector.shape_cast %59 : vector<64x128xf32> to vector<2x32x128xf32>
      %61 = vector.shape_cast %41 : vector<32x1xf32> to vector<1x32x1xf32>
      %62 = vector.broadcast %61 : vector<1x32x1xf32> to vector<2x32x128xf32>
      %63 = arith.mulf %60, %62 : vector<2x32x128xf32>
      %c0_31 = arith.constant 0 : index
      %c0_32 = arith.constant 0 : index
      %c0_33 = arith.constant 0 : index
      %64 = vector.load %arg11[%c0_31, %c0_32, %c0_33] : memref<2x32x128xf32, #tpu.memory_space<vmem>>, vector<2x32x128xf32>
      tpu.vector_store %arg11[%c0_31, %c0_32, %c0_33], %63 {strides = array<i32>} : memref<2x32x128xf32, #tpu.memory_space<vmem>>, vector<2x32x128xf32>,
    } else {
    }
    return
  }
  func.func @transform_0(%arg0: i32) -> i32 {
    %c0_i32 = arith.constant 0 : i32
    %c0_i32_0 = arith.constant 0 : i32
    return %c0_i32 : i32
  }
  func.func @transform_1(%arg0: i32) -> i32 {
    %c0_i32 = arith.constant 0 : i32
    %c0_i32_0 = arith.constant 0 : i32
    return %c0_i32 : i32
  }
  func.func @transform_2(%arg0: i32) -> (i32, i32, i32) {
    %c0_i32 = arith.constant 0 : i32
    %c0_i32_0 = arith.constant 0 : i32
    %c0_i32_1 = arith.constant 0 : i32
    %c0_i32_2 = arith.constant 0 : i32
    return %c0_i32, %c0_i32_0, %c0_i32_1 : i32, i32, i32
  }
  func.func @transform_3(%arg0: i32) -> (i32, i32, i32, i32) {
    %c0_i32 = arith.constant 0 : i32
    %c0_i32_0 = arith.constant 0 : i32
    %c0_i32_1 = arith.constant 0 : i32
    %c0_i32_2 = arith.constant 0 : i32
    return %arg0, %c0_i32, %c0_i32_0, %c0_i32_1 : i32, i32, i32, i32
  }
  func.func @transform_4(%arg0: i32) -> (i32, i32, i32) {
    %c0_i32 = arith.constant 0 : i32
    %c0_i32_0 = arith.constant 0 : i32
    %c0_i32_1 = arith.constant 0 : i32
    return %arg0, %c0_i32, %c0_i32_0 : i32, i32, i32
  }
  func.func @transform_5(%arg0: i32) -> (i32, i32, i32) {
    %c0_i32 = arith.constant 0 : i32
    %c0_i32_0 = arith.constant 0 : i32
    %c0_i32_1 = arith.constant 0 : i32
    return %arg0, %c0_i32, %c0_i32_0 : i32, i32, i32
  }
  func.func @transform_6(%arg0: i32) -> (i32, i32) {
    %c0_i32 = arith.constant 0 : i32
    %c0_i32_0 = arith.constant 0 : i32
    %c0_i32_1 = arith.constant 0 : i32
    return %c0_i32, %c0_i32_0 : i32, i32
  }
  func.func @transform_7(%arg0: i32) -> (i32, i32) {
    %c0_i32 = arith.constant 0 : i32
    %c0_i32_0 = arith.constant 0 : i32
    %c0_i32_1 = arith.constant 0 : i32
    return %c0_i32, %c0_i32_0 : i32, i32
  }
  func.func @transform_8(%arg0: i32) -> (i32, i32) {
    %c0_i32 = arith.constant 0 : i32
    %c0_i32_0 = arith.constant 0 : i32
    %c0_i32_1 = arith.constant 0 : i32
    return %c0_i32, %c0_i32_0 : i32, i32
  }
  func.func @transform_9(%arg0: i32) -> (i32, i32) {
    %c0_i32 = arith.constant 0 : i32
    %c0_i32_0 = arith.constant 0 : i32
    %c0_i32_1 = arith.constant 0 : i32
    return %c0_i32, %c0_i32_0 : i32, i32
  }
  func.func @transform_10(%arg0: i32) -> (i32, i32, i32) {
    %c0_i32 = arith.constant 0 : i32
    %c0_i32_0 = arith.constant 0 : i32
    %c0_i32_1 = arith.constant 0 : i32
    %c0_i32_2 = arith.constant 0 : i32
    return %c0_i32, %c0_i32_0, %c0_i32_1 : i32, i32, i32
  }
}

</mosaic_0001>

<llo_original>
// kernel: tpu_custom_call.1
$region0: #{tpu_custom_call.1}
  #allocation0 [shape = 'u32[]', space=smem, size = 0x4, offset = 0x4, fixed_abs, tag = 'smem constant byte address 0x4 - core index']
  #allocation1 [shape = 'u32[72,128]{1,0:T(1,128)}', space=vmem, size = 0x9000, scoped, tag = 'internal scratch']
  #allocation2 [shape = 'f32[2,288,128]{2,1,0:T(8,128)}', space=vmem, size = 0x48000, scoped, tag = 'scratch operand']
  #allocation3 [shape = 'f32[2,288,128]{2,1,0:T(8,128)}', space=vmem, size = 0x48000, scoped, tag = 'scratch operand']
  #allocation4 [shape = 'f32[2,32,128]{2,1,0:T(8,128)}', space=vmem, size = 0x8000, scoped, tag = 'scratch operand']
  #allocation5 [shape = 's32[1]{0:T(128)S(6)}', space=smem, size = 0x200, scoped, tag = 'scoped memory for tpu_custom_call.1']
  %s0 = inlined_call_operand.hbm [shape: s32[64], index: 0, kind: input, shape index: {}]
  %s1 = inlined_call_operand.<no memory space> [shape: s32[1], index: 1, kind: input, shape index: {}]
  %s2 = inlined_call_operand.hbm [shape: f32[2,32,128], index: 2, kind: input, shape index: {}]
  %s3 = inlined_call_operand.hbm [shape: bf16[64,3,128,256], index: 3, kind: input, shape index: {}]
  %s4 = inlined_call_operand.hbm [shape: f32[64,1,256], index: 4, kind: input, shape index: {}]
  %s5 = inlined_call_operand.hbm [shape: bf16[64,128,256], index: 5, kind: input, shape index: {}]
  %s6 = inlined_call_operand.hbm [shape: bf16[128,128], index: 6, kind: input, shape index: {}]
  %s7 = inlined_call_operand.hbm [shape: f32[1,128], index: 7, kind: input, shape index: {}]
  %s8 = inlined_call_operand.hbm [shape: bf16[128,128], index: 8, kind: input, shape index: {}]
  %s9 = inlined_call_operand.hbm [shape: f32[1,128], index: 9, kind: input, shape index: {}]
  %s10 = inlined_call_operand.hbm [shape: f32[2,32,128], index: 10, kind: output, shape index: {}]
  %s11 = sld [smem:[#allocation0]]
  $region125: #{tpu_custom_call.1} parent=0
    _
  %s13 = ssub.s32 1, %s11
  %s14 = scalar_select 0, %s13, %s11
  %15 = sst [smem:[#allocation5]] %s1
  $region1: #{tpu_custom_call.1} parent=0
    #allocation6 [shape = 'u8[512]{0}', space=smem, size = 0x200, scoped, tag = 'input window, operand 0, single buffered']
    #allocation7 [shape = 's32[2]{0}', space=sflag, size = 0x8, scoped, tag = 'scoped memory for tpu_custom_call.1']
    #allocation8 [shape = 's32[2]{0}', space=sflag, size = 0x8, scoped, tag = 'scoped memory for tpu_custom_call.1']
    #allocation9 [shape = 's32[2]{0}', space=sflag, size = 0x8, scoped, tag = 'scoped memory for tpu_custom_call.1']
    #allocation10 [shape = 'u8[32768]{0}', space=vmem, size = 0x8000, scoped, tag = 'input window, operand 2, single buffered']
    #allocation11 [shape = 'u8[393216]{0}', space=vmem, size = 0x60000, scoped, tag = 'input window, operand 3']
    #allocation12 [shape = 's32[2]{0}', space=sflag, size = 0x8, scoped, tag = 'scoped memory for tpu_custom_call.1']
    #allocation13 [shape = 'u8[2048]{0}', space=vmem, size = 0x800, scoped, tag = 'input window, operand 4']
    #allocation14 [shape = 'u8[131072]{0}', space=vmem, size = 0x20000, scoped, tag = 'input window, operand 5']
    #allocation15 [shape = 's32[2]{0}', space=sflag, size = 0x8, scoped, tag = 'scoped memory for tpu_custom_call.1']
    #allocation16 [shape = 'u8[32768]{0}', space=vmem, size = 0x8000, scoped, tag = 'input window, operand 6, single buffered']
    #allocation17 [shape = 'u8[512]{0}', space=vmem, size = 0x400, scoped, tag = 'input window, operand 7, single buffered']
    #allocation18 [shape = 's32[1]{0}', space=sflag, size = 0x4, scoped, tag = 'scoped memory for tpu_custom_call.1']
    #allocation19 [shape = 'u8[32768]{0}', space=vmem, size = 0x8000, scoped, tag = 'input window, operand 8, single buffered']
    #allocation20 [shape = 'u8[512]{0}', space=vmem, size = 0x400, scoped, tag = 'input window, operand 9, single buffered']
    #allocation21 [shape = 's32[1]{0}', space=sflag, size = 0x4, scoped, tag = 'scoped memory for tpu_custom_call.1']
    #allocation22 [shape = 'u8[32768]{0}', space=vmem, size = 0x8000, scoped, tag = 'output window, operand 0, single buffered']
    %16 = vsyncpa [#allocation9], 0
    %17 = vsyncpa [#allocation7], 0
    %18 = vsyncpa [#allocation12], 0
    %s19 = scalar_lea.sflag [#allocation12], 1
    %20 = vsyncpa %s19, 0
    %21 = vsyncpa [#allocation15], 0
    %s22 = scalar_lea.sflag [#allocation15], 1
    %23 = vsyncpa %s22, 0
    %24 = vsyncpa [#allocation18], 0
    %25 = vsyncpa [#allocation21], 0
    %26 = vsyncpa [#allocation8], 0
    loop: start=0, step=1, limit=66
    $region2: #{tpu_custom_call.1} parent=1 // loop_pre_header
      _
    $region3: #{tpu_custom_call.1} parent=1 // loop_header
      %s28 = sphi 0, %s32
      %p29 = scmp.ge.s32.totalorder %s28, 66
      %s36 = sphi 0, %s36
      %s38 = sphi 0, %s36
      %s39 = sphi 0, %s38
      %s53 = sphi 0, %s39
      %s57 = sphi 0, %s57
      %s59 = sphi 0, %s57
      %s60 = sphi 0, %s59
      %s74 = sphi 0, %s60
      %s78 = sphi 0, %s78
      %s80 = sphi 0, %s78
      %s81 = sphi 0, %s80
      %s95 = sphi 0, %s81
      %s101 = sphi 0, %s103
      %s104 = sphi 0, %s101
      %s105 = sphi 0, %s104
      %s121 = sphi 0, %s105
      %s127 = sphi 0, %s129
      %s130 = sphi 0, %s127
      %s131 = sphi 0, %s130
      %s147 = sphi 0, %s131
      %s153 = sphi 0, %s155
      %s156 = sphi 0, %s153
      %s157 = sphi 0, %s156
      %s173 = sphi 0, %s157
      %s177 = sphi 0, %s177
      %s179 = sphi 0, %s177
      %s180 = sphi 0, %s179
      %s194 = sphi 0, %s180
      %s198 = sphi 0, %s198
      %s200 = sphi 0, %s198
      %s201 = sphi 0, %s200
      %s215 = sphi 0, %s201
      %s219 = sphi 0, %s219
      %s221 = sphi 0, %s219
      %s222 = sphi 0, %s221
      %s236 = sphi 0, %s222
      %s240 = sphi 0, %s240
      %s242 = sphi 0, %s240
      %s243 = sphi 0, %s242
      %s257 = sphi 0, %s243
      %s261 = sphi 0, %s261
      %s263 = sphi 0, %s261
      %s264 = sphi 0, %s263
      %s278 = sphi 0, %s264
    $region4: #{tpu_custom_call.1} parent=1 // loop_header_branch
      %31 = sbr.rel (%p29) target = $region8
    $region5: #{tpu_custom_call.1} parent=1 // loop_body
      %s33 = ssub.s32 %s28, 1
      %s34 = ssub.s32 %s28, 2
      %s35 = sadd.s32 %s28, 1
      %s37 = sadd.s32 %s36, 1
      %p40 = scmp.eq.s32.totalorder %s28, 63
      %p41 = scmp.ne.s32.totalorder %s36, %s38
      %p42 = scmp.eq.s32.totalorder %s28, 0
      %p43 = por %p41, %p42
      %p44 = scmp.ne.s32.totalorder %s36, %s38
      %p45 = scmp.eq.s32.totalorder %s33, 63
      %p46 = por %p44, %p45
      %p47 = scmp.ne.s32.totalorder %s38, %s39
      %p48 = scmp.eq.s32.totalorder %s33, 0
      %p49 = por %p47, %p48
      %p50 = scmp.ne.s32.totalorder %s38, %s39
      %p51 = scmp.eq.s32.totalorder %s34, 63
      %p52 = por %p50, %p51
      %p54 = scmp.ne.s32.totalorder %s39, %s53
      %p55 = scmp.eq.s32.totalorder %s34, 0
      %p56 = por %p54, %p55
      %s58 = sadd.s32 %s57, 1
      %p61 = scmp.eq.s32.totalorder %s28, 63
      %p62 = scmp.ne.s32.totalorder %s57, %s59
      %p63 = scmp.eq.s32.totalorder %s28, 0
      %p64 = por %p62, %p63
      %p65 = scmp.ne.s32.totalorder %s57, %s59
      %p66 = scmp.eq.s32.totalorder %s33, 63
      %p67 = por %p65, %p66
      %p68 = scmp.ne.s32.totalorder %s59, %s60
      %p69 = scmp.eq.s32.totalorder %s33, 0
      %p70 = por %p68, %p69
      %p71 = scmp.ne.s32.totalorder %s59, %s60
      %p72 = scmp.eq.s32.totalorder %s34, 63
      %p73 = por %p71, %p72
      %p75 = scmp.ne.s32.totalorder %s60, %s74
      %p76 = scmp.eq.s32.totalorder %s34, 0
      %p77 = por %p75, %p76
      %s79 = sadd.s32 %s78, 1
      %p82 = scmp.eq.s32.totalorder %s28, 63
      %p83 = scmp.ne.s32.totalorder %s78, %s80
      %p84 = scmp.eq.s32.totalorder %s28, 0
      %p85 = por %p83, %p84
      %p86 = scmp.ne.s32.totalorder %s78, %s80
      %p87 = scmp.eq.s32.totalorder %s33, 63
      %p88 = por %p86, %p87
      %p89 = scmp.ne.s32.totalorder %s80, %s81
      %p90 = scmp.eq.s32.totalorder %s33, 0
      %p91 = por %p89, %p90
      %p92 = scmp.ne.s32.totalorder %s80, %s81
      %p93 = scmp.eq.s32.totalorder %s34, 63
      %p94 = por %p92, %p93
      %p96 = scmp.ne.s32.totalorder %s81, %s95
      %p97 = scmp.eq.s32.totalorder %s34, 0
      %p98 = por %p96, %p97
      %s99 = ssub.s32 %s28, %s35
      %p100 = scmp.eq.s32.totalorder %s99, 0
      %s102 = sadd.s32 %s101, 1
      %s103 = scalar_select %p100, %s101, %s102
      %p106 = pneg %p100
      %p107 = scmp.eq.s32.totalorder %s28, 63
      %p108 = por %p106, %p107
      %p109 = scmp.ne.s32.totalorder %s101, %s104
      %p110 = scmp.eq.s32.totalorder %s28, 0
      %p111 = por %p109, %p110
      %p112 = scmp.ne.s32.totalorder %s101, %s104
      %p113 = scmp.eq.s32.totalorder %s33, 63
      %p114 = por %p112, %p113
      %p115 = scmp.ne.s32.totalorder %s104, %s105
      %p116 = scmp.eq.s32.totalorder %s33, 0
      %p117 = por %p115, %p116
      %p118 = scmp.ne.s32.totalorder %s104, %s105
      %p119 = scmp.eq.s32.totalorder %s34, 63
      %p120 = por %p118, %p119
      %p122 = scmp.ne.s32.totalorder %s105, %s121
      %p123 = scmp.eq.s32.totalorder %s34, 0
      %p124 = por %p122, %p123
      %s125 = ssub.s32 %s28, %s35
      %p126 = scmp.eq.s32.totalorder %s125, 0
      %s128 = sadd.s32 %s127, 1
      %s129 = scalar_select %p126, %s127, %s128
      %p132 = pneg %p126
      %p133 = scmp.eq.s32.totalorder %s28, 63
      %p134 = por %p132, %p133
      %p135 = scmp.ne.s32.totalorder %s127, %s130
      %p136 = scmp.eq.s32.totalorder %s28, 0
      %p137 = por %p135, %p136
      %p138 = scmp.ne.s32.totalorder %s127, %s130
      %p139 = scmp.eq.s32.totalorder %s33, 63
      %p140 = por %p138, %p139
      %p141 = scmp.ne.s32.totalorder %s130, %s131
      %p142 = scmp.eq.s32.totalorder %s33, 0
      %p143 = por %p141, %p142
      %p144 = scmp.ne.s32.totalorder %s130, %s131
      %p145 = scmp.eq.s32.totalorder %s34, 63
      %p146 = por %p144, %p145
      %p148 = scmp.ne.s32.totalorder %s131, %s147
      %p149 = scmp.eq.s32.totalorder %s34, 0
      %p150 = por %p148, %p149
      %s151 = ssub.s32 %s28, %s35
      %p152 = scmp.eq.s32.totalorder %s151, 0
      %s154 = sadd.s32 %s153, 1
      %s155 = scalar_select %p152, %s153, %s154
      %p158 = pneg %p152
      %p159 = scmp.eq.s32.totalorder %s28, 63
      %p160 = por %p158, %p159
      %p161 = scmp.ne.s32.totalorder %s153, %s156
      %p162 = scmp.eq.s32.totalorder %s28, 0
      %p163 = por %p161, %p162
      %p164 = scmp.ne.s32.totalorder %s153, %s156
      %p165 = scmp.eq.s32.totalorder %s33, 63
      %p166 = por %p164, %p165
      %p167 = scmp.ne.s32.totalorder %s156, %s157
      %p168 = scmp.eq.s32.totalorder %s33, 0
      %p169 = por %p167, %p168
      %p170 = scmp.ne.s32.totalorder %s156, %s157
      %p171 = scmp.eq.s32.totalorder %s34, 63
      %p172 = por %p170, %p171
      %p174 = scmp.ne.s32.totalorder %s157, %s173
      %p175 = scmp.eq.s32.totalorder %s34, 0
      %p176 = por %p174, %p175
      %s178 = sadd.s32 %s177, 1
      %p181 = scmp.eq.s32.totalorder %s28, 63
      %p182 = scmp.ne.s32.totalorder %s177, %s179
      %p183 = scmp.eq.s32.totalorder %s28, 0
      %p184 = por %p182, %p183
      %p185 = scmp.ne.s32.totalorder %s177, %s179
      %p186 = scmp.eq.s32.totalorder %s33, 63
      %p187 = por %p185, %p186
      %p188 = scmp.ne.s32.totalorder %s179, %s180
      %p189 = scmp.eq.s32.totalorder %s33, 0
      %p190 = por %p188, %p189
      %p191 = scmp.ne.s32.totalorder %s179, %s180
      %p192 = scmp.eq.s32.totalorder %s34, 63
      %p193 = por %p191, %p192
      %p195 = scmp.ne.s32.totalorder %s180, %s194
      %p196 = scmp.eq.s32.totalorder %s34, 0
      %p197 = por %p195, %p196
      %s199 = sadd.s32 %s198, 1
      %p202 = scmp.eq.s32.totalorder %s28, 63
      %p203 = scmp.ne.s32.totalorder %s198, %s200
      %p204 = scmp.eq.s32.totalorder %s28, 0
      %p205 = por %p203, %p204
      %p206 = scmp.ne.s32.totalorder %s198, %s200
      %p207 = scmp.eq.s32.totalorder %s33, 63
      %p208 = por %p206, %p207
      %p209 = scmp.ne.s32.totalorder %s200, %s201
      %p210 = scmp.eq.s32.totalorder %s33, 0
      %p211 = por %p209, %p210
      %p212 = scmp.ne.s32.totalorder %s200, %s201
      %p213 = scmp.eq.s32.totalorder %s34, 63
      %p214 = por %p212, %p213
      %p216 = scmp.ne.s32.totalorder %s201, %s215
      %p217 = scmp.eq.s32.totalorder %s34, 0
      %p218 = por %p216, %p217
      %s220 = sadd.s32 %s219, 1
      %p223 = scmp.eq.s32.totalorder %s28, 63
      %p224 = scmp.ne.s32.totalorder %s219, %s221
      %p225 = scmp.eq.s32.totalorder %s28, 0
      %p226 = por %p224, %p225
      %p227 = scmp.ne.s32.totalorder %s219, %s221
      %p228 = scmp.eq.s32.totalorder %s33, 63
      %p229 = por %p227, %p228
      %p230 = scmp.ne.s32.totalorder %s221, %s222
      %p231 = scmp.eq.s32.totalorder %s33, 0
      %p232 = por %p230, %p231
      %p233 = scmp.ne.s32.totalorder %s221, %s222
      %p234 = scmp.eq.s32.totalorder %s34, 63
      %p235 = por %p233, %p234
      %p237 = scmp.ne.s32.totalorder %s222, %s236
      %p238 = scmp.eq.s32.totalorder %s34, 0
      %p239 = por %p237, %p238
      %s241 = sadd.s32 %s240, 1
      %p244 = scmp.eq.s32.totalorder %s28, 63
      %p245 = scmp.ne.s32.totalorder %s240, %s242
      %p246 = scmp.eq.s32.totalorder %s28, 0
      %p247 = por %p245, %p246
      %p248 = scmp.ne.s32.totalorder %s240, %s242
      %p249 = scmp.eq.s32.totalorder %s33, 63
      %p250 = por %p248, %p249
      %p251 = scmp.ne.s32.totalorder %s242, %s243
      %p252 = scmp.eq.s32.totalorder %s33, 0
      %p253 = por %p251, %p252
      %p254 = scmp.ne.s32.totalorder %s242, %s243
      %p255 = scmp.eq.s32.totalorder %s34, 63
      %p256 = por %p254, %p255
      %p258 = scmp.ne.s32.totalorder %s243, %s257
      %p259 = scmp.eq.s32.totalorder %s34, 0
      %p260 = por %p258, %p259
      %s262 = sadd.s32 %s261, 1
      %p265 = scmp.eq.s32.totalorder %s28, 63
      %p266 = scmp.ne.s32.totalorder %s261, %s263
      %p267 = scmp.eq.s32.totalorder %s28, 0
      %p268 = por %p266, %p267
      %p269 = scmp.ne.s32.totalorder %s261, %s263
      %p270 = scmp.eq.s32.totalorder %s33, 63
      %p271 = por %p269, %p270
      %p272 = scmp.ne.s32.totalorder %s263, %s264
      %p273 = scmp.eq.s32.totalorder %s33, 0
      %p274 = por %p272, %p273
      %p275 = scmp.ne.s32.totalorder %s263, %s264
      %p276 = scmp.eq.s32.totalorder %s34, 63
      %p277 = por %p275, %p276
      %p279 = scmp.ne.s32.totalorder %s264, %s278
      %p280 = scmp.eq.s32.totalorder %s34, 0
      %p281 = por %p279, %p280
      %p282 = scmp.le.s32.totalorder 1, %s28
      %p283 = scmp.lt.s32.totalorder %s28, 65
      %p284 = pnand %p282, %p283
      %p285 = pneg %p284
      // Predicated region
      $region9: #{tpu_custom_call.1} parent=5 // pred_check
        _
      $region10: #{tpu_custom_call.1} parent=5 // pred_check_branch
        %287 = sbr.rel (%p284) target = $region12
      $region11: #{tpu_custom_call.1} parent=5 // pred_region
        %s288 = ssub.s32 %s28, 1
        // Predicated region
        $region13: #{tpu_custom_call.1} parent=11 // pred_check
          %p289 = pneg %p49
        $region14: #{tpu_custom_call.1} parent=11 // pred_check_branch
          %291 = sbr.rel (%p289) target = $region16
        $region15: #{tpu_custom_call.1} parent=11 // pred_region
          %293 = vsyncadd [#allocation9], 0
          %s295 = sshll.u32 %s0, 4
          %s296 = int_to_ptr.hbm [resolvable:$true] %s295
          %298 = dma.hbm_to_smem %s296, 16, [#allocation6], [#allocation9]
        $region16: #{tpu_custom_call.1} parent=11 // pred_fallthru
          _
        // Predicated region
        $region17: #{tpu_custom_call.1} parent=11 // pred_check
          %p299 = pneg %p70
        $region18: #{tpu_custom_call.1} parent=11 // pred_check_branch
          %301 = sbr.rel (%p299) target = $region20
        $region19: #{tpu_custom_call.1} parent=11 // pred_region
          _
        $region20: #{tpu_custom_call.1} parent=11 // pred_fallthru
          _
        // Predicated region
        $region21: #{tpu_custom_call.1} parent=11 // pred_check
          %p302 = pneg %p91
        $region22: #{tpu_custom_call.1} parent=11 // pred_check_branch
          %304 = sbr.rel (%p302) target = $region24
        $region23: #{tpu_custom_call.1} parent=11 // pred_region
          %306 = vsyncadd [#allocation7], 0
          %s307 = sshll.u32 %s2, 4
          %s308 = int_to_ptr.hbm [resolvable:$true] %s307
          %s309 = sshll.u32 [#allocation10], 4
          %s310 = int_to_ptr.vmem [resolvable:$true] %s309
          %315 = dma.hbm_to_vmem [thread:$0]  %s308, 1024, %s310, [#allocation7], 128, 128, 8
        $region24: #{tpu_custom_call.1} parent=11 // pred_fallthru
          _
        // Predicated region
        $region25: #{tpu_custom_call.1} parent=11 // pred_check
          %p316 = pneg %p190
        $region26: #{tpu_custom_call.1} parent=11 // pred_check_branch
          %318 = sbr.rel (%p316) target = $region28
        $region27: #{tpu_custom_call.1} parent=11 // pred_region
          %320 = vsyncadd [#allocation15], 0
          %s321 = sshll.u32 %s6, 4
          %s322 = int_to_ptr.hbm [resolvable:$true] %s321
          %s323 = sshll.u32 [#allocation16], 4
          %s324 = int_to_ptr.vmem [resolvable:$true] %s323
          %329 = dma.hbm_to_vmem [thread:$0]  %s322, 1024, %s324, [#allocation15], 64, 64, 4
        $region28: #{tpu_custom_call.1} parent=11 // pred_fallthru
          _
        // Predicated region
        $region29: #{tpu_custom_call.1} parent=11 // pred_check
          %p330 = pneg %p211
        $region30: #{tpu_custom_call.1} parent=11 // pred_check_branch
          %332 = sbr.rel (%p330) target = $region32
        $region31: #{tpu_custom_call.1} parent=11 // pred_region
          %334 = vsyncadd [#allocation18], 0
          %s336 = sshll.u32 %s7, 4
          %s337 = int_to_ptr.hbm [resolvable:$true] %s336
          %s338 = sshll.u32 [#allocation17], 4
          %s339 = int_to_ptr.vmem [resolvable:$true] %s338
          %341 = dma.hbm_to_vmem [thread:$0]  %s337, 16, %s339, [#allocation18]
        $region32: #{tpu_custom_call.1} parent=11 // pred_fallthru
          _
        // Predicated region
        $region33: #{tpu_custom_call.1} parent=11 // pred_check
          %p342 = pneg %p232
        $region34: #{tpu_custom_call.1} parent=11 // pred_check_branch
          %344 = sbr.rel (%p342) target = $region36
        $region35: #{tpu_custom_call.1} parent=11 // pred_region
          %346 = vsyncadd [#allocation18], 0
          %s347 = sshll.u32 %s8, 4
          %s348 = int_to_ptr.hbm [resolvable:$true] %s347
          %s349 = sshll.u32 [#allocation19], 4
          %s350 = int_to_ptr.vmem [resolvable:$true] %s349
          %355 = dma.hbm_to_vmem [thread:$0]  %s348, 1024, %s350, [#allocation18], 64, 64, 4
        $region36: #{tpu_custom_call.1} parent=11 // pred_fallthru
          _
        // Predicated region
        $region37: #{tpu_custom_call.1} parent=11 // pred_check
          %p356 = pneg %p253
        $region38: #{tpu_custom_call.1} parent=11 // pred_check_branch
          %358 = sbr.rel (%p356) target = $region40
        $region39: #{tpu_custom_call.1} parent=11 // pred_region
          %360 = vsyncadd [#allocation21], 0
          %s362 = sshll.u32 %s9, 4
          %s363 = int_to_ptr.hbm [resolvable:$true] %s362
          %s364 = sshll.u32 [#allocation20], 4
          %s365 = int_to_ptr.vmem [resolvable:$true] %s364
          %367 = dma.hbm_to_vmem [thread:$0]  %s363, 16, %s365, [#allocation21]
        $region40: #{tpu_custom_call.1} parent=11 // pred_fallthru
          _
      $region12: #{tpu_custom_call.1} parent=5 // pred_fallthru
        _
      %p368 = scmp.lt.s32.totalorder %s28, 64
      // Predicated region
      $region41: #{tpu_custom_call.1} parent=5 // pred_check
        %p369 = pneg %p368
      $region42: #{tpu_custom_call.1} parent=5 // pred_check_branch
        %371 = sbr.rel (%p369) target = $region44
      $region43: #{tpu_custom_call.1} parent=5 // pred_region
        // Predicated region
        $region45: #{tpu_custom_call.1} parent=43 // pred_check
          %p372 = pneg %p111
        $region46: #{tpu_custom_call.1} parent=43 // pred_check_branch
          %374 = sbr.rel (%p372) target = $region48
        $region47: #{tpu_custom_call.1} parent=43 // pred_region
          %s375 = sand.u32 %s28, 1
          %s376 = scalar_lea.sflag [#allocation12], %s375
          %s377 = sand.u32 %s101, 1
          %s378 = smul.addr %s377, 384
          %s379 = scalar_lea.vmem [#allocation11], %s378
          %381 = vsyncadd %s376, 0
          %s382 = smul.addr %s28, 96
          %s383 = smul.addr %s382, 4
          %s384 = scalar_lea.hbm %s3, %s383
          %s385 = sshll.u32 %s384, 4
          %s386 = int_to_ptr.hbm [resolvable:$true] %s385
          %s387 = sshll.u32 %s379, 4
          %s388 = int_to_ptr.vmem [resolvable:$true] %s387
          %393 = dma.hbm_to_vmem [thread:$0]  %s386, 6144, %s388, %s376, 128, 128, 8
        $region48: #{tpu_custom_call.1} parent=43 // pred_fallthru
          _
        // Predicated region
        $region49: #{tpu_custom_call.1} parent=43 // pred_check
          %p394 = pneg %p137
        $region50: #{tpu_custom_call.1} parent=43 // pred_check_branch
          %396 = sbr.rel (%p394) target = $region52
        $region51: #{tpu_custom_call.1} parent=43 // pred_region
          %s397 = sand.u32 %s28, 1
          %s398 = scalar_lea.sflag [#allocation12], %s397
          %s399 = sand.u32 %s127, 1
          %s400 = smul.addr %s399, 2
          %s401 = scalar_lea.vmem [#allocation13], %s400
          %403 = vsyncadd %s398, 0
          %s404 = smul.addr %s28, 2
          %s405 = scalar_lea.hbm %s4, %s404
          %s407 = sshll.u32 %s405, 4
          %s408 = int_to_ptr.hbm [resolvable:$true] %s407
          %s409 = sshll.u32 %s401, 4
          %s410 = int_to_ptr.vmem [resolvable:$true] %s409
          %412 = dma.hbm_to_vmem [thread:$0]  %s408, 32, %s410, %s398
        $region52: #{tpu_custom_call.1} parent=43 // pred_fallthru
          _
        // Predicated region
        $region53: #{tpu_custom_call.1} parent=43 // pred_check
          %p413 = pneg %p163
        $region54: #{tpu_custom_call.1} parent=43 // pred_check_branch
          %415 = sbr.rel (%p413) target = $region56
        $region55: #{tpu_custom_call.1} parent=43 // pred_region
          %s416 = sand.u32 %s28, 1
          %s417 = scalar_lea.sflag [#allocation15], %s416
          %s418 = sand.u32 %s153, 1
          %s419 = smul.addr %s418, 128
          %s420 = scalar_lea.vmem [#allocation14], %s419
          %422 = vsyncadd %s417, 0
          %s423 = smul.addr %s28, 32
          %s424 = smul.addr %s423, 4
          %s425 = scalar_lea.hbm %s5, %s424
          %s426 = sshll.u32 %s425, 4
          %s427 = int_to_ptr.hbm [resolvable:$true] %s426
          %s428 = sshll.u32 %s420, 4
          %s429 = int_to_ptr.vmem [resolvable:$true] %s428
          %434 = dma.hbm_to_vmem [thread:$0]  %s427, 2048, %s429, %s417, 128, 128, 8
        $region56: #{tpu_custom_call.1} parent=43 // pred_fallthru
          _
      $region44: #{tpu_custom_call.1} parent=5 // pred_fallthru
        _
      %p435 = scmp.le.s32.totalorder 1, %s28
      %p436 = scmp.lt.s32.totalorder %s28, 65
      %p437 = pnand %p435, %p436
      %p438 = pneg %p437
      // Predicated region
      $region57: #{tpu_custom_call.1} parent=5 // pred_check
        _
      $region58: #{tpu_custom_call.1} parent=5 // pred_check_branch
        %440 = sbr.rel (%p437) target = $region60
      $region59: #{tpu_custom_call.1} parent=5 // pred_region
        %s441 = ssub.s32 %s28, 1
        // Predicated region
        $region61: #{tpu_custom_call.1} parent=59 // pred_check
          %p442 = pneg %p49
        $region62: #{tpu_custom_call.1} parent=59 // pred_check_branch
          %444 = sbr.rel (%p442) target = $region64
        $region63: #{tpu_custom_call.1} parent=59 // pred_region
          %446 = dma.done [#allocation9], 16
        $region64: #{tpu_custom_call.1} parent=59 // pred_fallthru
          _
        // Predicated region
        $region65: #{tpu_custom_call.1} parent=59 // pred_check
          %p447 = pneg %p91
        $region66: #{tpu_custom_call.1} parent=59 // pred_check_branch
          %449 = sbr.rel (%p447) target = $region68
        $region67: #{tpu_custom_call.1} parent=59 // pred_region
          %451 = dma.done [#allocation7], 1024
        $region68: #{tpu_custom_call.1} parent=59 // pred_fallthru
          _
        %s452 = sand.u32 %s33, 1
        %s453 = scalar_lea.sflag [#allocation12], %s452
        %s454 = sand.u32 %s104, 1
        %s455 = smul.addr %s454, 384
        %s456 = scalar_lea.vmem [#allocation11], %s455
        // Predicated region
        $region69: #{tpu_custom_call.1} parent=59 // pred_check
          %p457 = pneg %p117
        $region70: #{tpu_custom_call.1} parent=59 // pred_check_branch
          %459 = sbr.rel (%p457) target = $region72
        $region71: #{tpu_custom_call.1} parent=59 // pred_region
          %461 = dma.done %s453, 6144
        $region72: #{tpu_custom_call.1} parent=59 // pred_fallthru
          _
        %s462 = sand.u32 %s33, 1
        %s463 = scalar_lea.sflag [#allocation12], %s462
        %s464 = sand.u32 %s130, 1
        %s465 = smul.addr %s464, 2
        %s466 = scalar_lea.vmem [#allocation13], %s465
        // Predicated region
        $region73: #{tpu_custom_call.1} parent=59 // pred_check
          %p467 = pneg %p143
        $region74: #{tpu_custom_call.1} parent=59 // pred_check_branch
          %469 = sbr.rel (%p467) target = $region76
        $region75: #{tpu_custom_call.1} parent=59 // pred_region
          %471 = dma.done %s463, 32
        $region76: #{tpu_custom_call.1} parent=59 // pred_fallthru
          _
        %s472 = sand.u32 %s33, 1
        %s473 = scalar_lea.sflag [#allocation15], %s472
        %s474 = sand.u32 %s156, 1
        %s475 = smul.addr %s474, 128
        %s476 = scalar_lea.vmem [#allocation14], %s475
        // Predicated region
        $region77: #{tpu_custom_call.1} parent=59 // pred_check
          %p477 = pneg %p169
        $region78: #{tpu_custom_call.1} parent=59 // pred_check_branch
          %479 = sbr.rel (%p477) target = $region80
        $region79: #{tpu_custom_call.1} parent=59 // pred_region
          %481 = dma.done %s473, 2048
        $region80: #{tpu_custom_call.1} parent=59 // pred_fallthru
          _
        // Predicated region
        $region81: #{tpu_custom_call.1} parent=59 // pred_check
          %p482 = pneg %p190
        $region82: #{tpu_custom_call.1} parent=59 // pred_check_branch
          %484 = sbr.rel (%p482) target = $region84
        $region83: #{tpu_custom_call.1} parent=59 // pred_region
          %486 = dma.done [#allocation15], 1024
        $region84: #{tpu_custom_call.1} parent=59 // pred_fallthru
          _
        // Predicated region
        $region85: #{tpu_custom_call.1} parent=59 // pred_check
          %p487 = pneg %p211
        $region86: #{tpu_custom_call.1} parent=59 // pred_check_branch
          %489 = sbr.rel (%p487) target = $region88
        $region87: #{tpu_custom_call.1} parent=59 // pred_region
          %491 = dma.done [#allocation18], 16
        $region88: #{tpu_custom_call.1} parent=59 // pred_fallthru
          _
        // Predicated region
        $region89: #{tpu_custom_call.1} parent=59 // pred_check
          %p492 = pneg %p232
        $region90: #{tpu_custom_call.1} parent=59 // pred_check_branch
          %494 = sbr.rel (%p492) target = $region92
        $region91: #{tpu_custom_call.1} parent=59 // pred_region
          %496 = dma.done [#allocation18], 1024
        $region92: #{tpu_custom_call.1} parent=59 // pred_fallthru
          _
        // Predicated region
        $region93: #{tpu_custom_call.1} parent=59 // pred_check
          %p497 = pneg %p253
        $region94: #{tpu_custom_call.1} parent=59 // pred_check_branch
          %499 = sbr.rel (%p497) target = $region96
        $region95: #{tpu_custom_call.1} parent=59 // pred_region
          %501 = dma.done [#allocation21], 16
        $region96: #{tpu_custom_call.1} parent=59 // pred_fallthru
          _
        %502 = sfence
        %p503 = pneg %p49
        %p504 = pneg %p46
        %p505 = pneg %p70
        %p506 = pneg %p67
        %p507 = pneg %p91
        %p508 = pneg %p88
        %s509 = sand.u32 %s33, 1
        %s510 = scalar_lea.sflag [#allocation12], %s509
        %s511 = sand.u32 %s104, 1
        %s512 = smul.addr %s511, 384
        %s513 = scalar_lea.vmem [#allocation11], %s512
        %p514 = pneg %p117
        %p515 = pneg %p114
        %s516 = sand.u32 %s33, 1
        %s517 = scalar_lea.sflag [#allocation12], %s516
        %s518 = sand.u32 %s130, 1
        %s519 = smul.addr %s518, 2
        %s520 = scalar_lea.vmem [#allocation13], %s519
        %p521 = pneg %p143
        %p522 = pneg %p140
        %s523 = sand.u32 %s33, 1
        %s524 = scalar_lea.sflag [#allocation15], %s523
        %s525 = sand.u32 %s156, 1
        %s526 = smul.addr %s525, 128
        %s527 = scalar_lea.vmem [#allocation14], %s526
        %p528 = pneg %p169
        %p529 = pneg %p166
        %p530 = pneg %p190
        %p531 = pneg %p187
        %p532 = pneg %p211
        %p533 = pneg %p208
        %p534 = pneg %p232
        %p535 = pneg %p229
        %p536 = pneg %p253
        %p537 = pneg %p250
        %p538 = pneg %p274
        %p539 = pneg %p271
        %s540 = sld [smem:[#allocation5]]
        %p541 = scmp.eq.s32.totalorder %s33, 0
        // Predicated region
        $region97: #{tpu_custom_call.1} parent=59 // pred_check
          %p542 = pneg %p541
        $region98: #{tpu_custom_call.1} parent=59 // pred_check_branch
          %544 = sbr.rel (%p542) target = $region100
        $region99: #{tpu_custom_call.1} parent=59 // pred_region
          %v545 = vlaneseq
          %v546 = vshrl.u32 %v545, 7
          %v547 = vadd.s32 %v546, 8
          %v548 = vadd.s32 %v546, 16
          %v549 = vadd.s32 %v546, 24
          %v550 = vstv %s540
          %vm551 = vcmp.lt.s32.totalorder %v546, %v550
          %vm552 = vcmp.lt.s32.totalorder %v547, %v550
          %vm553 = vcmp.lt.s32.totalorder %v548, %v550
          %vm554 = vcmp.lt.s32.totalorder %v549, %v550
          %v555 = vsel %vm551, 1, 0
          %v556 = vsel %vm552, 1, 0
          %v557 = vsel %vm553, 1, 0
          %v558 = vsel %vm554, 1, 0
          %v559 = vcvt.s32.f32 %v555
          %v560 = vcvt.s32.f32 %v556
          %v561 = vcvt.s32.f32 %v557
          %v562 = vcvt.s32.f32 %v558
          %v563 = vld [vmem:[#allocation10] sm:$0xff]
          %v564 = vld [vmem:[#allocation10 + $0x8] sm:$0xff]
          %v565 = vld [vmem:[#allocation10 + $0x10] sm:$0xff]
          %v566 = vld [vmem:[#allocation10 + $0x18] sm:$0xff]
          %v567 = vld [vmem:[#allocation10 + $0x20] sm:$0xff]
          %v568 = vld [vmem:[#allocation10 + $0x28] sm:$0xff]
          %v569 = vld [vmem:[#allocation10 + $0x30] sm:$0xff]
          %v570 = vld [vmem:[#allocation10 + $0x38] sm:$0xff]
          %v571 = vmul.f32 %v563, %v559
          %v572 = vmul.f32 %v564, %v560
          %v573 = vmul.f32 %v565, %v561
          %v574 = vmul.f32 %v566, %v562
          %v575 = vmul.f32 %v567, %v559
          %v576 = vmul.f32 %v568, %v560
          %v577 = vmul.f32 %v569, %v561
          %v578 = vmul.f32 %v570, %v562
          %579 = vst [vmem:[#allocation2] sm:$0xff] 0.0
          %580 = vst [vmem:[#allocation2 + $0x8] sm:$0xff] 0.0
          %581 = vst [vmem:[#allocation2 + $0x10] sm:$0xff] 0.0
          %582 = vst [vmem:[#allocation2 + $0x18] sm:$0xff] 0.0
          %583 = vst [vmem:[#allocation2 + $0x20] sm:$0xff] 0.0
          %584 = vst [vmem:[#allocation2 + $0x28] sm:$0xff] 0.0
          %585 = vst [vmem:[#allocation2 + $0x30] sm:$0xff] 0.0
          %586 = vst [vmem:[#allocation2 + $0x38] sm:$0xff] 0.0
          %587 = vst [vmem:[#allocation2 + $0x40] sm:$0xff] 0.0
          %588 = vst [vmem:[#allocation2 + $0x48] sm:$0xff] 0.0
          %589 = vst [vmem:[#allocation2 + $0x50] sm:$0xff] 0.0
          %590 = vst [vmem:[#allocation2 + $0x58] sm:$0xff] 0.0
          %591 = vst [vmem:[#allocation2 + $0x60] sm:$0xff] 0.0
          %592 = vst [vmem:[#allocation2 + $0x68] sm:$0xff] 0.0
          %593 = vst [vmem:[#allocation2 + $0x70] sm:$0xff] 0.0
          %594 = vst [vmem:[#allocation2 + $0x78] sm:$0xff] 0.0
          %595 = vst [vmem:[#allocation2 + $0x120] sm:$0xff] 0.0
          %596 = vst [vmem:[#allocation2 + $0x128] sm:$0xff] 0.0
          %597 = vst [vmem:[#allocation2 + $0x130] sm:$0xff] 0.0
          %598 = vst [vmem:[#allocation2 + $0x138] sm:$0xff] 0.0
          %599 = vst [vmem:[#allocation2 + $0x140] sm:$0xff] 0.0
          %600 = vst [vmem:[#allocation2 + $0x148] sm:$0xff] 0.0
          %601 = vst [vmem:[#allocation2 + $0x150] sm:$0xff] 0.0
          %602 = vst [vmem:[#allocation2 + $0x158] sm:$0xff] 0.0
          %603 = vst [vmem:[#allocation2 + $0x160] sm:$0xff] 0.0
          %604 = vst [vmem:[#allocation2 + $0x168] sm:$0xff] 0.0
          %605 = vst [vmem:[#allocation2 + $0x170] sm:$0xff] 0.0
          %606 = vst [vmem:[#allocation2 + $0x178] sm:$0xff] 0.0
          %607 = vst [vmem:[#allocation2 + $0x180] sm:$0xff] 0.0
          %608 = vst [vmem:[#allocation2 + $0x188] sm:$0xff] 0.0
          %609 = vst [vmem:[#allocation2 + $0x190] sm:$0xff] 0.0
          %610 = vst [vmem:[#allocation2 + $0x198] sm:$0xff] 0.0
          %611 = vst [vmem:[#allocation2 + $0xa0] sm:$0xff] 0.0
          %612 = vst [vmem:[#allocation2 + $0xa8] sm:$0xff] 0.0
          %613 = vst [vmem:[#allocation2 + $0xb0] sm:$0xff] 0.0
          %614 = vst [vmem:[#allocation2 + $0xb8] sm:$0xff] 0.0
          %615 = vst [vmem:[#allocation2 + $0xc0] sm:$0xff] 0.0
          %616 = vst [vmem:[#allocation2 + $0xc8] sm:$0xff] 0.0
          %617 = vst [vmem:[#allocation2 + $0xd0] sm:$0xff] 0.0
          %618 = vst [vmem:[#allocation2 + $0xd8] sm:$0xff] 0.0
          %619 = vst [vmem:[#allocation2 + $0xe0] sm:$0xff] 0.0
          %620 = vst [vmem:[#allocation2 + $0xe8] sm:$0xff] 0.0
          %621 = vst [vmem:[#allocation2 + $0xf0] sm:$0xff] 0.0
          %622 = vst [vmem:[#allocation2 + $0xf8] sm:$0xff] 0.0
          %623 = vst [vmem:[#allocation2 + $0x100] sm:$0xff] 0.0
          %624 = vst [vmem:[#allocation2 + $0x108] sm:$0xff] 0.0
          %625 = vst [vmem:[#allocation2 + $0x110] sm:$0xff] 0.0
          %626 = vst [vmem:[#allocation2 + $0x118] sm:$0xff] 0.0
          %627 = vst [vmem:[#allocation2 + $0x1c0] sm:$0xff] 0.0
          %628 = vst [vmem:[#allocation2 + $0x1c8] sm:$0xff] 0.0
          %629 = vst [vmem:[#allocation2 + $0x1d0] sm:$0xff] 0.0
          %630 = vst [vmem:[#allocation2 + $0x1d8] sm:$0xff] 0.0
          %631 = vst [vmem:[#allocation2 + $0x1e0] sm:$0xff] 0.0
          %632 = vst [vmem:[#allocation2 + $0x1e8] sm:$0xff] 0.0
          %633 = vst [vmem:[#allocation2 + $0x1f0] sm:$0xff] 0.0
          %634 = vst [vmem:[#allocation2 + $0x1f8] sm:$0xff] 0.0
          %635 = vst [vmem:[#allocation2 + $0x200] sm:$0xff] 0.0
          %636 = vst [vmem:[#allocation2 + $0x208] sm:$0xff] 0.0
          %637 = vst [vmem:[#allocation2 + $0x210] sm:$0xff] 0.0
          %638 = vst [vmem:[#allocation2 + $0x218] sm:$0xff] 0.0
          %639 = vst [vmem:[#allocation2 + $0x220] sm:$0xff] 0.0
          %640 = vst [vmem:[#allocation2 + $0x228] sm:$0xff] 0.0
          %641 = vst [vmem:[#allocation2 + $0x230] sm:$0xff] 0.0
          %642 = vst [vmem:[#allocation2 + $0x238] sm:$0xff] 0.0
          %643 = vst [vmem:[#allocation3] sm:$0xff] 0.0
          %644 = vst [vmem:[#allocation3 + $0x8] sm:$0xff] 0.0
          %645 = vst [vmem:[#allocation3 + $0x10] sm:$0xff] 0.0
          %646 = vst [vmem:[#allocation3 + $0x18] sm:$0xff] 0.0
          %647 = vst [vmem:[#allocation3 + $0x20] sm:$0xff] 0.0
          %648 = vst [vmem:[#allocation3 + $0x28] sm:$0xff] 0.0
          %649 = vst [vmem:[#allocation3 + $0x30] sm:$0xff] 0.0
          %650 = vst [vmem:[#allocation3 + $0x38] sm:$0xff] 0.0
          %651 = vst [vmem:[#allocation3 + $0x40] sm:$0xff] 0.0
          %652 = vst [vmem:[#allocation3 + $0x48] sm:$0xff] 0.0
          %653 = vst [vmem:[#allocation3 + $0x50] sm:$0xff] 0.0
          %654 = vst [vmem:[#allocation3 + $0x58] sm:$0xff] 0.0
          %655 = vst [vmem:[#allocation3 + $0x60] sm:$0xff] 0.0
          %656 = vst [vmem:[#allocation3 + $0x68] sm:$0xff] 0.0
          %657 = vst [vmem:[#allocation3 + $0x70] sm:$0xff] 0.0
          %658 = vst [vmem:[#allocation3 + $0x78] sm:$0xff] 0.0
          %659 = vst [vmem:[#allocation3 + $0x120] sm:$0xff] 0.0
          %660 = vst [vmem:[#allocation3 + $0x128] sm:$0xff] 0.0
          %661 = vst [vmem:[#allocation3 + $0x130] sm:$0xff] 0.0
          %662 = vst [vmem:[#allocation3 + $0x138] sm:$0xff] 0.0
          %663 = vst [vmem:[#allocation3 + $0x140] sm:$0xff] 0.0
          %664 = vst [vmem:[#allocation3 + $0x148] sm:$0xff] 0.0
          %665 = vst [vmem:[#allocation3 + $0x150] sm:$0xff] 0.0
          %666 = vst [vmem:[#allocation3 + $0x158] sm:$0xff] 0.0
          %667 = vst [vmem:[#allocation3 + $0x160] sm:$0xff] 0.0
          %668 = vst [vmem:[#allocation3 + $0x168] sm:$0xff] 0.0
          %669 = vst [vmem:[#allocation3 + $0x170] sm:$0xff] 0.0
          %670 = vst [vmem:[#allocation3 + $0x178] sm:$0xff] 0.0
          %671 = vst [vmem:[#allocation3 + $0x180] sm:$0xff] 0.0
          %672 = vst [vmem:[#allocation3 + $0x188] sm:$0xff] 0.0
          %673 = vst [vmem:[#allocation3 + $0x190] sm:$0xff] 0.0
          %674 = vst [vmem:[#allocation3 + $0x198] sm:$0xff] 0.0
          %675 = vst [vmem:[#allocation3 + $0xa0] sm:$0xff] 0.0
          %676 = vst [vmem:[#allocation3 + $0xa8] sm:$0xff] 0.0
          %677 = vst [vmem:[#allocation3 + $0xb0] sm:$0xff] 0.0
          %678 = vst [vmem:[#allocation3 + $0xb8] sm:$0xff] 0.0
          %679 = vst [vmem:[#allocation3 + $0xc0] sm:$0xff] 0.0
          %680 = vst [vmem:[#allocation3 + $0xc8] sm:$0xff] 0.0
          %681 = vst [vmem:[#allocation3 + $0xd0] sm:$0xff] 0.0
          %682 = vst [vmem:[#allocation3 + $0xd8] sm:$0xff] 0.0
          %683 = vst [vmem:[#allocation3 + $0xe0] sm:$0xff] 0.0
          %684 = vst [vmem:[#allocation3 + $0xe8] sm:$0xff] 0.0
          %685 = vst [vmem:[#allocation3 + $0xf0] sm:$0xff] 0.0
          %686 = vst [vmem:[#allocation3 + $0xf8] sm:$0xff] 0.0
          %687 = vst [vmem:[#allocation3 + $0x100] sm:$0xff] 0.0
          %688 = vst [vmem:[#allocation3 + $0x108] sm:$0xff] 0.0
          %689 = vst [vmem:[#allocation3 + $0x110] sm:$0xff] 0.0
          %690 = vst [vmem:[#allocation3 + $0x118] sm:$0xff] 0.0
          %691 = vst [vmem:[#allocation3 + $0x1c0] sm:$0xff] 0.0
          %692 = vst [vmem:[#allocation3 + $0x1c8] sm:$0xff] 0.0
          %693 = vst [vmem:[#allocation3 + $0x1d0] sm:$0xff] 0.0
          %694 = vst [vmem:[#allocation3 + $0x1d8] sm:$0xff] 0.0
          %695 = vst [vmem:[#allocation3 + $0x1e0] sm:$0xff] 0.0
          %696 = vst [vmem:[#allocation3 + $0x1e8] sm:$0xff] 0.0
          %697 = vst [vmem:[#allocation3 + $0x1f0] sm:$0xff] 0.0
          %698 = vst [vmem:[#allocation3 + $0x1f8] sm:$0xff] 0.0
          %699 = vst [vmem:[#allocation3 + $0x200] sm:$0xff] 0.0
          %700 = vst [vmem:[#allocation3 + $0x208] sm:$0xff] 0.0
          %701 = vst [vmem:[#allocation3 + $0x210] sm:$0xff] 0.0
          %702 = vst [vmem:[#allocation3 + $0x218] sm:$0xff] 0.0
          %703 = vst [vmem:[#allocation3 + $0x220] sm:$0xff] 0.0
          %704 = vst [vmem:[#allocation3 + $0x228] sm:$0xff] 0.0
          %705 = vst [vmem:[#allocation3 + $0x230] sm:$0xff] 0.0
          %706 = vst [vmem:[#allocation3 + $0x238] sm:$0xff] 0.0
          %707 = vst [vmem:[#allocation2 + $0x80] sm:$0xff] %v571
          %708 = vst [vmem:[#allocation2 + $0x88] sm:$0xff] %v572
          %709 = vst [vmem:[#allocation2 + $0x90] sm:$0xff] %v573
          %710 = vst [vmem:[#allocation2 + $0x98] sm:$0xff] %v574
          %711 = vst [vmem:[#allocation2 + $0x1a0] sm:$0xff] %v575
          %712 = vst [vmem:[#allocation2 + $0x1a8] sm:$0xff] %v576
          %713 = vst [vmem:[#allocation2 + $0x1b0] sm:$0xff] %v577
          %714 = vst [vmem:[#allocation2 + $0x1b8] sm:$0xff] %v578
          %715 = vst [vmem:[#allocation4] sm:$0xff] 0.0
          %716 = vst [vmem:[#allocation4 + $0x8] sm:$0xff] 0.0
          %717 = vst [vmem:[#allocation4 + $0x10] sm:$0xff] 0.0
          %718 = vst [vmem:[#allocation4 + $0x18] sm:$0xff] 0.0
          %719 = vst [vmem:[#allocation4 + $0x20] sm:$0xff] 0.0
          %720 = vst [vmem:[#allocation4 + $0x28] sm:$0xff] 0.0
          %721 = vst [vmem:[#allocation4 + $0x30] sm:$0xff] 0.0
          %722 = vst [vmem:[#allocation4 + $0x38] sm:$0xff] 0.0
        $region100: #{tpu_custom_call.1} parent=59 // pred_fallthru
          _
        %s723 = sld [smem:[#allocation6 + %s33]]
        %p724 = scmp.lt.s32.totalorder %s33, 0
        %s725 = ssub.s32 0, %s33
        %s726 = scalar_select %p724, %s725, %s33
        %s727 = sand.u32 %s726, 1
        %s728 = ssub.s32 0, %s727
        %s729 = scalar_select %p724, %s728, %s727
        %p730 = scmp.ne.s32.totalorder %s729, 0
        %p731 = scmp.lt.s32.totalorder %s729, 0
        %p732 = pnand %p731, %p730
        %p733 = pneg %p732
        %s734 = sadd.s32 %s729, 2
        %s735 = scalar_select %p733, %s734, %s729
        %p736 = scmp.eq.s32.totalorder %s735, 0
        // Predicated region
        $region101: #{tpu_custom_call.1} parent=59 // pred_check
          %p737 = pneg %p736
        $region102: #{tpu_custom_call.1} parent=59 // pred_check_branch
          %739 = sbr.rel (%p737) target = $region104
        $region103: #{tpu_custom_call.1} parent=59 // pred_region
          %s740 = ssub.s32 128, %s723
          %s741 = scalar_lea.vmem [#allocation2], %s740
          %v742 = vld [vmem:[%s741] sm:$0xff]
          %v743 = vld [vmem:[%s741 + $0x8] sm:$0xff]
          %v744 = vld [vmem:[%s741 + $0x10] sm:$0xff]
          %v745 = vld [vmem:[%s741 + $0x18] sm:$0xff]
          %v746 = vld [vmem:[%s741 + $0x120] sm:$0xff]
          %v747 = vld [vmem:[%s741 + $0x128] sm:$0xff]
          %v748 = vld [vmem:[%s741 + $0x130] sm:$0xff]
          %v749 = vld [vmem:[%s741 + $0x138] sm:$0xff]
          %v750 = vpack.c.bf16 %v743, %v742
          %v751 = vpack.c.bf16 %v745, %v744
          %v752 = vpack.c.bf16 %v747, %v746
          %v753 = vpack.c.bf16 %v749, %v748
          %v754 = vld [vmem:[%s456] sm:$0xff]
          %v755 = vld [vmem:[%s456 + $0x8] sm:$0xff]
          %v756 = vld [vmem:[%s456 + $0x10] sm:$0xff]
          %v757 = vld [vmem:[%s456 + $0x18] sm:$0xff]
          %v758 = vld [vmem:[%s456 + $0x20] sm:$0xff]
          %v759 = vld [vmem:[%s456 + $0x28] sm:$0xff]
          %v760 = vld [vmem:[%s456 + $0x30] sm:$0xff]
          %v761 = vld [vmem:[%s456 + $0x38] sm:$0xff]
          %v762 = vld [vmem:[%s456 + $0x40] sm:$0xff]
          %v763 = vld [vmem:[%s456 + $0x48] sm:$0xff]
          %v764 = vld [vmem:[%s456 + $0x50] sm:$0xff]
          %v765 = vld [vmem:[%s456 + $0x58] sm:$0xff]
          %v766 = vld [vmem:[%s456 + $0x60] sm:$0xff]
          %v767 = vld [vmem:[%s456 + $0x68] sm:$0xff]
          %v768 = vld [vmem:[%s456 + $0x70] sm:$0xff]
          %v769 = vld [vmem:[%s456 + $0x78] sm:$0xff]
          %v770 = vld [vmem:[#allocation2 + $0x80] sm:$0xff]
          %v771 = vld [vmem:[#allocation2 + $0x88] sm:$0xff]
          %v772 = vld [vmem:[#allocation2 + $0x90] sm:$0xff]
          %v773 = vld [vmem:[#allocation2 + $0x98] sm:$0xff]
          %v774 = vld [vmem:[#allocation2 + $0x1a0] sm:$0xff]
          %v775 = vld [vmem:[#allocation2 + $0x1a8] sm:$0xff]
          %v776 = vld [vmem:[#allocation2 + $0x1b0] sm:$0xff]
          %v777 = vld [vmem:[#allocation2 + $0x1b8] sm:$0xff]
          %v778 = vpack.c.bf16 %v771, %v770
          %v779 = vpack.c.bf16 %v773, %v772
          %v780 = vpack.c.bf16 %v775, %v774
          %v781 = vpack.c.bf16 %v777, %v776
          %s782 = scalar_lea.vmem %s456, 128 [#allocation11]
          %v783 = vld [vmem:[%s782] sm:$0xff]
          %v784 = vld [vmem:[%s782 + $0x8] sm:$0xff]
          %v785 = vld [vmem:[%s782 + $0x10] sm:$0xff]
          %v786 = vld [vmem:[%s782 + $0x18] sm:$0xff]
          %v787 = vld [vmem:[%s782 + $0x20] sm:$0xff]
          %v788 = vld [vmem:[%s782 + $0x28] sm:$0xff]
          %v789 = vld [vmem:[%s782 + $0x30] sm:$0xff]
          %v790 = vld [vmem:[%s782 + $0x38] sm:$0xff]
          %v791 = vld [vmem:[%s782 + $0x40] sm:$0xff]
          %v792 = vld [vmem:[%s782 + $0x48] sm:$0xff]
          %v793 = vld [vmem:[%s782 + $0x50] sm:$0xff]
          %v794 = vld [vmem:[%s782 + $0x58] sm:$0xff]
          %v795 = vld [vmem:[%s782 + $0x60] sm:$0xff]
          %v796 = vld [vmem:[%s782 + $0x68] sm:$0xff]
          %v797 = vld [vmem:[%s782 + $0x70] sm:$0xff]
          %v798 = vld [vmem:[%s782 + $0x78] sm:$0xff]
          %v815 = vunpack.c.l.b16 %v783
          %v816 = vunpack.c.h.b16 %v783
          %v817 = vunpack.c.l.b16 %v784
          %v818 = vunpack.c.h.b16 %v784
          %v819 = vunpack.c.l.b16 %v785
          %v820 = vunpack.c.h.b16 %v785
          %v821 = vunpack.c.l.b16 %v786
          %v822 = vunpack.c.h.b16 %v786
          %v823 = vunpack.c.l.b16 %v787
          %v824 = vunpack.c.h.b16 %v787
          %v825 = vunpack.c.l.b16 %v788
          %v826 = vunpack.c.h.b16 %v788
          %v827 = vunpack.c.l.b16 %v789
          %v828 = vunpack.c.h.b16 %v789
          %v829 = vunpack.c.l.b16 %v790
          %v830 = vunpack.c.h.b16 %v790
          %v831 = vunpack.c.l.b16 %v791
          %v832 = vunpack.c.h.b16 %v791
          %v833 = vunpack.c.l.b16 %v792
          %v834 = vunpack.c.h.b16 %v792
          %v835 = vunpack.c.l.b16 %v793
          %v836 = vunpack.c.h.b16 %v793
          %v837 = vunpack.c.l.b16 %v794
          %v838 = vunpack.c.h.b16 %v794
          %v839 = vunpack.c.l.b16 %v795
          %v840 = vunpack.c.h.b16 %v795
          %v841 = vunpack.c.l.b16 %v796
          %v842 = vunpack.c.h.b16 %v796
          %v843 = vunpack.c.l.b16 %v797
          %v844 = vunpack.c.h.b16 %v797
          %v845 = vunpack.c.l.b16 %v798
          %v846 = vunpack.c.h.b16 %v798
          %v847 = vpack.c.b16 %v817, %v815
          %v848 = vpack.c.b16 %v818, %v816
          %v849 = vpack.c.b16 %v821, %v819
          %v850 = vpack.c.b16 %v822, %v820
          %v851 = vpack.c.b16 %v825, %v823
          %v852 = vpack.c.b16 %v826, %v824
          %v853 = vpack.c.b16 %v829, %v827
          %v854 = vpack.c.b16 %v830, %v828
          %v855 = vpack.c.b16 %v833, %v831
          %v856 = vpack.c.b16 %v834, %v832
          %v857 = vpack.c.b16 %v837, %v835
          %v858 = vpack.c.b16 %v838, %v836
          %v859 = vpack.c.b16 %v841, %v839
          %v860 = vpack.c.b16 %v842, %v840
          %v861 = vpack.c.b16 %v845, %v843
          %v862 = vpack.c.b16 %v846, %v844
          %879 = vmatpush.bf16.msra.mxu0 %v861
          %880 = vmatpush.bf16.msra.mxu0 %v859
          %881 = vmatpush.bf16.msra.mxu0 %v857
          %882 = vmatpush.bf16.msra.mxu0 %v855
          %883 = vmatpush.bf16.msra.mxu0 %v853
          %884 = vmatpush.bf16.msra.mxu0 %v851
          %885 = vmatpush.bf16.msra.mxu0 %v849
          %886 = vmatpush.bf16.msra.mxu0 %v847
          %887 = vmatmul.bf16.gmra.mxu0 %v778
          %v888 = vpop.f32.mrf.mxu0
          %v889 = vadd.f32 0.0, %v888
          %v890 = vpop.f32.mrf.mxu0
          %v891 = vadd.f32 0.0, %v890
          %892 = vmatmul.bf16.gmra.mxu0 %v779
          %v893 = vpop.f32.mrf.mxu0
          %v894 = vadd.f32 0.0, %v893
          %v895 = vpop.f32.mrf.mxu0
          %v896 = vadd.f32 0.0, %v895
          %897 = vmatmul.bf16.gmra.mxu0 %v780
          %v898 = vpop.f32.mrf.mxu0
          %v899 = vadd.f32 0.0, %v898
          %v900 = vpop.f32.mrf.mxu0
          %v901 = vadd.f32 0.0, %v900
          %902 = vmatmul.bf16.gmra.mxu0 %v781
          %v903 = vpop.f32.mrf.mxu0
          %v904 = vadd.f32 0.0, %v903
          %v905 = vpop.f32.mrf.mxu0
          %v906 = vadd.f32 0.0, %v905
          %907 = vdwg.mxu0
          %908 = vmatpush.bf16.msra.mxu0 %v862
          %909 = vmatpush.bf16.msra.mxu0 %v860
          %910 = vmatpush.bf16.msra.mxu0 %v858
          %911 = vmatpush.bf16.msra.mxu0 %v856
          %912 = vmatpush.bf16.msra.mxu0 %v854
          %913 = vmatpush.bf16.msra.mxu0 %v852
          %914 = vmatpush.bf16.msra.mxu0 %v850
          %915 = vmatpush.bf16.msra.mxu0 %v848
          %916 = vmatmul.bf16.gmra.mxu0 %v778
          %v917 = vpop.f32.mrf.mxu0
          %v918 = vadd.f32 0.0, %v917
          %v919 = vpop.f32.mrf.mxu0
          %v920 = vadd.f32 0.0, %v919
          %921 = vmatmul.bf16.gmra.mxu0 %v779
          %v922 = vpop.f32.mrf.mxu0
          %v923 = vadd.f32 0.0, %v922
          %v924 = vpop.f32.mrf.mxu0
          %v925 = vadd.f32 0.0, %v924
          %926 = vmatmul.bf16.gmra.mxu0 %v780
          %v927 = vpop.f32.mrf.mxu0
          %v928 = vadd.f32 0.0, %v927
          %v929 = vpop.f32.mrf.mxu0
          %v930 = vadd.f32 0.0, %v929
          %931 = vmatmul.bf16.gmra.mxu0 %v781
          %v932 = vpop.f32.mrf.mxu0
          %v933 = vadd.f32 0.0, %v932
          %v934 = vpop.f32.mrf.mxu0
          %v935 = vadd.f32 0.0, %v934
          %936 = vdwg.mxu0
          %v953 = vunpack.c.l.b16 %v754
          %v954 = vunpack.c.h.b16 %v754
          %v955 = vunpack.c.l.b16 %v755
          %v956 = vunpack.c.h.b16 %v755
          %v957 = vunpack.c.l.b16 %v756
          %v958 = vunpack.c.h.b16 %v756
          %v959 = vunpack.c.l.b16 %v757
          %v960 = vunpack.c.h.b16 %v757
          %v961 = vunpack.c.l.b16 %v758
          %v962 = vunpack.c.h.b16 %v758
          %v963 = vunpack.c.l.b16 %v759
          %v964 = vunpack.c.h.b16 %v759
          %v965 = vunpack.c.l.b16 %v760
          %v966 = vunpack.c.h.b16 %v760
          %v967 = vunpack.c.l.b16 %v761
          %v968 = vunpack.c.h.b16 %v761
          %v969 = vunpack.c.l.b16 %v762
          %v970 = vunpack.c.h.b16 %v762
          %v971 = vunpack.c.l.b16 %v763
          %v972 = vunpack.c.h.b16 %v763
          %v973 = vunpack.c.l.b16 %v764
          %v974 = vunpack.c.h.b16 %v764
          %v975 = vunpack.c.l.b16 %v765
          %v976 = vunpack.c.h.b16 %v765
          %v977 = vunpack.c.l.b16 %v766
          %v978 = vunpack.c.h.b16 %v766
          %v979 = vunpack.c.l.b16 %v767
          %v980 = vunpack.c.h.b16 %v767
          %v981 = vunpack.c.l.b16 %v768
          %v982 = vunpack.c.h.b16 %v768
          %v983 = vunpack.c.l.b16 %v769
          %v984 = vunpack.c.h.b16 %v769
          %v985 = vpack.c.b16 %v955, %v953
          %v986 = vpack.c.b16 %v956, %v954
          %v987 = vpack.c.b16 %v959, %v957
          %v988 = vpack.c.b16 %v960, %v958
          %v989 = vpack.c.b16 %v963, %v961
          %v990 = vpack.c.b16 %v964, %v962
          %v991 = vpack.c.b16 %v967, %v965
          %v992 = vpack.c.b16 %v968, %v966
          %v993 = vpack.c.b16 %v971, %v969
          %v994 = vpack.c.b16 %v972, %v970
          %v995 = vpack.c.b16 %v975, %v973
          %v996 = vpack.c.b16 %v976, %v974
          %v997 = vpack.c.b16 %v979, %v977
          %v998 = vpack.c.b16 %v980, %v978
          %v999 = vpack.c.b16 %v983, %v981
          %v1000 = vpack.c.b16 %v984, %v982
          %1017 = vmatpush.bf16.msra.mxu0 %v999
          %1018 = vmatpush.bf16.msra.mxu0 %v997
          %1019 = vmatpush.bf16.msra.mxu0 %v995
          %1020 = vmatpush.bf16.msra.mxu0 %v993
          %1021 = vmatpush.bf16.msra.mxu0 %v991
          %1022 = vmatpush.bf16.msra.mxu0 %v989
          %1023 = vmatpush.bf16.msra.mxu0 %v987
          %1024 = vmatpush.bf16.msra.mxu0 %v985
          %1025 = vmatmul.bf16.gmra.mxu0 %v750
          %v1026 = vpop.f32.mrf.mxu0
          %v1027 = vadd.f32 %v889, %v1026
          %v1028 = vpop.f32.mrf.mxu0
          %v1029 = vadd.f32 %v891, %v1028
          %1030 = vmatmul.bf16.gmra.mxu0 %v751
          %v1031 = vpop.f32.mrf.mxu0
          %v1032 = vadd.f32 %v894, %v1031
          %v1033 = vpop.f32.mrf.mxu0
          %v1034 = vadd.f32 %v896, %v1033
          %1035 = vmatmul.bf16.gmra.mxu0 %v752
          %v1036 = vpop.f32.mrf.mxu0
          %v1037 = vadd.f32 %v899, %v1036
          %v1038 = vpop.f32.mrf.mxu0
          %v1039 = vadd.f32 %v901, %v1038
          %1040 = vmatmul.bf16.gmra.mxu0 %v753
          %v1041 = vpop.f32.mrf.mxu0
          %v1042 = vadd.f32 %v904, %v1041
          %v1043 = vpop.f32.mrf.mxu0
          %v1044 = vadd.f32 %v906, %v1043
          %1045 = vdwg.mxu0
          %1046 = vmatpush.bf16.msra.mxu0 %v1000
          %1047 = vmatpush.bf16.msra.mxu0 %v998
          %1048 = vmatpush.bf16.msra.mxu0 %v996
          %1049 = vmatpush.bf16.msra.mxu0 %v994
          %1050 = vmatpush.bf16.msra.mxu0 %v992
          %1051 = vmatpush.bf16.msra.mxu0 %v990
          %1052 = vmatpush.bf16.msra.mxu0 %v988
          %1053 = vmatpush.bf16.msra.mxu0 %v986
          %1054 = vmatmul.bf16.gmra.mxu0 %v750
          %v1055 = vpop.f32.mrf.mxu0
          %v1056 = vadd.f32 %v918, %v1055
          %v1057 = vpop.f32.mrf.mxu0
          %v1058 = vadd.f32 %v920, %v1057
          %1059 = vmatmul.bf16.gmra.mxu0 %v751
          %v1060 = vpop.f32.mrf.mxu0
          %v1061 = vadd.f32 %v923, %v1060
          %v1062 = vpop.f32.mrf.mxu0
          %v1063 = vadd.f32 %v925, %v1062
          %1064 = vmatmul.bf16.gmra.mxu0 %v752
          %v1065 = vpop.f32.mrf.mxu0
          %v1066 = vadd.f32 %v928, %v1065
          %v1067 = vpop.f32.mrf.mxu0
          %v1068 = vadd.f32 %v930, %v1067
          %1069 = vmatmul.bf16.gmra.mxu0 %v753
          %v1070 = vpop.f32.mrf.mxu0
          %v1071 = vadd.f32 %v933, %v1070
          %v1072 = vpop.f32.mrf.mxu0
          %v1073 = vadd.f32 %v935, %v1072
          %1074 = vdwg.mxu0
          %s1075 = sadd.s32 %s723, 128
          %s1076 = scalar_lea.vmem [#allocation2], %s1075
          %v1077 = vld [vmem:[%s1076] sm:$0xff]
          %v1078 = vld [vmem:[%s1076 + $0x8] sm:$0xff]
          %v1079 = vld [vmem:[%s1076 + $0x10] sm:$0xff]
          %v1080 = vld [vmem:[%s1076 + $0x18] sm:$0xff]
          %v1081 = vld [vmem:[%s1076 + $0x120] sm:$0xff]
          %v1082 = vld [vmem:[%s1076 + $0x128] sm:$0xff]
          %v1083 = vld [vmem:[%s1076 + $0x130] sm:$0xff]
          %v1084 = vld [vmem:[%s1076 + $0x138] sm:$0xff]
          %v1085 = vpack.c.bf16 %v1078, %v1077
          %v1086 = vpack.c.bf16 %v1080, %v1079
          %v1087 = vpack.c.bf16 %v1082, %v1081
          %v1088 = vpack.c.bf16 %v1084, %v1083
          %s1089 = scalar_lea.vmem %s456, 256 [#allocation11]
          %v1090 = vld [vmem:[%s1089] sm:$0xff]
          %v1091 = vld [vmem:[%s1089 + $0x8] sm:$0xff]
          %v1092 = vld [vmem:[%s1089 + $0x10] sm:$0xff]
          %v1093 = vld [vmem:[%s1089 + $0x18] sm:$0xff]
          %v1094 = vld [vmem:[%s1089 + $0x20] sm:$0xff]
          %v1095 = vld [vmem:[%s1089 + $0x28] sm:$0xff]
          %v1096 = vld [vmem:[%s1089 + $0x30] sm:$0xff]
          %v1097 = vld [vmem:[%s1089 + $0x38] sm:$0xff]
          %v1098 = vld [vmem:[%s1089 + $0x40] sm:$0xff]
          %v1099 = vld [vmem:[%s1089 + $0x48] sm:$0xff]
          %v1100 = vld [vmem:[%s1089 + $0x50] sm:$0xff]
          %v1101 = vld [vmem:[%s1089 + $0x58] sm:$0xff]
          %v1102 = vld [vmem:[%s1089 + $0x60] sm:$0xff]
          %v1103 = vld [vmem:[%s1089 + $0x68] sm:$0xff]
          %v1104 = vld [vmem:[%s1089 + $0x70] sm:$0xff]
          %v1105 = vld [vmem:[%s1089 + $0x78] sm:$0xff]
          %v1122 = vunpack.c.l.b16 %v1090
          %v1123 = vunpack.c.h.b16 %v1090
          %v1124 = vunpack.c.l.b16 %v1091
          %v1125 = vunpack.c.h.b16 %v1091
          %v1126 = vunpack.c.l.b16 %v1092
          %v1127 = vunpack.c.h.b16 %v1092
          %v1128 = vunpack.c.l.b16 %v1093
          %v1129 = vunpack.c.h.b16 %v1093
          %v1130 = vunpack.c.l.b16 %v1094
          %v1131 = vunpack.c.h.b16 %v1094
          %v1132 = vunpack.c.l.b16 %v1095
          %v1133 = vunpack.c.h.b16 %v1095
          %v1134 = vunpack.c.l.b16 %v1096
          %v1135 = vunpack.c.h.b16 %v1096
          %v1136 = vunpack.c.l.b16 %v1097
          %v1137 = vunpack.c.h.b16 %v1097
          %v1138 = vunpack.c.l.b16 %v1098
          %v1139 = vunpack.c.h.b16 %v1098
          %v1140 = vunpack.c.l.b16 %v1099
          %v1141 = vunpack.c.h.b16 %v1099
          %v1142 = vunpack.c.l.b16 %v1100
          %v1143 = vunpack.c.h.b16 %v1100
          %v1144 = vunpack.c.l.b16 %v1101
          %v1145 = vunpack.c.h.b16 %v1101
          %v1146 = vunpack.c.l.b16 %v1102
          %v1147 = vunpack.c.h.b16 %v1102
          %v1148 = vunpack.c.l.b16 %v1103
          %v1149 = vunpack.c.h.b16 %v1103
          %v1150 = vunpack.c.l.b16 %v1104
          %v1151 = vunpack.c.h.b16 %v1104
          %v1152 = vunpack.c.l.b16 %v1105
          %v1153 = vunpack.c.h.b16 %v1105
          %v1154 = vpack.c.b16 %v1124, %v1122
          %v1155 = vpack.c.b16 %v1125, %v1123
          %v1156 = vpack.c.b16 %v1128, %v1126
          %v1157 = vpack.c.b16 %v1129, %v1127
          %v1158 = vpack.c.b16 %v1132, %v1130
          %v1159 = vpack.c.b16 %v1133, %v1131
          %v1160 = vpack.c.b16 %v1136, %v1134
          %v1161 = vpack.c.b16 %v1137, %v1135
          %v1162 = vpack.c.b16 %v1140, %v1138
          %v1163 = vpack.c.b16 %v1141, %v1139
          %v1164 = vpack.c.b16 %v1144, %v1142
          %v1165 = vpack.c.b16 %v1145, %v1143
          %v1166 = vpack.c.b16 %v1148, %v1146
          %v1167 = vpack.c.b16 %v1149, %v1147
          %v1168 = vpack.c.b16 %v1152, %v1150
          %v1169 = vpack.c.b16 %v1153, %v1151
          %1186 = vmatpush.bf16.msra.mxu0 %v1168
          %1187 = vmatpush.bf16.msra.mxu0 %v1166
          %1188 = vmatpush.bf16.msra.mxu0 %v1164
          %1189 = vmatpush.bf16.msra.mxu0 %v1162
          %1190 = vmatpush.bf16.msra.mxu0 %v1160
          %1191 = vmatpush.bf16.msra.mxu0 %v1158
          %1192 = vmatpush.bf16.msra.mxu0 %v1156
          %1193 = vmatpush.bf16.msra.mxu0 %v1154
          %1194 = vmatmul.bf16.gmra.mxu0 %v1085
          %v1195 = vpop.f32.mrf.mxu0
          %v1196 = vadd.f32 0.0, %v1195
          %v1197 = vpop.f32.mrf.mxu0
          %v1198 = vadd.f32 0.0, %v1197
          %1199 = vmatmul.bf16.gmra.mxu0 %v1086
          %v1200 = vpop.f32.mrf.mxu0
          %v1201 = vadd.f32 0.0, %v1200
          %v1202 = vpop.f32.mrf.mxu0
          %v1203 = vadd.f32 0.0, %v1202
          %1204 = vmatmul.bf16.gmra.mxu0 %v1087
          %v1205 = vpop.f32.mrf.mxu0
          %v1206 = vadd.f32 0.0, %v1205
          %v1207 = vpop.f32.mrf.mxu0
          %v1208 = vadd.f32 0.0, %v1207
          %1209 = vmatmul.bf16.gmra.mxu0 %v1088
          %v1210 = vpop.f32.mrf.mxu0
          %v1211 = vadd.f32 0.0, %v1210
          %v1212 = vpop.f32.mrf.mxu0
          %v1213 = vadd.f32 0.0, %v1212
          %1214 = vdwg.mxu0
          %1215 = vmatpush.bf16.msra.mxu0 %v1169
          %1216 = vmatpush.bf16.msra.mxu0 %v1167
          %1217 = vmatpush.bf16.msra.mxu0 %v1165
          %1218 = vmatpush.bf16.msra.mxu0 %v1163
          %1219 = vmatpush.bf16.msra.mxu0 %v1161
          %1220 = vmatpush.bf16.msra.mxu0 %v1159
          %1221 = vmatpush.bf16.msra.mxu0 %v1157
          %1222 = vmatpush.bf16.msra.mxu0 %v1155
          %1223 = vmatmul.bf16.gmra.mxu0 %v1085
          %v1224 = vpop.f32.mrf.mxu0
          %v1225 = vadd.f32 0.0, %v1224
          %v1226 = vpop.f32.mrf.mxu0
          %v1227 = vadd.f32 0.0, %v1226
          %1228 = vmatmul.bf16.gmra.mxu0 %v1086
          %v1229 = vpop.f32.mrf.mxu0
          %v1230 = vadd.f32 0.0, %v1229
          %v1231 = vpop.f32.mrf.mxu0
          %v1232 = vadd.f32 0.0, %v1231
          %1233 = vmatmul.bf16.gmra.mxu0 %v1087
          %v1234 = vpop.f32.mrf.mxu0
          %v1235 = vadd.f32 0.0, %v1234
          %v1236 = vpop.f32.mrf.mxu0
          %v1237 = vadd.f32 0.0, %v1236
          %1238 = vmatmul.bf16.gmra.mxu0 %v1088
          %v1239 = vpop.f32.mrf.mxu0
          %v1240 = vadd.f32 0.0, %v1239
          %v1241 = vpop.f32.mrf.mxu0
          %v1242 = vadd.f32 0.0, %v1241
          %1243 = vdwg.mxu0
          %v1244 = vadd.f32 %v1027, %v1196
          %v1245 = vadd.f32 %v1056, %v1225
          %v1246 = vadd.f32 %v1029, %v1198
          %v1247 = vadd.f32 %v1058, %v1227
          %v1248 = vadd.f32 %v1032, %v1201
          %v1249 = vadd.f32 %v1061, %v1230
          %v1250 = vadd.f32 %v1034, %v1203
          %v1251 = vadd.f32 %v1063, %v1232
          %v1252 = vadd.f32 %v1037, %v1206
          %v1253 = vadd.f32 %v1066, %v1235
          %v1254 = vadd.f32 %v1039, %v1208
          %v1255 = vadd.f32 %v1068, %v1237
          %v1256 = vadd.f32 %v1042, %v1211
          %v1257 = vadd.f32 %v1071, %v1240
          %v1258 = vadd.f32 %v1044, %v1213
          %v1259 = vadd.f32 %v1073, %v1242
          %v1260 = vld [vmem:[%s466] sm:$0x3]
          %v1262 = vperm.slane %v1260, 0
          %v1263 = vperm.slane %v1260, 1
          %v1266 = vadd.f32 %v1244, %v1262
          %v1267 = vadd.f32 %v1245, %v1263
          %v1268 = vadd.f32 %v1246, %v1262
          %v1269 = vadd.f32 %v1247, %v1263
          %v1270 = vadd.f32 %v1248, %v1262
          %v1271 = vadd.f32 %v1249, %v1263
          %v1272 = vadd.f32 %v1250, %v1262
          %v1273 = vadd.f32 %v1251, %v1263
          %v1274 = vadd.f32 %v1252, %v1262
          %v1275 = vadd.f32 %v1253, %v1263
          %v1276 = vadd.f32 %v1254, %v1262
          %v1277 = vadd.f32 %v1255, %v1263
          %v1278 = vadd.f32 %v1256, %v1262
          %v1279 = vadd.f32 %v1257, %v1263
          %v1280 = vadd.f32 %v1258, %v1262
          %v1281 = vadd.f32 %v1259, %v1263
          %v1282 = vtanh.pop %v1266
          %v1283 = vtanh.pop %v1268
          %v1284 = vtanh.pop %v1270
          %v1285 = vtanh.pop %v1272
          %v1286 = vtanh.pop %v1274
          %v1287 = vtanh.pop %v1276
          %v1288 = vtanh.pop %v1278
          %v1289 = vtanh.pop %v1280
          %v1290 = vxor.u32 %v1267, 2147483648
          %v1291 = vxor.u32 %v1269, 2147483648
          %v1292 = vxor.u32 %v1271, 2147483648
          %v1293 = vxor.u32 %v1273, 2147483648
          %v1294 = vxor.u32 %v1275, 2147483648
          %v1295 = vxor.u32 %v1277, 2147483648
          %v1296 = vxor.u32 %v1279, 2147483648
          %v1297 = vxor.u32 %v1281, 2147483648
          %v1298 = vmul.f32 %v1290, 1.442695
          %v1299 = vpow.pop %v1298
          %v1300 = vmul.f32 %v1291, 1.442695
          %v1301 = vpow.pop %v1300
          %v1302 = vmul.f32 %v1292, 1.442695
          %v1303 = vpow.pop %v1302
          %v1304 = vmul.f32 %v1293, 1.442695
          %v1305 = vpow.pop %v1304
          %v1306 = vmul.f32 %v1294, 1.442695
          %v1307 = vpow.pop %v1306
          %v1308 = vmul.f32 %v1295, 1.442695
          %v1309 = vpow.pop %v1308
          %v1310 = vmul.f32 %v1296, 1.442695
          %v1311 = vpow.pop %v1310
          %v1312 = vmul.f32 %v1297, 1.442695
          %v1313 = vpow.pop %v1312
          %v1314 = vadd.f32 %v1299, 1.0
          %v1315 = vadd.f32 %v1301, 1.0
          %v1316 = vadd.f32 %v1303, 1.0
          %v1317 = vadd.f32 %v1305, 1.0
          %v1318 = vadd.f32 %v1307, 1.0
          %v1319 = vadd.f32 %v1309, 1.0
          %v1320 = vadd.f32 %v1311, 1.0
          %v1321 = vadd.f32 %v1313, 1.0
          %v1322 = vrcp.pop %v1314
          %v1323 = vmul.f32 %v1314, %v1322
          %v1324 = vsub.f32 1.0, %v1323
          %v1325 = vmul.f32 %v1322, %v1324
          %v1326 = vadd.f32 %v1322, %v1325
          %vm1327 = vweird.f32 %v1314
          %vm1328 = vweird.f32 %v1322
          %vm1329 = vmor %vm1327, %vm1328
          %v1330 = vsel %vm1329, %v1322, %v1326
          %v1331 = vand.u32 2147483647, %v1314
          %vm1332 = vcmp.eq.f32.partialorder %v1331, 8.507059e+37
          %v1333 = vand.u32 %v1314, 2147483648
          %v1334 = vor.u32 1.1754944e-38, %v1333
          %v1335 = vsel %vm1332, %v1334, %v1330
          %v1336 = vmul.f32 1.0, %v1335
          %v1337 = vrcp.pop %v1315
          %v1338 = vmul.f32 %v1315, %v1337
          %v1339 = vsub.f32 1.0, %v1338
          %v1340 = vmul.f32 %v1337, %v1339
          %v1341 = vadd.f32 %v1337, %v1340
          %vm1342 = vweird.f32 %v1315
          %vm1343 = vweird.f32 %v1337
          %vm1344 = vmor %vm1342, %vm1343
          %v1345 = vsel %vm1344, %v1337, %v1341
          %v1346 = vand.u32 2147483647, %v1315
          %vm1347 = vcmp.eq.f32.partialorder %v1346, 8.507059e+37
          %v1348 = vand.u32 %v1315, 2147483648
          %v1349 = vor.u32 1.1754944e-38, %v1348
          %v1350 = vsel %vm1347, %v1349, %v1345
          %v1351 = vmul.f32 1.0, %v1350
          %v1352 = vrcp.pop %v1316
          %v1353 = vmul.f32 %v1316, %v1352
          %v1354 = vsub.f32 1.0, %v1353
          %v1355 = vmul.f32 %v1352, %v1354
          %v1356 = vadd.f32 %v1352, %v1355
          %vm1357 = vweird.f32 %v1316
          %vm1358 = vweird.f32 %v1352
          %vm1359 = vmor %vm1357, %vm1358
          %v1360 = vsel %vm1359, %v1352, %v1356
          %v1361 = vand.u32 2147483647, %v1316
          %vm1362 = vcmp.eq.f32.partialorder %v1361, 8.507059e+37
          %v1363 = vand.u32 %v1316, 2147483648
          %v1364 = vor.u32 1.1754944e-38, %v1363
          %v1365 = vsel %vm1362, %v1364, %v1360
          %v1366 = vmul.f32 1.0, %v1365
          %v1367 = vrcp.pop %v1317
          %v1368 = vmul.f32 %v1317, %v1367
          %v1369 = vsub.f32 1.0, %v1368
          %v1370 = vmul.f32 %v1367, %v1369
          %v1371 = vadd.f32 %v1367, %v1370
          %vm1372 = vweird.f32 %v1317
          %vm1373 = vweird.f32 %v1367
          %vm1374 = vmor %vm1372, %vm1373
          %v1375 = vsel %vm1374, %v1367, %v1371
          %v1376 = vand.u32 2147483647, %v1317
          %vm1377 = vcmp.eq.f32.partialorder %v1376, 8.507059e+37
          %v1378 = vand.u32 %v1317, 2147483648
          %v1379 = vor.u32 1.1754944e-38, %v1378
          %v1380 = vsel %vm1377, %v1379, %v1375
          %v1381 = vmul.f32 1.0, %v1380
          %v1382 = vrcp.pop %v1318
          %v1383 = vmul.f32 %v1318, %v1382
          %v1384 = vsub.f32 1.0, %v1383
          %v1385 = vmul.f32 %v1382, %v1384
          %v1386 = vadd.f32 %v1382, %v1385
          %vm1387 = vweird.f32 %v1318
          %vm1388 = vweird.f32 %v1382
          %vm1389 = vmor %vm1387, %vm1388
          %v1390 = vsel %vm1389, %v1382, %v1386
          %v1391 = vand.u32 2147483647, %v1318
          %vm1392 = vcmp.eq.f32.partialorder %v1391, 8.507059e+37
          %v1393 = vand.u32 %v1318, 2147483648
          %v1394 = vor.u32 1.1754944e-38, %v1393
          %v1395 = vsel %vm1392, %v1394, %v1390
          %v1396 = vmul.f32 1.0, %v1395
          %v1397 = vrcp.pop %v1319
          %v1398 = vmul.f32 %v1319, %v1397
          %v1399 = vsub.f32 1.0, %v1398
          %v1400 = vmul.f32 %v1397, %v1399
          %v1401 = vadd.f32 %v1397, %v1400
          %vm1402 = vweird.f32 %v1319
          %vm1403 = vweird.f32 %v1397
          %vm1404 = vmor %vm1402, %vm1403
          %v1405 = vsel %vm1404, %v1397, %v1401
          %v1406 = vand.u32 2147483647, %v1319
          %vm1407 = vcmp.eq.f32.partialorder %v1406, 8.507059e+37
          %v1408 = vand.u32 %v1319, 2147483648
          %v1409 = vor.u32 1.1754944e-38, %v1408
          %v1410 = vsel %vm1407, %v1409, %v1405
          %v1411 = vmul.f32 1.0, %v1410
          %v1412 = vrcp.pop %v1320
          %v1413 = vmul.f32 %v1320, %v1412
          %v1414 = vsub.f32 1.0, %v1413
          %v1415 = vmul.f32 %v1412, %v1414
          %v1416 = vadd.f32 %v1412, %v1415
          %vm1417 = vweird.f32 %v1320
          %vm1418 = vweird.f32 %v1412
          %vm1419 = vmor %vm1417, %vm1418
          %v1420 = vsel %vm1419, %v1412, %v1416
          %v1421 = vand.u32 2147483647, %v1320
          %vm1422 = vcmp.eq.f32.partialorder %v1421, 8.507059e+37
          %v1423 = vand.u32 %v1320, 2147483648
          %v1424 = vor.u32 1.1754944e-38, %v1423
          %v1425 = vsel %vm1422, %v1424, %v1420
          %v1426 = vmul.f32 1.0, %v1425
          %v1427 = vrcp.pop %v1321
          %v1428 = vmul.f32 %v1321, %v1427
          %v1429 = vsub.f32 1.0, %v1428
          %v1430 = vmul.f32 %v1427, %v1429
          %v1431 = vadd.f32 %v1427, %v1430
          %vm1432 = vweird.f32 %v1321
          %vm1433 = vweird.f32 %v1427
          %vm1434 = vmor %vm1432, %vm1433
          %v1435 = vsel %vm1434, %v1427, %v1431
          %v1436 = vand.u32 2147483647, %v1321
          %vm1437 = vcmp.eq.f32.partialorder %v1436, 8.507059e+37
          %v1438 = vand.u32 %v1321, 2147483648
          %v1439 = vor.u32 1.1754944e-38, %v1438
          %v1440 = vsel %vm1437, %v1439, %v1435
          %v1441 = vmul.f32 1.0, %v1440
          %v1442 = vmul.f32 %v1282, %v1336
          %v1443 = vmul.f32 %v1283, %v1351
          %v1444 = vmul.f32 %v1284, %v1366
          %v1445 = vmul.f32 %v1285, %v1381
          %v1446 = vmul.f32 %v1286, %v1396
          %v1447 = vmul.f32 %v1287, %v1411
          %v1448 = vmul.f32 %v1288, %v1426
          %v1449 = vmul.f32 %v1289, %v1441
          %v1450 = vpack.c.bf16 %v1443, %v1442
          %v1451 = vpack.c.bf16 %v1445, %v1444
          %v1452 = vpack.c.bf16 %v1447, %v1446
          %v1453 = vpack.c.bf16 %v1449, %v1448
          %v1454 = vld [vmem:[%s476] sm:$0xff]
          %v1455 = vld [vmem:[%s476 + $0x8] sm:$0xff]
          %v1456 = vld [vmem:[%s476 + $0x10] sm:$0xff]
          %v1457 = vld [vmem:[%s476 + $0x18] sm:$0xff]
          %v1458 = vld [vmem:[%s476 + $0x20] sm:$0xff]
          %v1459 = vld [vmem:[%s476 + $0x28] sm:$0xff]
          %v1460 = vld [vmem:[%s476 + $0x30] sm:$0xff]
          %v1461 = vld [vmem:[%s476 + $0x38] sm:$0xff]
          %v1462 = vld [vmem:[%s476 + $0x40] sm:$0xff]
          %v1463 = vld [vmem:[%s476 + $0x48] sm:$0xff]
          %v1464 = vld [vmem:[%s476 + $0x50] sm:$0xff]
          %v1465 = vld [vmem:[%s476 + $0x58] sm:$0xff]
          %v1466 = vld [vmem:[%s476 + $0x60] sm:$0xff]
          %v1467 = vld [vmem:[%s476 + $0x68] sm:$0xff]
          %v1468 = vld [vmem:[%s476 + $0x70] sm:$0xff]
          %v1469 = vld [vmem:[%s476 + $0x78] sm:$0xff]
          %v1486 = vunpack.c.l.b16 %v1454
          %v1487 = vunpack.c.h.b16 %v1454
          %v1488 = vunpack.c.l.b16 %v1455
          %v1489 = vunpack.c.h.b16 %v1455
          %v1490 = vunpack.c.l.b16 %v1456
          %v1491 = vunpack.c.h.b16 %v1456
          %v1492 = vunpack.c.l.b16 %v1457
          %v1493 = vunpack.c.h.b16 %v1457
          %v1494 = vunpack.c.l.b16 %v1458
          %v1495 = vunpack.c.h.b16 %v1458
          %v1496 = vunpack.c.l.b16 %v1459
          %v1497 = vunpack.c.h.b16 %v1459
          %v1498 = vunpack.c.l.b16 %v1460
          %v1499 = vunpack.c.h.b16 %v1460
          %v1500 = vunpack.c.l.b16 %v1461
          %v1501 = vunpack.c.h.b16 %v1461
          %v1502 = vunpack.c.l.b16 %v1462
          %v1503 = vunpack.c.h.b16 %v1462
          %v1504 = vunpack.c.l.b16 %v1463
          %v1505 = vunpack.c.h.b16 %v1463
          %v1506 = vunpack.c.l.b16 %v1464
          %v1507 = vunpack.c.h.b16 %v1464
          %v1508 = vunpack.c.l.b16 %v1465
          %v1509 = vunpack.c.h.b16 %v1465
          %v1510 = vunpack.c.l.b16 %v1466
          %v1511 = vunpack.c.h.b16 %v1466
          %v1512 = vunpack.c.l.b16 %v1467
          %v1513 = vunpack.c.h.b16 %v1467
          %v1514 = vunpack.c.l.b16 %v1468
          %v1515 = vunpack.c.h.b16 %v1468
          %v1516 = vunpack.c.l.b16 %v1469
          %v1517 = vunpack.c.h.b16 %v1469
          %v1518 = vpack.c.b16 %v1488, %v1486
          %v1519 = vpack.c.b16 %v1489, %v1487
          %v1520 = vpack.c.b16 %v1492, %v1490
          %v1521 = vpack.c.b16 %v1493, %v1491
          %v1522 = vpack.c.b16 %v1496, %v1494
          %v1523 = vpack.c.b16 %v1497, %v1495
          %v1524 = vpack.c.b16 %v1500, %v1498
          %v1525 = vpack.c.b16 %v1501, %v1499
          %v1526 = vpack.c.b16 %v1504, %v1502
          %v1527 = vpack.c.b16 %v1505, %v1503
          %v1528 = vpack.c.b16 %v1508, %v1506
          %v1529 = vpack.c.b16 %v1509, %v1507
          %v1530 = vpack.c.b16 %v1512, %v1510
          %v1531 = vpack.c.b16 %v1513, %v1511
          %v1532 = vpack.c.b16 %v1516, %v1514
          %v1533 = vpack.c.b16 %v1517, %v1515
          %1550 = vmatpush.bf16.msra.mxu0 %v1532
          %1551 = vmatpush.bf16.msra.mxu0 %v1530
          %1552 = vmatpush.bf16.msra.mxu0 %v1528
          %1553 = vmatpush.bf16.msra.mxu0 %v1526
          %1554 = vmatpush.bf16.msra.mxu0 %v1524
          %1555 = vmatpush.bf16.msra.mxu0 %v1522
          %1556 = vmatpush.bf16.msra.mxu0 %v1520
          %1557 = vmatpush.bf16.msra.mxu0 %v1518
          %1558 = vmatmul.bf16.gmra.mxu0 %v1450
          %v1559 = vpop.f32.mrf.mxu0
          %v1560 = vadd.f32 0.0, %v1559
          %v1561 = vpop.f32.mrf.mxu0
          %v1562 = vadd.f32 0.0, %v1561
          %1563 = vmatmul.bf16.gmra.mxu0 %v1451
          %v1564 = vpop.f32.mrf.mxu0
          %v1565 = vadd.f32 0.0, %v1564
          %v1566 = vpop.f32.mrf.mxu0
          %v1567 = vadd.f32 0.0, %v1566
          %1568 = vmatmul.bf16.gmra.mxu0 %v1452
          %v1569 = vpop.f32.mrf.mxu0
          %v1570 = vadd.f32 0.0, %v1569
          %v1571 = vpop.f32.mrf.mxu0
          %v1572 = vadd.f32 0.0, %v1571
          %1573 = vmatmul.bf16.gmra.mxu0 %v1453
          %v1574 = vpop.f32.mrf.mxu0
          %v1575 = vadd.f32 0.0, %v1574
          %v1576 = vpop.f32.mrf.mxu0
          %v1577 = vadd.f32 0.0, %v1576
          %1578 = vdwg.mxu0
          %1579 = vmatpush.bf16.msra.mxu0 %v1533
          %1580 = vmatpush.bf16.msra.mxu0 %v1531
          %1581 = vmatpush.bf16.msra.mxu0 %v1529
          %1582 = vmatpush.bf16.msra.mxu0 %v1527
          %1583 = vmatpush.bf16.msra.mxu0 %v1525
          %1584 = vmatpush.bf16.msra.mxu0 %v1523
          %1585 = vmatpush.bf16.msra.mxu0 %v1521
          %1586 = vmatpush.bf16.msra.mxu0 %v1519
          %1587 = vmatmul.bf16.gmra.mxu0 %v1450
          %v1588 = vpop.f32.mrf.mxu0
          %v1589 = vadd.f32 0.0, %v1588
          %v1590 = vpop.f32.mrf.mxu0
          %v1591 = vadd.f32 0.0, %v1590
          %1592 = vmatmul.bf16.gmra.mxu0 %v1451
          %v1593 = vpop.f32.mrf.mxu0
          %v1594 = vadd.f32 0.0, %v1593
          %v1595 = vpop.f32.mrf.mxu0
          %v1596 = vadd.f32 0.0, %v1595
          %1597 = vmatmul.bf16.gmra.mxu0 %v1452
          %v1598 = vpop.f32.mrf.mxu0
          %v1599 = vadd.f32 0.0, %v1598
          %v1600 = vpop.f32.mrf.mxu0
          %v1601 = vadd.f32 0.0, %v1600
          %1602 = vmatmul.bf16.gmra.mxu0 %v1453
          %v1603 = vpop.f32.mrf.mxu0
          %v1604 = vadd.f32 0.0, %v1603
          %v1605 = vpop.f32.mrf.mxu0
          %v1606 = vadd.f32 0.0, %v1605
          %1607 = vdwg.mxu0
          %v1608 = vlaneseq
          %v1609 = vshrl.u32 %v1608, 7
          %v1610 = vadd.s32 %v1609, 8
          %v1611 = vadd.s32 %v1609, 16
          %v1612 = vadd.s32 %v1609, 24
          %v1613 = vstv %s540
          %vm1614 = vcmp.lt.s32.totalorder %v1609, %v1613
          %vm1615 = vcmp.lt.s32.totalorder %v1610, %v1613
          %vm1616 = vcmp.lt.s32.totalorder %v1611, %v1613
          %vm1617 = vcmp.lt.s32.totalorder %v1612, %v1613
          %v1618 = vsel %vm1614, 1, 0
          %v1619 = vsel %vm1615, 1, 0
          %v1620 = vsel %vm1616, 1, 0
          %v1621 = vsel %vm1617, 1, 0
          %v1622 = vcvt.s32.f32 %v1618
          %v1623 = vcvt.s32.f32 %v1619
          %v1624 = vcvt.s32.f32 %v1620
          %v1625 = vcvt.s32.f32 %v1621
          %v1626 = vadd.f32 %v770, %v1560
          %v1627 = vadd.f32 %v771, %v1562
          %v1628 = vadd.f32 %v772, %v1565
          %v1629 = vadd.f32 %v773, %v1567
          %v1630 = vadd.f32 %v774, %v1570
          %v1631 = vadd.f32 %v775, %v1572
          %v1632 = vadd.f32 %v776, %v1575
          %v1633 = vadd.f32 %v777, %v1577
          %v1634 = vmul.f32 %v1626, %v1622
          %v1635 = vmul.f32 %v1627, %v1623
          %v1636 = vmul.f32 %v1628, %v1624
          %v1637 = vmul.f32 %v1629, %v1625
          %v1638 = vmul.f32 %v1630, %v1622
          %v1639 = vmul.f32 %v1631, %v1623
          %v1640 = vmul.f32 %v1632, %v1624
          %v1641 = vmul.f32 %v1633, %v1625
          %1642 = vst [vmem:[#allocation3 + $0x80] sm:$0xff] %v1634
          %1643 = vst [vmem:[#allocation3 + $0x88] sm:$0xff] %v1635
          %1644 = vst [vmem:[#allocation3 + $0x90] sm:$0xff] %v1636
          %1645 = vst [vmem:[#allocation3 + $0x98] sm:$0xff] %v1637
          %1646 = vst [vmem:[#allocation3 + $0x1a0] sm:$0xff] %v1638
          %1647 = vst [vmem:[#allocation3 + $0x1a8] sm:$0xff] %v1639
          %1648 = vst [vmem:[#allocation3 + $0x1b0] sm:$0xff] %v1640
          %1649 = vst [vmem:[#allocation3 + $0x1b8] sm:$0xff] %v1641
          %v1650 = vld [vmem:[#allocation4] sm:$0xff]
          %v1651 = vld [vmem:[#allocation4 + $0x8] sm:$0xff]
          %v1652 = vld [vmem:[#allocation4 + $0x10] sm:$0xff]
          %v1653 = vld [vmem:[#allocation4 + $0x18] sm:$0xff]
          %v1654 = vld [vmem:[#allocation4 + $0x20] sm:$0xff]
          %v1655 = vld [vmem:[#allocation4 + $0x28] sm:$0xff]
          %v1656 = vld [vmem:[#allocation4 + $0x30] sm:$0xff]
          %v1657 = vld [vmem:[#allocation4 + $0x38] sm:$0xff]
          %v1658 = vadd.f32 %v1650, %v1589
          %v1659 = vadd.f32 %v1651, %v1591
          %v1660 = vadd.f32 %v1652, %v1594
          %v1661 = vadd.f32 %v1653, %v1596
          %v1662 = vadd.f32 %v1654, %v1599
          %v1663 = vadd.f32 %v1655, %v1601
          %v1664 = vadd.f32 %v1656, %v1604
          %v1665 = vadd.f32 %v1657, %v1606
          %1666 = vst [vmem:[#allocation4] sm:$0xff] %v1658
          %1667 = vst [vmem:[#allocation4 + $0x8] sm:$0xff] %v1659
          %1668 = vst [vmem:[#allocation4 + $0x10] sm:$0xff] %v1660
          %1669 = vst [vmem:[#allocation4 + $0x18] sm:$0xff] %v1661
          %1670 = vst [vmem:[#allocation4 + $0x20] sm:$0xff] %v1662
          %1671 = vst [vmem:[#allocation4 + $0x28] sm:$0xff] %v1663
          %1672 = vst [vmem:[#allocation4 + $0x30] sm:$0xff] %v1664
          %1673 = vst [vmem:[#allocation4 + $0x38] sm:$0xff] %v1665
        $region104: #{tpu_custom_call.1} parent=59 // pred_fallthru
          _
        %p1674 = scmp.eq.s32.totalorder %s735, 1
        // Predicated region
        $region105: #{tpu_custom_call.1} parent=59 // pred_check
          %p1675 = pneg %p1674
        $region106: #{tpu_custom_call.1} parent=59 // pred_check_branch
          %1677 = sbr.rel (%p1675) target = $region108
        $region107: #{tpu_custom_call.1} parent=59 // pred_region
          %s1678 = ssub.s32 128, %s723
          %s1679 = scalar_lea.vmem [#allocation3], %s1678
          %v1680 = vld [vmem:[%s1679] sm:$0xff]
          %v1681 = vld [vmem:[%s1679 + $0x8] sm:$0xff]
          %v1682 = vld [vmem:[%s1679 + $0x10] sm:$0xff]
          %v1683 = vld [vmem:[%s1679 + $0x18] sm:$0xff]
          %v1684 = vld [vmem:[%s1679 + $0x120] sm:$0xff]
          %v1685 = vld [vmem:[%s1679 + $0x128] sm:$0xff]
          %v1686 = vld [vmem:[%s1679 + $0x130] sm:$0xff]
          %v1687 = vld [vmem:[%s1679 + $0x138] sm:$0xff]
          %v1688 = vpack.c.bf16 %v1681, %v1680
          %v1689 = vpack.c.bf16 %v1683, %v1682
          %v1690 = vpack.c.bf16 %v1685, %v1684
          %v1691 = vpack.c.bf16 %v1687, %v1686
          %v1692 = vld [vmem:[%s456] sm:$0xff]
          %v1693 = vld [vmem:[%s456 + $0x8] sm:$0xff]
          %v1694 = vld [vmem:[%s456 + $0x10] sm:$0xff]
          %v1695 = vld [vmem:[%s456 + $0x18] sm:$0xff]
          %v1696 = vld [vmem:[%s456 + $0x20] sm:$0xff]
          %v1697 = vld [vmem:[%s456 + $0x28] sm:$0xff]
          %v1698 = vld [vmem:[%s456 + $0x30] sm:$0xff]
          %v1699 = vld [vmem:[%s456 + $0x38] sm:$0xff]
          %v1700 = vld [vmem:[%s456 + $0x40] sm:$0xff]
          %v1701 = vld [vmem:[%s456 + $0x48] sm:$0xff]
          %v1702 = vld [vmem:[%s456 + $0x50] sm:$0xff]
          %v1703 = vld [vmem:[%s456 + $0x58] sm:$0xff]
          %v1704 = vld [vmem:[%s456 + $0x60] sm:$0xff]
          %v1705 = vld [vmem:[%s456 + $0x68] sm:$0xff]
          %v1706 = vld [vmem:[%s456 + $0x70] sm:$0xff]
          %v1707 = vld [vmem:[%s456 + $0x78] sm:$0xff]
          %v1708 = vld [vmem:[#allocation3 + $0x80] sm:$0xff]
          %v1709 = vld [vmem:[#allocation3 + $0x88] sm:$0xff]
          %v1710 = vld [vmem:[#allocation3 + $0x90] sm:$0xff]
          %v1711 = vld [vmem:[#allocation3 + $0x98] sm:$0xff]
          %v1712 = vld [vmem:[#allocation3 + $0x1a0] sm:$0xff]
          %v1713 = vld [vmem:[#allocation3 + $0x1a8] sm:$0xff]
          %v1714 = vld [vmem:[#allocation3 + $0x1b0] sm:$0xff]
          %v1715 = vld [vmem:[#allocation3 + $0x1b8] sm:$0xff]
          %v1716 = vpack.c.bf16 %v1709, %v1708
          %v1717 = vpack.c.bf16 %v1711, %v1710
          %v1718 = vpack.c.bf16 %v1713, %v1712
          %v1719 = vpack.c.bf16 %v1715, %v1714
          %s1720 = scalar_lea.vmem %s456, 128 [#allocation11]
          %v1721 = vld [vmem:[%s1720] sm:$0xff]
          %v1722 = vld [vmem:[%s1720 + $0x8] sm:$0xff]
          %v1723 = vld [vmem:[%s1720 + $0x10] sm:$0xff]
          %v1724 = vld [vmem:[%s1720 + $0x18] sm:$0xff]
          %v1725 = vld [vmem:[%s1720 + $0x20] sm:$0xff]
          %v1726 = vld [vmem:[%s1720 + $0x28] sm:$0xff]
          %v1727 = vld [vmem:[%s1720 + $0x30] sm:$0xff]
          %v1728 = vld [vmem:[%s1720 + $0x38] sm:$0xff]
          %v1729 = vld [vmem:[%s1720 + $0x40] sm:$0xff]
          %v1730 = vld [vmem:[%s1720 + $0x48] sm:$0xff]
          %v1731 = vld [vmem:[%s1720 + $0x50] sm:$0xff]
          %v1732 = vld [vmem:[%s1720 + $0x58] sm:$0xff]
          %v1733 = vld [vmem:[%s1720 + $0x60] sm:$0xff]
          %v1734 = vld [vmem:[%s1720 + $0x68] sm:$0xff]
          %v1735 = vld [vmem:[%s1720 + $0x70] sm:$0xff]
          %v1736 = vld [vmem:[%s1720 + $0x78] sm:$0xff]
          %v1753 = vunpack.c.l.b16 %v1721
          %v1754 = vunpack.c.h.b16 %v1721
          %v1755 = vunpack.c.l.b16 %v1722
          %v1756 = vunpack.c.h.b16 %v1722
          %v1757 = vunpack.c.l.b16 %v1723
          %v1758 = vunpack.c.h.b16 %v1723
          %v1759 = vunpack.c.l.b16 %v1724
          %v1760 = vunpack.c.h.b16 %v1724
          %v1761 = vunpack.c.l.b16 %v1725
          %v1762 = vunpack.c.h.b16 %v1725
          %v1763 = vunpack.c.l.b16 %v1726
          %v1764 = vunpack.c.h.b16 %v1726
          %v1765 = vunpack.c.l.b16 %v1727
          %v1766 = vunpack.c.h.b16 %v1727
          %v1767 = vunpack.c.l.b16 %v1728
          %v1768 = vunpack.c.h.b16 %v1728
          %v1769 = vunpack.c.l.b16 %v1729
          %v1770 = vunpack.c.h.b16 %v1729
          %v1771 = vunpack.c.l.b16 %v1730
          %v1772 = vunpack.c.h.b16 %v1730
          %v1773 = vunpack.c.l.b16 %v1731
          %v1774 = vunpack.c.h.b16 %v1731
          %v1775 = vunpack.c.l.b16 %v1732
          %v1776 = vunpack.c.h.b16 %v1732
          %v1777 = vunpack.c.l.b16 %v1733
          %v1778 = vunpack.c.h.b16 %v1733
          %v1779 = vunpack.c.l.b16 %v1734
          %v1780 = vunpack.c.h.b16 %v1734
          %v1781 = vunpack.c.l.b16 %v1735
          %v1782 = vunpack.c.h.b16 %v1735
          %v1783 = vunpack.c.l.b16 %v1736
          %v1784 = vunpack.c.h.b16 %v1736
          %v1785 = vpack.c.b16 %v1755, %v1753
          %v1786 = vpack.c.b16 %v1756, %v1754
          %v1787 = vpack.c.b16 %v1759, %v1757
          %v1788 = vpack.c.b16 %v1760, %v1758
          %v1789 = vpack.c.b16 %v1763, %v1761
          %v1790 = vpack.c.b16 %v1764, %v1762
          %v1791 = vpack.c.b16 %v1767, %v1765
          %v1792 = vpack.c.b16 %v1768, %v1766
          %v1793 = vpack.c.b16 %v1771, %v1769
          %v1794 = vpack.c.b16 %v1772, %v1770
          %v1795 = vpack.c.b16 %v1775, %v1773
          %v1796 = vpack.c.b16 %v1776, %v1774
          %v1797 = vpack.c.b16 %v1779, %v1777
          %v1798 = vpack.c.b16 %v1780, %v1778
          %v1799 = vpack.c.b16 %v1783, %v1781
          %v1800 = vpack.c.b16 %v1784, %v1782
          %1817 = vmatpush.bf16.msra.mxu0 %v1799
          %1818 = vmatpush.bf16.msra.mxu0 %v1797
          %1819 = vmatpush.bf16.msra.mxu0 %v1795
          %1820 = vmatpush.bf16.msra.mxu0 %v1793
          %1821 = vmatpush.bf16.msra.mxu0 %v1791
          %1822 = vmatpush.bf16.msra.mxu0 %v1789
          %1823 = vmatpush.bf16.msra.mxu0 %v1787
          %1824 = vmatpush.bf16.msra.mxu0 %v1785
          %1825 = vmatmul.bf16.gmra.mxu0 %v1716
          %v1826 = vpop.f32.mrf.mxu0
          %v1827 = vadd.f32 0.0, %v1826
          %v1828 = vpop.f32.mrf.mxu0
          %v1829 = vadd.f32 0.0, %v1828
          %1830 = vmatmul.bf16.gmra.mxu0 %v1717
          %v1831 = vpop.f32.mrf.mxu0
          %v1832 = vadd.f32 0.0, %v1831
          %v1833 = vpop.f32.mrf.mxu0
          %v1834 = vadd.f32 0.0, %v1833
          %1835 = vmatmul.bf16.gmra.mxu0 %v1718
          %v1836 = vpop.f32.mrf.mxu0
          %v1837 = vadd.f32 0.0, %v1836
          %v1838 = vpop.f32.mrf.mxu0
          %v1839 = vadd.f32 0.0, %v1838
          %1840 = vmatmul.bf16.gmra.mxu0 %v1719
          %v1841 = vpop.f32.mrf.mxu0
          %v1842 = vadd.f32 0.0, %v1841
          %v1843 = vpop.f32.mrf.mxu0
          %v1844 = vadd.f32 0.0, %v1843
          %1845 = vdwg.mxu0
          %1846 = vmatpush.bf16.msra.mxu0 %v1800
          %1847 = vmatpush.bf16.msra.mxu0 %v1798
          %1848 = vmatpush.bf16.msra.mxu0 %v1796
          %1849 = vmatpush.bf16.msra.mxu0 %v1794
          %1850 = vmatpush.bf16.msra.mxu0 %v1792
          %1851 = vmatpush.bf16.msra.mxu0 %v1790
          %1852 = vmatpush.bf16.msra.mxu0 %v1788
          %1853 = vmatpush.bf16.msra.mxu0 %v1786
          %1854 = vmatmul.bf16.gmra.mxu0 %v1716
          %v1855 = vpop.f32.mrf.mxu0
          %v1856 = vadd.f32 0.0, %v1855
          %v1857 = vpop.f32.mrf.mxu0
          %v1858 = vadd.f32 0.0, %v1857
          %1859 = vmatmul.bf16.gmra.mxu0 %v1717
          %v1860 = vpop.f32.mrf.mxu0
          %v1861 = vadd.f32 0.0, %v1860
          %v1862 = vpop.f32.mrf.mxu0
          %v1863 = vadd.f32 0.0, %v1862
          %1864 = vmatmul.bf16.gmra.mxu0 %v1718
          %v1865 = vpop.f32.mrf.mxu0
          %v1866 = vadd.f32 0.0, %v1865
          %v1867 = vpop.f32.mrf.mxu0
          %v1868 = vadd.f32 0.0, %v1867
          %1869 = vmatmul.bf16.gmra.mxu0 %v1719
          %v1870 = vpop.f32.mrf.mxu0
          %v1871 = vadd.f32 0.0, %v1870
          %v1872 = vpop.f32.mrf.mxu0
          %v1873 = vadd.f32 0.0, %v1872
          %1874 = vdwg.mxu0
          %v1891 = vunpack.c.l.b16 %v1692
          %v1892 = vunpack.c.h.b16 %v1692
          %v1893 = vunpack.c.l.b16 %v1693
          %v1894 = vunpack.c.h.b16 %v1693
          %v1895 = vunpack.c.l.b16 %v1694
          %v1896 = vunpack.c.h.b16 %v1694
          %v1897 = vunpack.c.l.b16 %v1695
          %v1898 = vunpack.c.h.b16 %v1695
          %v1899 = vunpack.c.l.b16 %v1696
          %v1900 = vunpack.c.h.b16 %v1696
          %v1901 = vunpack.c.l.b16 %v1697
          %v1902 = vunpack.c.h.b16 %v1697
          %v1903 = vunpack.c.l.b16 %v1698
          %v1904 = vunpack.c.h.b16 %v1698
          %v1905 = vunpack.c.l.b16 %v1699
          %v1906 = vunpack.c.h.b16 %v1699
          %v1907 = vunpack.c.l.b16 %v1700
          %v1908 = vunpack.c.h.b16 %v1700
          %v1909 = vunpack.c.l.b16 %v1701
          %v1910 = vunpack.c.h.b16 %v1701
          %v1911 = vunpack.c.l.b16 %v1702
          %v1912 = vunpack.c.h.b16 %v1702
          %v1913 = vunpack.c.l.b16 %v1703
          %v1914 = vunpack.c.h.b16 %v1703
          %v1915 = vunpack.c.l.b16 %v1704
          %v1916 = vunpack.c.h.b16 %v1704
          %v1917 = vunpack.c.l.b16 %v1705
          %v1918 = vunpack.c.h.b16 %v1705
          %v1919 = vunpack.c.l.b16 %v1706
          %v1920 = vunpack.c.h.b16 %v1706
          %v1921 = vunpack.c.l.b16 %v1707
          %v1922 = vunpack.c.h.b16 %v1707
          %v1923 = vpack.c.b16 %v1893, %v1891
          %v1924 = vpack.c.b16 %v1894, %v1892
          %v1925 = vpack.c.b16 %v1897, %v1895
          %v1926 = vpack.c.b16 %v1898, %v1896
          %v1927 = vpack.c.b16 %v1901, %v1899
          %v1928 = vpack.c.b16 %v1902, %v1900
          %v1929 = vpack.c.b16 %v1905, %v1903
          %v1930 = vpack.c.b16 %v1906, %v1904
          %v1931 = vpack.c.b16 %v1909, %v1907
          %v1932 = vpack.c.b16 %v1910, %v1908
          %v1933 = vpack.c.b16 %v1913, %v1911
          %v1934 = vpack.c.b16 %v1914, %v1912
          %v1935 = vpack.c.b16 %v1917, %v1915
          %v1936 = vpack.c.b16 %v1918, %v1916
          %v1937 = vpack.c.b16 %v1921, %v1919
          %v1938 = vpack.c.b16 %v1922, %v1920
          %1955 = vmatpush.bf16.msra.mxu0 %v1937
          %1956 = vmatpush.bf16.msra.mxu0 %v1935
          %1957 = vmatpush.bf16.msra.mxu0 %v1933
          %1958 = vmatpush.bf16.msra.mxu0 %v1931
          %1959 = vmatpush.bf16.msra.mxu0 %v1929
          %1960 = vmatpush.bf16.msra.mxu0 %v1927
          %1961 = vmatpush.bf16.msra.mxu0 %v1925
          %1962 = vmatpush.bf16.msra.mxu0 %v1923
          %1963 = vmatmul.bf16.gmra.mxu0 %v1688
          %v1964 = vpop.f32.mrf.mxu0
          %v1965 = vadd.f32 %v1827, %v1964
          %v1966 = vpop.f32.mrf.mxu0
          %v1967 = vadd.f32 %v1829, %v1966
          %1968 = vmatmul.bf16.gmra.mxu0 %v1689
          %v1969 = vpop.f32.mrf.mxu0
          %v1970 = vadd.f32 %v1832, %v1969
          %v1971 = vpop.f32.mrf.mxu0
          %v1972 = vadd.f32 %v1834, %v1971
          %1973 = vmatmul.bf16.gmra.mxu0 %v1690
          %v1974 = vpop.f32.mrf.mxu0
          %v1975 = vadd.f32 %v1837, %v1974
          %v1976 = vpop.f32.mrf.mxu0
          %v1977 = vadd.f32 %v1839, %v1976
          %1978 = vmatmul.bf16.gmra.mxu0 %v1691
          %v1979 = vpop.f32.mrf.mxu0
          %v1980 = vadd.f32 %v1842, %v1979
          %v1981 = vpop.f32.mrf.mxu0
          %v1982 = vadd.f32 %v1844, %v1981
          %1983 = vdwg.mxu0
          %1984 = vmatpush.bf16.msra.mxu0 %v1938
          %1985 = vmatpush.bf16.msra.mxu0 %v1936
          %1986 = vmatpush.bf16.msra.mxu0 %v1934
          %1987 = vmatpush.bf16.msra.mxu0 %v1932
          %1988 = vmatpush.bf16.msra.mxu0 %v1930
          %1989 = vmatpush.bf16.msra.mxu0 %v1928
          %1990 = vmatpush.bf16.msra.mxu0 %v1926
          %1991 = vmatpush.bf16.msra.mxu0 %v1924
          %1992 = vmatmul.bf16.gmra.mxu0 %v1688
          %v1993 = vpop.f32.mrf.mxu0
          %v1994 = vadd.f32 %v1856, %v1993
          %v1995 = vpop.f32.mrf.mxu0
          %v1996 = vadd.f32 %v1858, %v1995
          %1997 = vmatmul.bf16.gmra.mxu0 %v1689
          %v1998 = vpop.f32.mrf.mxu0
          %v1999 = vadd.f32 %v1861, %v1998
          %v2000 = vpop.f32.mrf.mxu0
          %v2001 = vadd.f32 %v1863, %v2000
          %2002 = vmatmul.bf16.gmra.mxu0 %v1690
          %v2003 = vpop.f32.mrf.mxu0
          %v2004 = vadd.f32 %v1866, %v2003
          %v2005 = vpop.f32.mrf.mxu0
          %v2006 = vadd.f32 %v1868, %v2005
          %2007 = vmatmul.bf16.gmra.mxu0 %v1691
          %v2008 = vpop.f32.mrf.mxu0
          %v2009 = vadd.f32 %v1871, %v2008
          %v2010 = vpop.f32.mrf.mxu0
          %v2011 = vadd.f32 %v1873, %v2010
          %2012 = vdwg.mxu0
          %s2013 = sadd.s32 %s723, 128
          %s2014 = scalar_lea.vmem [#allocation3], %s2013
          %v2015 = vld [vmem:[%s2014] sm:$0xff]
          %v2016 = vld [vmem:[%s2014 + $0x8] sm:$0xff]
          %v2017 = vld [vmem:[%s2014 + $0x10] sm:$0xff]
          %v2018 = vld [vmem:[%s2014 + $0x18] sm:$0xff]
          %v2019 = vld [vmem:[%s2014 + $0x120] sm:$0xff]
          %v2020 = vld [vmem:[%s2014 + $0x128] sm:$0xff]
          %v2021 = vld [vmem:[%s2014 + $0x130] sm:$0xff]
          %v2022 = vld [vmem:[%s2014 + $0x138] sm:$0xff]
          %v2023 = vpack.c.bf16 %v2016, %v2015
          %v2024 = vpack.c.bf16 %v2018, %v2017
          %v2025 = vpack.c.bf16 %v2020, %v2019
          %v2026 = vpack.c.bf16 %v2022, %v2021
          %s2027 = scalar_lea.vmem %s456, 256 [#allocation11]
          %v2028 = vld [vmem:[%s2027] sm:$0xff]
          %v2029 = vld [vmem:[%s2027 + $0x8] sm:$0xff]
          %v2030 = vld [vmem:[%s2027 + $0x10] sm:$0xff]
          %v2031 = vld [vmem:[%s2027 + $0x18] sm:$0xff]
          %v2032 = vld [vmem:[%s2027 + $0x20] sm:$0xff]
          %v2033 = vld [vmem:[%s2027 + $0x28] sm:$0xff]
          %v2034 = vld [vmem:[%s2027 + $0x30] sm:$0xff]
          %v2035 = vld [vmem:[%s2027 + $0x38] sm:$0xff]
          %v2036 = vld [vmem:[%s2027 + $0x40] sm:$0xff]
          %v2037 = vld [vmem:[%s2027 + $0x48] sm:$0xff]
          %v2038 = vld [vmem:[%s2027 + $0x50] sm:$0xff]
          %v2039 = vld [vmem:[%s2027 + $0x58] sm:$0xff]
          %v2040 = vld [vmem:[%s2027 + $0x60] sm:$0xff]
          %v2041 = vld [vmem:[%s2027 + $0x68] sm:$0xff]
          %v2042 = vld [vmem:[%s2027 + $0x70] sm:$0xff]
          %v2043 = vld [vmem:[%s2027 + $0x78] sm:$0xff]
          %v2060 = vunpack.c.l.b16 %v2028
          %v2061 = vunpack.c.h.b16 %v2028
          %v2062 = vunpack.c.l.b16 %v2029
          %v2063 = vunpack.c.h.b16 %v2029
          %v2064 = vunpack.c.l.b16 %v2030
          %v2065 = vunpack.c.h.b16 %v2030
          %v2066 = vunpack.c.l.b16 %v2031
          %v2067 = vunpack.c.h.b16 %v2031
          %v2068 = vunpack.c.l.b16 %v2032
          %v2069 = vunpack.c.h.b16 %v2032
          %v2070 = vunpack.c.l.b16 %v2033
          %v2071 = vunpack.c.h.b16 %v2033
          %v2072 = vunpack.c.l.b16 %v2034
          %v2073 = vunpack.c.h.b16 %v2034
          %v2074 = vunpack.c.l.b16 %v2035
          %v2075 = vunpack.c.h.b16 %v2035
          %v2076 = vunpack.c.l.b16 %v2036
          %v2077 = vunpack.c.h.b16 %v2036
          %v2078 = vunpack.c.l.b16 %v2037
          %v2079 = vunpack.c.h.b16 %v2037
          %v2080 = vunpack.c.l.b16 %v2038
          %v2081 = vunpack.c.h.b16 %v2038
          %v2082 = vunpack.c.l.b16 %v2039
          %v2083 = vunpack.c.h.b16 %v2039
          %v2084 = vunpack.c.l.b16 %v2040
          %v2085 = vunpack.c.h.b16 %v2040
          %v2086 = vunpack.c.l.b16 %v2041
          %v2087 = vunpack.c.h.b16 %v2041
          %v2088 = vunpack.c.l.b16 %v2042
          %v2089 = vunpack.c.h.b16 %v2042
          %v2090 = vunpack.c.l.b16 %v2043
          %v2091 = vunpack.c.h.b16 %v2043
          %v2092 = vpack.c.b16 %v2062, %v2060
          %v2093 = vpack.c.b16 %v2063, %v2061
          %v2094 = vpack.c.b16 %v2066, %v2064
          %v2095 = vpack.c.b16 %v2067, %v2065
          %v2096 = vpack.c.b16 %v2070, %v2068
          %v2097 = vpack.c.b16 %v2071, %v2069
          %v2098 = vpack.c.b16 %v2074, %v2072
          %v2099 = vpack.c.b16 %v2075, %v2073
          %v2100 = vpack.c.b16 %v2078, %v2076
          %v2101 = vpack.c.b16 %v2079, %v2077
          %v2102 = vpack.c.b16 %v2082, %v2080
          %v2103 = vpack.c.b16 %v2083, %v2081
          %v2104 = vpack.c.b16 %v2086, %v2084
          %v2105 = vpack.c.b16 %v2087, %v2085
          %v2106 = vpack.c.b16 %v2090, %v2088
          %v2107 = vpack.c.b16 %v2091, %v2089
          %2124 = vmatpush.bf16.msra.mxu0 %v2106
          %2125 = vmatpush.bf16.msra.mxu0 %v2104
          %2126 = vmatpush.bf16.msra.mxu0 %v2102
          %2127 = vmatpush.bf16.msra.mxu0 %v2100
          %2128 = vmatpush.bf16.msra.mxu0 %v2098
          %2129 = vmatpush.bf16.msra.mxu0 %v2096
          %2130 = vmatpush.bf16.msra.mxu0 %v2094
          %2131 = vmatpush.bf16.msra.mxu0 %v2092
          %2132 = vmatmul.bf16.gmra.mxu0 %v2023
          %v2133 = vpop.f32.mrf.mxu0
          %v2134 = vadd.f32 0.0, %v2133
          %v2135 = vpop.f32.mrf.mxu0
          %v2136 = vadd.f32 0.0, %v2135
          %2137 = vmatmul.bf16.gmra.mxu0 %v2024
          %v2138 = vpop.f32.mrf.mxu0
          %v2139 = vadd.f32 0.0, %v2138
          %v2140 = vpop.f32.mrf.mxu0
          %v2141 = vadd.f32 0.0, %v2140
          %2142 = vmatmul.bf16.gmra.mxu0 %v2025
          %v2143 = vpop.f32.mrf.mxu0
          %v2144 = vadd.f32 0.0, %v2143
          %v2145 = vpop.f32.mrf.mxu0
          %v2146 = vadd.f32 0.0, %v2145
          %2147 = vmatmul.bf16.gmra.mxu0 %v2026
          %v2148 = vpop.f32.mrf.mxu0
          %v2149 = vadd.f32 0.0, %v2148
          %v2150 = vpop.f32.mrf.mxu0
          %v2151 = vadd.f32 0.0, %v2150
          %2152 = vdwg.mxu0
          %2153 = vmatpush.bf16.msra.mxu0 %v2107
          %2154 = vmatpush.bf16.msra.mxu0 %v2105
          %2155 = vmatpush.bf16.msra.mxu0 %v2103
          %2156 = vmatpush.bf16.msra.mxu0 %v2101
          %2157 = vmatpush.bf16.msra.mxu0 %v2099
          %2158 = vmatpush.bf16.msra.mxu0 %v2097
          %2159 = vmatpush.bf16.msra.mxu0 %v2095
          %2160 = vmatpush.bf16.msra.mxu0 %v2093
          %2161 = vmatmul.bf16.gmra.mxu0 %v2023
          %v2162 = vpop.f32.mrf.mxu0
          %v2163 = vadd.f32 0.0, %v2162
          %v2164 = vpop.f32.mrf.mxu0
          %v2165 = vadd.f32 0.0, %v2164
          %2166 = vmatmul.bf16.gmra.mxu0 %v2024
          %v2167 = vpop.f32.mrf.mxu0
          %v2168 = vadd.f32 0.0, %v2167
          %v2169 = vpop.f32.mrf.mxu0
          %v2170 = vadd.f32 0.0, %v2169
          %2171 = vmatmul.bf16.gmra.mxu0 %v2025
          %v2172 = vpop.f32.mrf.mxu0
          %v2173 = vadd.f32 0.0, %v2172
          %v2174 = vpop.f32.mrf.mxu0
          %v2175 = vadd.f32 0.0, %v2174
          %2176 = vmatmul.bf16.gmra.mxu0 %v2026
          %v2177 = vpop.f32.mrf.mxu0
          %v2178 = vadd.f32 0.0, %v2177
          %v2179 = vpop.f32.mrf.mxu0
          %v2180 = vadd.f32 0.0, %v2179
          %2181 = vdwg.mxu0
          %v2182 = vadd.f32 %v1965, %v2134
          %v2183 = vadd.f32 %v1994, %v2163
          %v2184 = vadd.f32 %v1967, %v2136
          %v2185 = vadd.f32 %v1996, %v2165
          %v2186 = vadd.f32 %v1970, %v2139
          %v2187 = vadd.f32 %v1999, %v2168
          %v2188 = vadd.f32 %v1972, %v2141
          %v2189 = vadd.f32 %v2001, %v2170
          %v2190 = vadd.f32 %v1975, %v2144
          %v2191 = vadd.f32 %v2004, %v2173
          %v2192 = vadd.f32 %v1977, %v2146
          %v2193 = vadd.f32 %v2006, %v2175
          %v2194 = vadd.f32 %v1980, %v2149
          %v2195 = vadd.f32 %v2009, %v2178
          %v2196 = vadd.f32 %v1982, %v2151
          %v2197 = vadd.f32 %v2011, %v2180
          %v2198 = vld [vmem:[%s466] sm:$0x3]
          %v2200 = vperm.slane %v2198, 0
          %v2201 = vperm.slane %v2198, 1
          %v2204 = vadd.f32 %v2182, %v2200
          %v2205 = vadd.f32 %v2183, %v2201
          %v2206 = vadd.f32 %v2184, %v2200
          %v2207 = vadd.f32 %v2185, %v2201
          %v2208 = vadd.f32 %v2186, %v2200
          %v2209 = vadd.f32 %v2187, %v2201
          %v2210 = vadd.f32 %v2188, %v2200
          %v2211 = vadd.f32 %v2189, %v2201
          %v2212 = vadd.f32 %v2190, %v2200
          %v2213 = vadd.f32 %v2191, %v2201
          %v2214 = vadd.f32 %v2192, %v2200
          %v2215 = vadd.f32 %v2193, %v2201
          %v2216 = vadd.f32 %v2194, %v2200
          %v2217 = vadd.f32 %v2195, %v2201
          %v2218 = vadd.f32 %v2196, %v2200
          %v2219 = vadd.f32 %v2197, %v2201
          %v2220 = vtanh.pop %v2204
          %v2221 = vtanh.pop %v2206
          %v2222 = vtanh.pop %v2208
          %v2223 = vtanh.pop %v2210
          %v2224 = vtanh.pop %v2212
          %v2225 = vtanh.pop %v2214
          %v2226 = vtanh.pop %v2216
          %v2227 = vtanh.pop %v2218
          %v2228 = vxor.u32 %v2205, 2147483648
          %v2229 = vxor.u32 %v2207, 2147483648
          %v2230 = vxor.u32 %v2209, 2147483648
          %v2231 = vxor.u32 %v2211, 2147483648
          %v2232 = vxor.u32 %v2213, 2147483648
          %v2233 = vxor.u32 %v2215, 2147483648
          %v2234 = vxor.u32 %v2217, 2147483648
          %v2235 = vxor.u32 %v2219, 2147483648
          %v2236 = vmul.f32 %v2228, 1.442695
          %v2237 = vpow.pop %v2236
          %v2238 = vmul.f32 %v2229, 1.442695
          %v2239 = vpow.pop %v2238
          %v2240 = vmul.f32 %v2230, 1.442695
          %v2241 = vpow.pop %v2240
          %v2242 = vmul.f32 %v2231, 1.442695
          %v2243 = vpow.pop %v2242
          %v2244 = vmul.f32 %v2232, 1.442695
          %v2245 = vpow.pop %v2244
          %v2246 = vmul.f32 %v2233, 1.442695
          %v2247 = vpow.pop %v2246
          %v2248 = vmul.f32 %v2234, 1.442695
          %v2249 = vpow.pop %v2248
          %v2250 = vmul.f32 %v2235, 1.442695
          %v2251 = vpow.pop %v2250
          %v2252 = vadd.f32 %v2237, 1.0
          %v2253 = vadd.f32 %v2239, 1.0
          %v2254 = vadd.f32 %v2241, 1.0
          %v2255 = vadd.f32 %v2243, 1.0
          %v2256 = vadd.f32 %v2245, 1.0
          %v2257 = vadd.f32 %v2247, 1.0
          %v2258 = vadd.f32 %v2249, 1.0
          %v2259 = vadd.f32 %v2251, 1.0
          %v2260 = vrcp.pop %v2252
          %v2261 = vmul.f32 %v2252, %v2260
          %v2262 = vsub.f32 1.0, %v2261
          %v2263 = vmul.f32 %v2260, %v2262
          %v2264 = vadd.f32 %v2260, %v2263
          %vm2265 = vweird.f32 %v2252
          %vm2266 = vweird.f32 %v2260
          %vm2267 = vmor %vm2265, %vm2266
          %v2268 = vsel %vm2267, %v2260, %v2264
          %v2269 = vand.u32 2147483647, %v2252
          %vm2270 = vcmp.eq.f32.partialorder %v2269, 8.507059e+37
          %v2271 = vand.u32 %v2252, 2147483648
          %v2272 = vor.u32 1.1754944e-38, %v2271
          %v2273 = vsel %vm2270, %v2272, %v2268
          %v2274 = vmul.f32 1.0, %v2273
          %v2275 = vrcp.pop %v2253
          %v2276 = vmul.f32 %v2253, %v2275
          %v2277 = vsub.f32 1.0, %v2276
          %v2278 = vmul.f32 %v2275, %v2277
          %v2279 = vadd.f32 %v2275, %v2278
          %vm2280 = vweird.f32 %v2253
          %vm2281 = vweird.f32 %v2275
          %vm2282 = vmor %vm2280, %vm2281
          %v2283 = vsel %vm2282, %v2275, %v2279
          %v2284 = vand.u32 2147483647, %v2253
          %vm2285 = vcmp.eq.f32.partialorder %v2284, 8.507059e+37
          %v2286 = vand.u32 %v2253, 2147483648
          %v2287 = vor.u32 1.1754944e-38, %v2286
          %v2288 = vsel %vm2285, %v2287, %v2283
          %v2289 = vmul.f32 1.0, %v2288
          %v2290 = vrcp.pop %v2254
          %v2291 = vmul.f32 %v2254, %v2290
          %v2292 = vsub.f32 1.0, %v2291
          %v2293 = vmul.f32 %v2290, %v2292
          %v2294 = vadd.f32 %v2290, %v2293
          %vm2295 = vweird.f32 %v2254
          %vm2296 = vweird.f32 %v2290
          %vm2297 = vmor %vm2295, %vm2296
          %v2298 = vsel %vm2297, %v2290, %v2294
          %v2299 = vand.u32 2147483647, %v2254
          %vm2300 = vcmp.eq.f32.partialorder %v2299, 8.507059e+37
          %v2301 = vand.u32 %v2254, 2147483648
          %v2302 = vor.u32 1.1754944e-38, %v2301
          %v2303 = vsel %vm2300, %v2302, %v2298
          %v2304 = vmul.f32 1.0, %v2303
          %v2305 = vrcp.pop %v2255
          %v2306 = vmul.f32 %v2255, %v2305
          %v2307 = vsub.f32 1.0, %v2306
          %v2308 = vmul.f32 %v2305, %v2307
          %v2309 = vadd.f32 %v2305, %v2308
          %vm2310 = vweird.f32 %v2255
          %vm2311 = vweird.f32 %v2305
          %vm2312 = vmor %vm2310, %vm2311
          %v2313 = vsel %vm2312, %v2305, %v2309
          %v2314 = vand.u32 2147483647, %v2255
          %vm2315 = vcmp.eq.f32.partialorder %v2314, 8.507059e+37
          %v2316 = vand.u32 %v2255, 2147483648
          %v2317 = vor.u32 1.1754944e-38, %v2316
          %v2318 = vsel %vm2315, %v2317, %v2313
          %v2319 = vmul.f32 1.0, %v2318
          %v2320 = vrcp.pop %v2256
          %v2321 = vmul.f32 %v2256, %v2320
          %v2322 = vsub.f32 1.0, %v2321
          %v2323 = vmul.f32 %v2320, %v2322
          %v2324 = vadd.f32 %v2320, %v2323
          %vm2325 = vweird.f32 %v2256
          %vm2326 = vweird.f32 %v2320
          %vm2327 = vmor %vm2325, %vm2326
          %v2328 = vsel %vm2327, %v2320, %v2324
          %v2329 = vand.u32 2147483647, %v2256
          %vm2330 = vcmp.eq.f32.partialorder %v2329, 8.507059e+37
          %v2331 = vand.u32 %v2256, 2147483648
          %v2332 = vor.u32 1.1754944e-38, %v2331
          %v2333 = vsel %vm2330, %v2332, %v2328
          %v2334 = vmul.f32 1.0, %v2333
          %v2335 = vrcp.pop %v2257
          %v2336 = vmul.f32 %v2257, %v2335
          %v2337 = vsub.f32 1.0, %v2336
          %v2338 = vmul.f32 %v2335, %v2337
          %v2339 = vadd.f32 %v2335, %v2338
          %vm2340 = vweird.f32 %v2257
          %vm2341 = vweird.f32 %v2335
          %vm2342 = vmor %vm2340, %vm2341
          %v2343 = vsel %vm2342, %v2335, %v2339
          %v2344 = vand.u32 2147483647, %v2257
          %vm2345 = vcmp.eq.f32.partialorder %v2344, 8.507059e+37
          %v2346 = vand.u32 %v2257, 2147483648
          %v2347 = vor.u32 1.1754944e-38, %v2346
          %v2348 = vsel %vm2345, %v2347, %v2343
          %v2349 = vmul.f32 1.0, %v2348
          %v2350 = vrcp.pop %v2258
          %v2351 = vmul.f32 %v2258, %v2350
          %v2352 = vsub.f32 1.0, %v2351
          %v2353 = vmul.f32 %v2350, %v2352
          %v2354 = vadd.f32 %v2350, %v2353
          %vm2355 = vweird.f32 %v2258
          %vm2356 = vweird.f32 %v2350
          %vm2357 = vmor %vm2355, %vm2356
          %v2358 = vsel %vm2357, %v2350, %v2354
          %v2359 = vand.u32 2147483647, %v2258
          %vm2360 = vcmp.eq.f32.partialorder %v2359, 8.507059e+37
          %v2361 = vand.u32 %v2258, 2147483648
          %v2362 = vor.u32 1.1754944e-38, %v2361
          %v2363 = vsel %vm2360, %v2362, %v2358
          %v2364 = vmul.f32 1.0, %v2363
          %v2365 = vrcp.pop %v2259
          %v2366 = vmul.f32 %v2259, %v2365
          %v2367 = vsub.f32 1.0, %v2366
          %v2368 = vmul.f32 %v2365, %v2367
          %v2369 = vadd.f32 %v2365, %v2368
          %vm2370 = vweird.f32 %v2259
          %vm2371 = vweird.f32 %v2365
          %vm2372 = vmor %vm2370, %vm2371
          %v2373 = vsel %vm2372, %v2365, %v2369
          %v2374 = vand.u32 2147483647, %v2259
          %vm2375 = vcmp.eq.f32.partialorder %v2374, 8.507059e+37
          %v2376 = vand.u32 %v2259, 2147483648
          %v2377 = vor.u32 1.1754944e-38, %v2376
          %v2378 = vsel %vm2375, %v2377, %v2373
          %v2379 = vmul.f32 1.0, %v2378
          %v2380 = vmul.f32 %v2220, %v2274
          %v2381 = vmul.f32 %v2221, %v2289
          %v2382 = vmul.f32 %v2222, %v2304
          %v2383 = vmul.f32 %v2223, %v2319
          %v2384 = vmul.f32 %v2224, %v2334
          %v2385 = vmul.f32 %v2225, %v2349
          %v2386 = vmul.f32 %v2226, %v2364
          %v2387 = vmul.f32 %v2227, %v2379
          %v2388 = vpack.c.bf16 %v2381, %v2380
          %v2389 = vpack.c.bf16 %v2383, %v2382
          %v2390 = vpack.c.bf16 %v2385, %v2384
          %v2391 = vpack.c.bf16 %v2387, %v2386
          %v2392 = vld [vmem:[%s476] sm:$0xff]
          %v2393 = vld [vmem:[%s476 + $0x8] sm:$0xff]
          %v2394 = vld [vmem:[%s476 + $0x10] sm:$0xff]
          %v2395 = vld [vmem:[%s476 + $0x18] sm:$0xff]
          %v2396 = vld [vmem:[%s476 + $0x20] sm:$0xff]
          %v2397 = vld [vmem:[%s476 + $0x28] sm:$0xff]
          %v2398 = vld [vmem:[%s476 + $0x30] sm:$0xff]
          %v2399 = vld [vmem:[%s476 + $0x38] sm:$0xff]
          %v2400 = vld [vmem:[%s476 + $0x40] sm:$0xff]
          %v2401 = vld [vmem:[%s476 + $0x48] sm:$0xff]
          %v2402 = vld [vmem:[%s476 + $0x50] sm:$0xff]
          %v2403 = vld [vmem:[%s476 + $0x58] sm:$0xff]
          %v2404 = vld [vmem:[%s476 + $0x60] sm:$0xff]
          %v2405 = vld [vmem:[%s476 + $0x68] sm:$0xff]
          %v2406 = vld [vmem:[%s476 + $0x70] sm:$0xff]
          %v2407 = vld [vmem:[%s476 + $0x78] sm:$0xff]
          %v2424 = vunpack.c.l.b16 %v2392
          %v2425 = vunpack.c.h.b16 %v2392
          %v2426 = vunpack.c.l.b16 %v2393
          %v2427 = vunpack.c.h.b16 %v2393
          %v2428 = vunpack.c.l.b16 %v2394
          %v2429 = vunpack.c.h.b16 %v2394
          %v2430 = vunpack.c.l.b16 %v2395
          %v2431 = vunpack.c.h.b16 %v2395
          %v2432 = vunpack.c.l.b16 %v2396
          %v2433 = vunpack.c.h.b16 %v2396
          %v2434 = vunpack.c.l.b16 %v2397
          %v2435 = vunpack.c.h.b16 %v2397
          %v2436 = vunpack.c.l.b16 %v2398
          %v2437 = vunpack.c.h.b16 %v2398
          %v2438 = vunpack.c.l.b16 %v2399
          %v2439 = vunpack.c.h.b16 %v2399
          %v2440 = vunpack.c.l.b16 %v2400
          %v2441 = vunpack.c.h.b16 %v2400
          %v2442 = vunpack.c.l.b16 %v2401
          %v2443 = vunpack.c.h.b16 %v2401
          %v2444 = vunpack.c.l.b16 %v2402
          %v2445 = vunpack.c.h.b16 %v2402
          %v2446 = vunpack.c.l.b16 %v2403
          %v2447 = vunpack.c.h.b16 %v2403
          %v2448 = vunpack.c.l.b16 %v2404
          %v2449 = vunpack.c.h.b16 %v2404
          %v2450 = vunpack.c.l.b16 %v2405
          %v2451 = vunpack.c.h.b16 %v2405
          %v2452 = vunpack.c.l.b16 %v2406
          %v2453 = vunpack.c.h.b16 %v2406
          %v2454 = vunpack.c.l.b16 %v2407
          %v2455 = vunpack.c.h.b16 %v2407
          %v2456 = vpack.c.b16 %v2426, %v2424
          %v2457 = vpack.c.b16 %v2427, %v2425
          %v2458 = vpack.c.b16 %v2430, %v2428
          %v2459 = vpack.c.b16 %v2431, %v2429
          %v2460 = vpack.c.b16 %v2434, %v2432
          %v2461 = vpack.c.b16 %v2435, %v2433
          %v2462 = vpack.c.b16 %v2438, %v2436
          %v2463 = vpack.c.b16 %v2439, %v2437
          %v2464 = vpack.c.b16 %v2442, %v2440
          %v2465 = vpack.c.b16 %v2443, %v2441
          %v2466 = vpack.c.b16 %v2446, %v2444
          %v2467 = vpack.c.b16 %v2447, %v2445
          %v2468 = vpack.c.b16 %v2450, %v2448
          %v2469 = vpack.c.b16 %v2451, %v2449
          %v2470 = vpack.c.b16 %v2454, %v2452
          %v2471 = vpack.c.b16 %v2455, %v2453
          %2488 = vmatpush.bf16.msra.mxu0 %v2470
          %2489 = vmatpush.bf16.msra.mxu0 %v2468
          %2490 = vmatpush.bf16.msra.mxu0 %v2466
          %2491 = vmatpush.bf16.msra.mxu0 %v2464
          %2492 = vmatpush.bf16.msra.mxu0 %v2462
          %2493 = vmatpush.bf16.msra.mxu0 %v2460
          %2494 = vmatpush.bf16.msra.mxu0 %v2458
          %2495 = vmatpush.bf16.msra.mxu0 %v2456
          %2496 = vmatmul.bf16.gmra.mxu0 %v2388
          %v2497 = vpop.f32.mrf.mxu0
          %v2498 = vadd.f32 0.0, %v2497
          %v2499 = vpop.f32.mrf.mxu0
          %v2500 = vadd.f32 0.0, %v2499
          %2501 = vmatmul.bf16.gmra.mxu0 %v2389
          %v2502 = vpop.f32.mrf.mxu0
          %v2503 = vadd.f32 0.0, %v2502
          %v2504 = vpop.f32.mrf.mxu0
          %v2505 = vadd.f32 0.0, %v2504
          %2506 = vmatmul.bf16.gmra.mxu0 %v2390
          %v2507 = vpop.f32.mrf.mxu0
          %v2508 = vadd.f32 0.0, %v2507
          %v2509 = vpop.f32.mrf.mxu0
          %v2510 = vadd.f32 0.0, %v2509
          %2511 = vmatmul.bf16.gmra.mxu0 %v2391
          %v2512 = vpop.f32.mrf.mxu0
          %v2513 = vadd.f32 0.0, %v2512
          %v2514 = vpop.f32.mrf.mxu0
          %v2515 = vadd.f32 0.0, %v2514
          %2516 = vdwg.mxu0
          %2517 = vmatpush.bf16.msra.mxu0 %v2471
          %2518 = vmatpush.bf16.msra.mxu0 %v2469
          %2519 = vmatpush.bf16.msra.mxu0 %v2467
          %2520 = vmatpush.bf16.msra.mxu0 %v2465
          %2521 = vmatpush.bf16.msra.mxu0 %v2463
          %2522 = vmatpush.bf16.msra.mxu0 %v2461
          %2523 = vmatpush.bf16.msra.mxu0 %v2459
          %2524 = vmatpush.bf16.msra.mxu0 %v2457
          %2525 = vmatmul.bf16.gmra.mxu0 %v2388
          %v2526 = vpop.f32.mrf.mxu0
          %v2527 = vadd.f32 0.0, %v2526
          %v2528 = vpop.f32.mrf.mxu0
          %v2529 = vadd.f32 0.0, %v2528
          %2530 = vmatmul.bf16.gmra.mxu0 %v2389
          %v2531 = vpop.f32.mrf.mxu0
          %v2532 = vadd.f32 0.0, %v2531
          %v2533 = vpop.f32.mrf.mxu0
          %v2534 = vadd.f32 0.0, %v2533
          %2535 = vmatmul.bf16.gmra.mxu0 %v2390
          %v2536 = vpop.f32.mrf.mxu0
          %v2537 = vadd.f32 0.0, %v2536
          %v2538 = vpop.f32.mrf.mxu0
          %v2539 = vadd.f32 0.0, %v2538
          %2540 = vmatmul.bf16.gmra.mxu0 %v2391
          %v2541 = vpop.f32.mrf.mxu0
          %v2542 = vadd.f32 0.0, %v2541
          %v2543 = vpop.f32.mrf.mxu0
          %v2544 = vadd.f32 0.0, %v2543
          %2545 = vdwg.mxu0
          %v2546 = vlaneseq
          %v2547 = vshrl.u32 %v2546, 7
          %v2548 = vadd.s32 %v2547, 8
          %v2549 = vadd.s32 %v2547, 16
          %v2550 = vadd.s32 %v2547, 24
          %v2551 = vstv %s540
          %vm2552 = vcmp.lt.s32.totalorder %v2547, %v2551
          %vm2553 = vcmp.lt.s32.totalorder %v2548, %v2551
          %vm2554 = vcmp.lt.s32.totalorder %v2549, %v2551
          %vm2555 = vcmp.lt.s32.totalorder %v2550, %v2551
          %v2556 = vsel %vm2552, 1, 0
          %v2557 = vsel %vm2553, 1, 0
          %v2558 = vsel %vm2554, 1, 0
          %v2559 = vsel %vm2555, 1, 0
          %v2560 = vcvt.s32.f32 %v2556
          %v2561 = vcvt.s32.f32 %v2557
          %v2562 = vcvt.s32.f32 %v2558
          %v2563 = vcvt.s32.f32 %v2559
          %v2564 = vadd.f32 %v1708, %v2498
          %v2565 = vadd.f32 %v1709, %v2500
          %v2566 = vadd.f32 %v1710, %v2503
          %v2567 = vadd.f32 %v1711, %v2505
          %v2568 = vadd.f32 %v1712, %v2508
          %v2569 = vadd.f32 %v1713, %v2510
          %v2570 = vadd.f32 %v1714, %v2513
          %v2571 = vadd.f32 %v1715, %v2515
          %v2572 = vmul.f32 %v2564, %v2560
          %v2573 = vmul.f32 %v2565, %v2561
          %v2574 = vmul.f32 %v2566, %v2562
          %v2575 = vmul.f32 %v2567, %v2563
          %v2576 = vmul.f32 %v2568, %v2560
          %v2577 = vmul.f32 %v2569, %v2561
          %v2578 = vmul.f32 %v2570, %v2562
          %v2579 = vmul.f32 %v2571, %v2563
          %2580 = vst [vmem:[#allocation2 + $0x80] sm:$0xff] %v2572
          %2581 = vst [vmem:[#allocation2 + $0x88] sm:$0xff] %v2573
          %2582 = vst [vmem:[#allocation2 + $0x90] sm:$0xff] %v2574
          %2583 = vst [vmem:[#allocation2 + $0x98] sm:$0xff] %v2575
          %2584 = vst [vmem:[#allocation2 + $0x1a0] sm:$0xff] %v2576
          %2585 = vst [vmem:[#allocation2 + $0x1a8] sm:$0xff] %v2577
          %2586 = vst [vmem:[#allocation2 + $0x1b0] sm:$0xff] %v2578
          %2587 = vst [vmem:[#allocation2 + $0x1b8] sm:$0xff] %v2579
          %v2588 = vld [vmem:[#allocation4] sm:$0xff]
          %v2589 = vld [vmem:[#allocation4 + $0x8] sm:$0xff]
          %v2590 = vld [vmem:[#allocation4 + $0x10] sm:$0xff]
          %v2591 = vld [vmem:[#allocation4 + $0x18] sm:$0xff]
          %v2592 = vld [vmem:[#allocation4 + $0x20] sm:$0xff]
          %v2593 = vld [vmem:[#allocation4 + $0x28] sm:$0xff]
          %v2594 = vld [vmem:[#allocation4 + $0x30] sm:$0xff]
          %v2595 = vld [vmem:[#allocation4 + $0x38] sm:$0xff]
          %v2596 = vadd.f32 %v2588, %v2527
          %v2597 = vadd.f32 %v2589, %v2529
          %v2598 = vadd.f32 %v2590, %v2532
          %v2599 = vadd.f32 %v2591, %v2534
          %v2600 = vadd.f32 %v2592, %v2537
          %v2601 = vadd.f32 %v2593, %v2539
          %v2602 = vadd.f32 %v2594, %v2542
          %v2603 = vadd.f32 %v2595, %v2544
          %2604 = vst [vmem:[#allocation4] sm:$0xff] %v2596
          %2605 = vst [vmem:[#allocation4 + $0x8] sm:$0xff] %v2597
          %2606 = vst [vmem:[#allocation4 + $0x10] sm:$0xff] %v2598
          %2607 = vst [vmem:[#allocation4 + $0x18] sm:$0xff] %v2599
          %2608 = vst [vmem:[#allocation4 + $0x20] sm:$0xff] %v2600
          %2609 = vst [vmem:[#allocation4 + $0x28] sm:$0xff] %v2601
          %2610 = vst [vmem:[#allocation4 + $0x30] sm:$0xff] %v2602
          %2611 = vst [vmem:[#allocation4 + $0x38] sm:$0xff] %v2603
        $region108: #{tpu_custom_call.1} parent=59 // pred_fallthru
          _
        %p2612 = scmp.eq.s32.totalorder %s33, 63
        // Predicated region
        $region109: #{tpu_custom_call.1} parent=59 // pred_check
          %p2613 = pneg %p2612
        $region110: #{tpu_custom_call.1} parent=59 // pred_check_branch
          %2615 = sbr.rel (%p2613) target = $region112
        $region111: #{tpu_custom_call.1} parent=59 // pred_region
          %v2616 = vlaneseq
          %v2617 = vshrl.u32 %v2616, 7
          %v2618 = vadd.s32 %v2617, 8
          %v2619 = vadd.s32 %v2617, 16
          %v2620 = vadd.s32 %v2617, 24
          %v2621 = vstv %s540
          %vm2622 = vcmp.lt.s32.totalorder %v2617, %v2621
          %vm2623 = vcmp.lt.s32.totalorder %v2618, %v2621
          %vm2624 = vcmp.lt.s32.totalorder %v2619, %v2621
          %vm2625 = vcmp.lt.s32.totalorder %v2620, %v2621
          %v2626 = vsel %vm2622, 1, 0
          %v2627 = vsel %vm2623, 1, 0
          %v2628 = vsel %vm2624, 1, 0
          %v2629 = vsel %vm2625, 1, 0
          %v2630 = vcvt.s32.f32 %v2626
          %v2631 = vcvt.s32.f32 %v2627
          %v2632 = vcvt.s32.f32 %v2628
          %v2633 = vcvt.s32.f32 %v2629
          %v2634 = vld [vmem:[#allocation4] sm:$0xff]
          %v2635 = vld [vmem:[#allocation4 + $0x8] sm:$0xff]
          %v2636 = vld [vmem:[#allocation4 + $0x10] sm:$0xff]
          %v2637 = vld [vmem:[#allocation4 + $0x18] sm:$0xff]
          %v2638 = vld [vmem:[#allocation4 + $0x20] sm:$0xff]
          %v2639 = vld [vmem:[#allocation4 + $0x28] sm:$0xff]
          %v2640 = vld [vmem:[#allocation4 + $0x30] sm:$0xff]
          %v2641 = vld [vmem:[#allocation4 + $0x38] sm:$0xff]
          %v2642 = vmax.f32 %v2634, 0.0
          %v2643 = vmax.f32 %v2635, 0.0
          %v2644 = vmax.f32 %v2636, 0.0
          %v2645 = vmax.f32 %v2637, 0.0
          %v2646 = vmax.f32 %v2638, 0.0
          %v2647 = vmax.f32 %v2639, 0.0
          %v2648 = vmax.f32 %v2640, 0.0
          %v2649 = vmax.f32 %v2641, 0.0
          %v2650 = vpack.c.bf16 %v2643, %v2642
          %v2651 = vpack.c.bf16 %v2645, %v2644
          %v2652 = vpack.c.bf16 %v2647, %v2646
          %v2653 = vpack.c.bf16 %v2649, %v2648
          %v2654 = vld [vmem:[#allocation16] sm:$0xf]
          %v2655 = vld [vmem:[#allocation16 + $0x4] sm:$0xf]
          %v2656 = vld [vmem:[#allocation16 + $0x8] sm:$0xf]
          %v2657 = vld [vmem:[#allocation16 + $0xc] sm:$0xf]
          %v2658 = vld [vmem:[#allocation16 + $0x10] sm:$0xf]
          %v2659 = vld [vmem:[#allocation16 + $0x14] sm:$0xf]
          %v2660 = vld [vmem:[#allocation16 + $0x18] sm:$0xf]
          %v2661 = vld [vmem:[#allocation16 + $0x1c] sm:$0xf]
          %v2662 = vld [vmem:[#allocation16 + $0x20] sm:$0xf]
          %v2663 = vld [vmem:[#allocation16 + $0x24] sm:$0xf]
          %v2664 = vld [vmem:[#allocation16 + $0x28] sm:$0xf]
          %v2665 = vld [vmem:[#allocation16 + $0x2c] sm:$0xf]
          %v2666 = vld [vmem:[#allocation16 + $0x30] sm:$0xf]
          %v2667 = vld [vmem:[#allocation16 + $0x34] sm:$0xf]
          %v2668 = vld [vmem:[#allocation16 + $0x38] sm:$0xf]
          %v2669 = vld [vmem:[#allocation16 + $0x3c] sm:$0xf]
          %v2670 = vld [vmem:[#allocation17] sm:$0x1]
          %v2672 = vperm.slane %v2670, 0
          %v2690 = vunpack.c.l.b16 %v2654
          %v2691 = vunpack.c.l.b16 %v2655
          %v2692 = vunpack.c.l.b16 %v2656
          %v2693 = vunpack.c.l.b16 %v2657
          %v2694 = vunpack.c.l.b16 %v2658
          %v2695 = vunpack.c.l.b16 %v2659
          %v2696 = vunpack.c.l.b16 %v2660
          %v2697 = vunpack.c.l.b16 %v2661
          %v2698 = vunpack.c.l.b16 %v2662
          %v2699 = vunpack.c.l.b16 %v2663
          %v2700 = vunpack.c.l.b16 %v2664
          %v2701 = vunpack.c.l.b16 %v2665
          %v2702 = vunpack.c.l.b16 %v2666
          %v2703 = vunpack.c.l.b16 %v2667
          %v2704 = vunpack.c.l.b16 %v2668
          %v2705 = vunpack.c.l.b16 %v2669
          %v2706 = vpack.c.b16 %v2691, %v2690
          %v2707 = vpack.c.b16 %v2693, %v2692
          %v2708 = vpack.c.b16 %v2695, %v2694
          %v2709 = vpack.c.b16 %v2697, %v2696
          %v2710 = vpack.c.b16 %v2699, %v2698
          %v2711 = vpack.c.b16 %v2701, %v2700
          %v2712 = vpack.c.b16 %v2703, %v2702
          %v2713 = vpack.c.b16 %v2705, %v2704
          %2722 = vmatpush.bf16.msra.mxu0 %v2713
          %2723 = vmatpush.bf16.msra.mxu0 %v2712
          %2724 = vmatpush.bf16.msra.mxu0 %v2711
          %2725 = vmatpush.bf16.msra.mxu0 %v2710
          %2726 = vmatpush.bf16.msra.mxu0 %v2709
          %2727 = vmatpush.bf16.msra.mxu0 %v2708
          %2728 = vmatpush.bf16.msra.mxu0 %v2707
          %2729 = vmatpush.bf16.msra.mxu0 %v2706
          %2730 = vmatmul.bf16.gmra.mxu0 %v2650
          %v2731 = vpop.f32.mrf.mxu0
          %v2732 = vadd.f32 %v2672, %v2731
          %v2733 = vpop.f32.mrf.mxu0
          %v2734 = vadd.f32 %v2672, %v2733
          %2735 = vmatmul.bf16.gmra.mxu0 %v2651
          %v2736 = vpop.f32.mrf.mxu0
          %v2737 = vadd.f32 %v2672, %v2736
          %v2738 = vpop.f32.mrf.mxu0
          %v2739 = vadd.f32 %v2672, %v2738
          %2740 = vmatmul.bf16.gmra.mxu0 %v2652
          %v2741 = vpop.f32.mrf.mxu0
          %v2742 = vadd.f32 %v2672, %v2741
          %v2743 = vpop.f32.mrf.mxu0
          %v2744 = vadd.f32 %v2672, %v2743
          %2745 = vmatmul.bf16.gmra.mxu0 %v2653
          %v2746 = vpop.f32.mrf.mxu0
          %v2747 = vadd.f32 %v2672, %v2746
          %v2748 = vpop.f32.mrf.mxu0
          %v2749 = vadd.f32 %v2672, %v2748
          %2750 = vdwg.mxu0
          %v2751 = vmax.f32 %v2732, 0.0
          %v2752 = vmax.f32 %v2734, 0.0
          %v2753 = vmax.f32 %v2737, 0.0
          %v2754 = vmax.f32 %v2739, 0.0
          %v2755 = vmax.f32 %v2742, 0.0
          %v2756 = vmax.f32 %v2744, 0.0
          %v2757 = vmax.f32 %v2747, 0.0
          %v2758 = vmax.f32 %v2749, 0.0
          %v2759 = vpack.c.bf16 %v2752, %v2751
          %v2760 = vpack.c.bf16 %v2754, %v2753
          %v2761 = vpack.c.bf16 %v2756, %v2755
          %v2762 = vpack.c.bf16 %v2758, %v2757
          %v2763 = vld [vmem:[#allocation19] sm:$0xf]
          %v2764 = vld [vmem:[#allocation19 + $0x4] sm:$0xf]
          %v2765 = vld [vmem:[#allocation19 + $0x8] sm:$0xf]
          %v2766 = vld [vmem:[#allocation19 + $0xc] sm:$0xf]
          %v2767 = vld [vmem:[#allocation19 + $0x10] sm:$0xf]
          %v2768 = vld [vmem:[#allocation19 + $0x14] sm:$0xf]
          %v2769 = vld [vmem:[#allocation19 + $0x18] sm:$0xf]
          %v2770 = vld [vmem:[#allocation19 + $0x1c] sm:$0xf]
          %v2771 = vld [vmem:[#allocation19 + $0x20] sm:$0xf]
          %v2772 = vld [vmem:[#allocation19 + $0x24] sm:$0xf]
          %v2773 = vld [vmem:[#allocation19 + $0x28] sm:$0xf]
          %v2774 = vld [vmem:[#allocation19 + $0x2c] sm:$0xf]
          %v2775 = vld [vmem:[#allocation19 + $0x30] sm:$0xf]
          %v2776 = vld [vmem:[#allocation19 + $0x34] sm:$0xf]
          %v2777 = vld [vmem:[#allocation19 + $0x38] sm:$0xf]
          %v2778 = vld [vmem:[#allocation19 + $0x3c] sm:$0xf]
          %v2779 = vld [vmem:[#allocation20] sm:$0x1]
          %v2781 = vperm.slane %v2779, 0
          %v2799 = vunpack.c.l.b16 %v2763
          %v2800 = vunpack.c.l.b16 %v2764
          %v2801 = vunpack.c.l.b16 %v2765
          %v2802 = vunpack.c.l.b16 %v2766
          %v2803 = vunpack.c.l.b16 %v2767
          %v2804 = vunpack.c.l.b16 %v2768
          %v2805 = vunpack.c.l.b16 %v2769
          %v2806 = vunpack.c.l.b16 %v2770
          %v2807 = vunpack.c.l.b16 %v2771
          %v2808 = vunpack.c.l.b16 %v2772
          %v2809 = vunpack.c.l.b16 %v2773
          %v2810 = vunpack.c.l.b16 %v2774
          %v2811 = vunpack.c.l.b16 %v2775
          %v2812 = vunpack.c.l.b16 %v2776
          %v2813 = vunpack.c.l.b16 %v2777
          %v2814 = vunpack.c.l.b16 %v2778
          %v2815 = vpack.c.b16 %v2800, %v2799
          %v2816 = vpack.c.b16 %v2802, %v2801
          %v2817 = vpack.c.b16 %v2804, %v2803
          %v2818 = vpack.c.b16 %v2806, %v2805
          %v2819 = vpack.c.b16 %v2808, %v2807
          %v2820 = vpack.c.b16 %v2810, %v2809
          %v2821 = vpack.c.b16 %v2812, %v2811
          %v2822 = vpack.c.b16 %v2814, %v2813
          %2831 = vmatpush.bf16.msra.mxu0 %v2822
          %2832 = vmatpush.bf16.msra.mxu0 %v2821
          %2833 = vmatpush.bf16.msra.mxu0 %v2820
          %2834 = vmatpush.bf16.msra.mxu0 %v2819
          %2835 = vmatpush.bf16.msra.mxu0 %v2818
          %2836 = vmatpush.bf16.msra.mxu0 %v2817
          %2837 = vmatpush.bf16.msra.mxu0 %v2816
          %2838 = vmatpush.bf16.msra.mxu0 %v2815
          %2839 = vmatmul.bf16.gmra.mxu0 %v2759
          %v2840 = vpop.f32.mrf.mxu0
          %v2841 = vadd.f32 %v2781, %v2840
          %v2842 = vpop.f32.mrf.mxu0
          %v2843 = vadd.f32 %v2781, %v2842
          %2844 = vmatmul.bf16.gmra.mxu0 %v2760
          %v2845 = vpop.f32.mrf.mxu0
          %v2846 = vadd.f32 %v2781, %v2845
          %v2847 = vpop.f32.mrf.mxu0
          %v2848 = vadd.f32 %v2781, %v2847
          %2849 = vmatmul.bf16.gmra.mxu0 %v2761
          %v2850 = vpop.f32.mrf.mxu0
          %v2851 = vadd.f32 %v2781, %v2850
          %v2852 = vpop.f32.mrf.mxu0
          %v2853 = vadd.f32 %v2781, %v2852
          %2854 = vmatmul.bf16.gmra.mxu0 %v2762
          %v2855 = vpop.f32.mrf.mxu0
          %v2856 = vadd.f32 %v2781, %v2855
          %v2857 = vpop.f32.mrf.mxu0
          %v2858 = vadd.f32 %v2781, %v2857
          %2859 = vdwg.mxu0
          %v2860 = vmul.f32 %v2841, %v2630
          %v2861 = vmul.f32 %v2843, %v2631
          %v2862 = vmul.f32 %v2846, %v2632
          %v2863 = vmul.f32 %v2848, %v2633
          %v2864 = vmul.f32 %v2851, %v2630
          %v2865 = vmul.f32 %v2853, %v2631
          %v2866 = vmul.f32 %v2856, %v2632
          %v2867 = vmul.f32 %v2858, %v2633
          %2868 = vst [vmem:[#allocation22] sm:$0xff] %v2860
          %2869 = vst [vmem:[#allocation22 + $0x8] sm:$0xff] %v2861
          %2870 = vst [vmem:[#allocation22 + $0x10] sm:$0xff] %v2862
          %2871 = vst [vmem:[#allocation22 + $0x18] sm:$0xff] %v2863
          %2872 = vst [vmem:[#allocation22 + $0x20] sm:$0xff] %v2864
          %2873 = vst [vmem:[#allocation22 + $0x28] sm:$0xff] %v2865
          %2874 = vst [vmem:[#allocation22 + $0x30] sm:$0xff] %v2866
          %2875 = vst [vmem:[#allocation22 + $0x38] sm:$0xff] %v2867
        $region112: #{tpu_custom_call.1} parent=59 // pred_fallthru
          _
        // Predicated region
        $region113: #{tpu_custom_call.1} parent=59 // pred_check
          %p2876 = pneg %p271
        $region114: #{tpu_custom_call.1} parent=59 // pred_check_branch
          %2878 = sbr.rel (%p2876) target = $region116
        $region115: #{tpu_custom_call.1} parent=59 // pred_region
          %2880 = vsyncadd [#allocation8], 0
          %s2881 = sshll.u32 [#allocation22], 4
          %s2882 = int_to_ptr.vmem [resolvable:$true] %s2881
          %s2883 = sshll.u32 %s10, 4
          %s2884 = int_to_ptr.hbm [resolvable:$true] %s2883
          %2889 = dma.vmem_to_hbm [thread:$0]  %s2882, 1024, %s2884, [#allocation8], 128, 128, 8
        $region116: #{tpu_custom_call.1} parent=59 // pred_fallthru
          _
        // Predicated region
        $region117: #{tpu_custom_call.1} parent=59 // pred_check
          %p2890 = pneg %p271
        $region118: #{tpu_custom_call.1} parent=59 // pred_check_branch
          %2892 = sbr.rel (%p2890) target = $region120
        $region119: #{tpu_custom_call.1} parent=59 // pred_region
          %2894 = dma.done [#allocation8], 1024
        $region120: #{tpu_custom_call.1} parent=59 // pred_fallthru
          _
      $region60: #{tpu_custom_call.1} parent=5 // pred_fallthru
        _
      %p2895 = scmp.le.s32.totalorder 2, %s28
      // Predicated region
      $region121: #{tpu_custom_call.1} parent=5 // pred_check
        %p2896 = pneg %p2895
      $region122: #{tpu_custom_call.1} parent=5 // pred_check_branch
        %2898 = sbr.rel (%p2896) target = $region124
      $region123: #{tpu_custom_call.1} parent=5 // pred_region
        %s2899 = ssub.s32 %s28, 2
      $region124: #{tpu_custom_call.1} parent=5 // pred_fallthru
        _
    $region6: #{tpu_custom_call.1} parent=1 // loop_footer
      %s32 = sadd.s32 1, %s28
    $region7: #{tpu_custom_call.1} parent=1 // loop_footer_branch
      %27 = sbr.rel target = $region3
    $region8: #{tpu_custom_call.1} parent=1 // loop_exit
      _
    %2900 = vsyncpa [#allocation7], 1
    %s2901 = scalar_lea.sflag [#allocation7], 1
    %2902 = vsyncpa %s2901, 1
    %2903 = vsyncpa [#allocation12], 1
    %s2904 = scalar_lea.sflag [#allocation12], 1
    %2905 = vsyncpa %s2904, 1
    %2906 = vsyncpa [#allocation15], 1
    %s2907 = scalar_lea.sflag [#allocation15], 1
    %2908 = vsyncpa %s2907, 1
    %2909 = vsyncpa [#allocation18], 1
    %2910 = vsyncpa [#allocation21], 1
    %2911 = vsyncpa [#allocation8], 1
    %s2912 = scalar_lea.sflag [#allocation8], 1
    %2913 = vsyncpa %s2912, 1
    %2914 = vsyncpa [#allocation9], 1
    %s2915 = scalar_lea.sflag [#allocation9], 1
    %2916 = vsyncpa %s2915, 1

</llo_original>
